<compile_context>
chip_gen: v7x
topology: tpu7x:2x2x1
jax: 0.10.0
libtpu: 0.0.40
codegen_flags: <defaults>
</compile_context>

<pallas_src>
import math
from functools import partial

import jax
import jax.numpy as jnp
from jax.experimental import pallas as pl
from jax.experimental.pallas import tpu as pltpu


# ----------------------------------------------------------------------------
# Tile helpers
# ----------------------------------------------------------------------------
def _row_tile(m):
    """Sublane-aligned row tile; prefer >=2 tiles so megacore (v7x) gets work."""
    for t in (256, 128, 64, 32, 16, 8):
        if m % t == 0 and m // t >= 2:
            return t
    return m


def _col_tile(n, cap=512):
    """Lane-aligned (x128) column tile bounded by `cap` (VMEM-friendly)."""
    for t in (cap, 256, 128):
        if n % t == 0:
            return t
    return n  # falls back to full dim (legal: full-extent block)


# ----------------------------------------------------------------------------
# Generic tiled linear: y = x @ W + b  (used for input projection / final fc)
# ----------------------------------------------------------------------------
def _linear_kernel(x_ref, w_ref, b_ref, o_ref, acc_ref, *, activation):
    k = pl.program_id(2)

    @pl.when(k == 0)
    def _():
        acc_ref[...] = jnp.zeros_like(acc_ref)

    acc_ref[...] += jnp.dot(x_ref[...], w_ref[...],
                            preferred_element_type=jnp.float32)

    @pl.when(k == pl.num_programs(2) - 1)
    def _():
        y = acc_ref[...] + b_ref[...]
        if activation == "relu":
            y = jnp.maximum(y, 0.0)
        o_ref[...] = y.astype(o_ref.dtype)


def linear(x, w, b, activation=None):
    """x: [M, K], w: [K, N], b: [1, N] -> [M, N]"""
    M, K = x.shape
    _, N = w.shape
    tm = _row_tile(M)
    tk = _col_tile(K)
    tn = _col_tile(N)
    grid = (M // tm, N // tn, K // tk)
    return pl.pallas_call(
        partial(_linear_kernel, activation=activation),
        out_shape=jax.ShapeDtypeStruct((M, N), x.dtype),
        grid=grid,
        in_specs=[
            pl.BlockSpec((tm, tk), lambda i, j, k: (i, k)),
            pl.BlockSpec((tk, tn), lambda i, j, k: (k, j)),
            pl.BlockSpec((1, tn), lambda i, j, k: (0, j)),
        ],
        out_specs=pl.BlockSpec((tm, tn), lambda i, j, k: (i, j)),
        scratch_shapes=[pltpu.VMEM((tm, tn), jnp.float32)],
        compiler_params=pltpu.CompilerParams(
            dimension_semantics=("parallel", "parallel", "arbitrary")),
    )(x, w, b)


# ----------------------------------------------------------------------------
# Fused self-attention block:  QKV-proj + MHA + out-proj + residual LayerNorm
# One grid step per batch element; everything stays in VMEM / registers.
# ----------------------------------------------------------------------------
def _attn_ln_kernel(x_ref, qkvw_ref, qkvb_ref, outw_ref, outb_ref, g_ref, be_ref,
                    o_ref, *, D, H, eps):
    dh = D // H
    scale = 1.0 / math.sqrt(dh)

    x = x_ref[...].astype(jnp.float32)                                    # [S, D]
    qkv = jnp.dot(x, qkvw_ref[...], preferred_element_type=jnp.float32)
    qkv = qkv + qkvb_ref[...]                                             # [S, 3D]

    heads = []
    for h in range(H):                     # static unroll, tiny H
        q = qkv[:, h * dh:(h + 1) * dh]
        k = qkv[:, D + h * dh:D + (h + 1) * dh]
        v = qkv[:, 2 * D + h * dh:2 * D + (h + 1) * dh]
        s = jnp.dot(q, k.T, preferred_element_type=jnp.float32) * scale   # [S, S]
        s = s - jnp.max(s, axis=-1, keepdims=True)
        p = jnp.exp(s)
        # approx=False keeps the 1e-3 tolerance tight; approx=True -> EUP.
        p = p * pl.reciprocal(jnp.sum(p, axis=-1, keepdims=True), approx=False)
        heads.append(jnp.dot(p, v, preferred_element_type=jnp.float32))   # [S, dh]

    attn = jnp.concatenate(heads, axis=-1)                                # [S, D]
    attn = jnp.dot(attn, outw_ref[...], preferred_element_type=jnp.float32)
    attn = attn + outb_ref[...]

    y = x + attn                                                          # residual
    mu = jnp.mean(y, axis=-1, keepdims=True)
    var = jnp.mean((y - mu) ** 2, axis=-1, keepdims=True)
    yn = (y - mu) * jax.lax.rsqrt(var + eps)
    o_ref[...] = (yn * g_ref[...] + be_ref[...]).astype(o_ref.dtype)


def attn_ln_block(h, p, B, S, D, H, eps=1e-5):
    def full(shape):
        return pl.BlockSpec(shape, lambda b: (0, 0))

    return pl.pallas_call(
        partial(_attn_ln_kernel, D=D, H=H, eps=eps),
        out_shape=jax.ShapeDtypeStruct((B * S, D), h.dtype),
        grid=(B,),
        in_specs=[
            pl.BlockSpec((S, D), lambda b: (b, 0)),   # this batch's rows
            full((D, 3 * D)),
            full((1, 3 * D)),
            full((D, D)),
            full((1, D)),
            full((1, D)),
            full((1, D)),
        ],
        out_specs=pl.BlockSpec((S, D), lambda b: (b, 0)),
        compiler_params=pltpu.CompilerParams(
            dimension_semantics=("parallel",)),
    )(h, p["qkv_w"], p["qkv_b"], p["out_w"], p["out_b"], p["ln1_g"], p["ln1_b"])


# ----------------------------------------------------------------------------
# Fused feed-forward block:  relu(h@W1+b1)@W2 + b2, residual, LayerNorm.
# Tiled over the FF dim so the 32x2048 / 2048x32 weight tiles are pipelined.
# ----------------------------------------------------------------------------
def _ff_ln_kernel(h_ref, w1_ref, b1_ref, w2_ref, b2_ref, g_ref, be_ref, o_ref,
                  acc_ref, *, eps):
    j = pl.program_id(1)

    @pl.when(j == 0)
    def _():
        acc_ref[...] = jnp.zeros_like(acc_ref)

    h = h_ref[...].astype(jnp.float32)                                    # [tm, D]
    f = jnp.dot(h, w1_ref[...], preferred_element_type=jnp.float32) + b1_ref[...]
    f = jnp.maximum(f, 0.0)                       # relu is elementwise -> chunkable
    acc_ref[...] += jnp.dot(f, w2_ref[...], preferred_element_type=jnp.float32)

    @pl.when(j == pl.num_programs(1) - 1)
    def _():
        y = h + acc_ref[...] + b2_ref[...]        # residual + FF2 bias (added once)
        mu = jnp.mean(y, axis=-1, keepdims=True)
        var = jnp.mean((y - mu) ** 2, axis=-1, keepdims=True)
        yn = (y - mu) * jax.lax.rsqrt(var + eps)
        o_ref[...] = (yn * g_ref[...] + be_ref[...]).astype(o_ref.dtype)


def ff_ln_block(h, p, eps=1e-5):
    M, D = h.shape
    F = p["ff1_w"].shape[1]
    tm = _row_tile(M)
    tf = _col_tile(F)
    grid = (M // tm, F // tf)
    return pl.pallas_call(
        partial(_ff_ln_kernel, eps=eps),
        out_shape=jax.ShapeDtypeStruct((M, D), h.dtype),
        grid=grid,
        in_specs=[
            pl.BlockSpec((tm, D), lambda i, j: (i, 0)),
            pl.BlockSpec((D, tf), lambda i, j: (0, j)),
            pl.BlockSpec((1, tf), lambda i, j: (0, j)),
            pl.BlockSpec((tf, D), lambda i, j: (j, 0)),
            pl.BlockSpec((1, D), lambda i, j: (0, 0)),
            pl.BlockSpec((1, D), lambda i, j: (0, 0)),
            pl.BlockSpec((1, D), lambda i, j: (0, 0)),
        ],
        out_specs=pl.BlockSpec((tm, D), lambda i, j: (i, 0)),
        scratch_shapes=[pltpu.VMEM((tm, D), jnp.float32)],
        compiler_params=pltpu.CompilerParams(
            dimension_semantics=("parallel", "arbitrary")),
    )(h, p["ff1_w"], p["ff1_b"], p["ff2_w"], p["ff2_b"], p["ln2_g"], p["ln2_b"])


# ----------------------------------------------------------------------------
# Model forward (2 pallas_calls per encoder layer + input/output projections)
# ----------------------------------------------------------------------------
def encoder_layer_forward(h, p, B, S, D, H):
    h = attn_ln_block(h, p, B, S, D, H)   # self-attn + out-proj + LN1 (fused)
    h = ff_ln_block(h, p)                 # FF1(relu) + FF2 + LN2 (fused)
    return h


def transformer_forward(x, params, nhead):
    B, S, in_size = x.shape
    D = params["in_w"].shape[1]
    h = linear(x.reshape(B * S, in_size), params["in_w"], params["in_b"])
    for p in params["layers"]:
        h = encoder_layer_forward(h, p, B, S, D, nhead)
    h = h.reshape(B, S * D)
    # final classifier is tiny ((B, out)=(2,8)); single-step linear is fine.
    return linear(h, params["fc_w"], params["fc_b"])


# ----------------------------------------------------------------------------
# Pure-JAX reference (for correctness check)
# ----------------------------------------------------------------------------
def _ln_ref(x, g, b, eps=1e-5):
    mu = jnp.mean(x, axis=-1, keepdims=True)
    var = jnp.mean((x - mu) ** 2, axis=-1, keepdims=True)
    return (x - mu) * jax.lax.rsqrt(var + eps) * g + b


def ref_forward(x, params, nhead):
    B, S, _ = x.shape
    D = params["in_w"].shape[1]
    dh = D // nhead
    h = x @ params["in_w"] + params["in_b"]
    for p in params["layers"]:
        qkv = h @ p["qkv_w"] + p["qkv_b"]
        q, k, v = jnp.split(qkv, 3, axis=-1)
        heads = lambda t: t.reshape(B, S, nhead, dh).transpose(0, 2, 1, 3)
        q, k, v = heads(q), heads(k), heads(v)
        s = jnp.einsum("bhqd,bhkd->bhqk", q, k) / math.sqrt(dh)
        a = jax.nn.softmax(s, axis=-1)
        o = jnp.einsum("bhqk,bhkd->bhqd", a, v)
        o = o.transpose(0, 2, 1, 3).reshape(B, S, D)
        o = o @ p["out_w"] + p["out_b"]
        h = _ln_ref(h + o, p["ln1_g"], p["ln1_b"])
        f = jax.nn.relu(h @ p["ff1_w"] + p["ff1_b"]) @ p["ff2_w"] + p["ff2_b"]
        h = _ln_ref(h + f, p["ln2_g"], p["ln2_b"])
    return h.reshape(B, -1) @ params["fc_w"] + params["fc_b"]


# ----------------------------------------------------------------------------
# Deterministic parameter init (synthetic; matches module shapes)
# ----------------------------------------------------------------------------
def init_params(key, input_size, output_size, seq_len, d_model, nhead,
                num_layers, dim_ff):
    def dense(k, fan_in, fan_out):
        kw, kb = jax.random.split(k)
        w = jax.random.normal(kw, (fan_in, fan_out), jnp.float32) * 0.05
        b = jax.random.normal(kb, (1, fan_out), jnp.float32) * 0.05
        return w, b

    keys = jax.random.split(key, 2 + num_layers)
    in_w, in_b = dense(keys[0], input_size, d_model)
    fc_w, fc_b = dense(keys[1], d_model * seq_len, output_size)
    layers = []
    for l in range(num_layers):
        lk = jax.random.split(keys[2 + l], 4)
        qkv_w, qkv_b = dense(lk[0], d_model, 3 * d_model)
        out_w, out_b = dense(lk[1], d_model, d_model)
        ff1_w, ff1_b = dense(lk[2], d_model, dim_ff)
        ff2_w, ff2_b = dense(lk[3], dim_ff, d_model)
        layers.append(dict(
            qkv_w=qkv_w, qkv_b=qkv_b, out_w=out_w, out_b=out_b,
            ff1_w=ff1_w, ff1_b=ff1_b, ff2_w=ff2_w, ff2_b=ff2_b,
            ln1_g=jnp.ones((1, d_model), jnp.float32),
            ln1_b=jnp.zeros((1, d_model), jnp.float32),
            ln2_g=jnp.ones((1, d_model), jnp.float32),
            ln2_b=jnp.zeros((1, d_model), jnp.float32),
        ))
    return dict(in_w=in_w, in_b=in_b, layers=layers, fc_w=fc_w, fc_b=fc_b)


if __name__ == "__main__":
    # small shapes consistent with the module's forward
    B, S = 2, 8
    input_size, d_model, nhead, num_layers, output_size = 16, 32, 4, 2, 8
    dim_ff = 2048          # nn.TransformerEncoderLayer default dim_feedforward
    # dropout=0.1 in __init__ -> identity in eval-mode forward (reproduced here)

    key = jax.random.PRNGKey(0)
    pkey, xkey = jax.random.split(key)
    params = init_params(pkey, input_size, output_size, S, d_model, nhead,
                         num_layers, dim_ff)
    x = jax.random.normal(xkey, (B, S, input_size), jnp.float32)

    fwd = jax.jit(lambda xx, pp: transformer_forward(xx, pp, nhead))
    out = jax.block_until_ready(fwd(x, params))

    ref = ref_forward(x, params, nhead)
    assert out.shape == (B, output_size), out.shape
    max_err = float(jnp.max(jnp.abs(out - ref)))
    assert jnp.allclose(out, ref, atol=1e-3, rtol=1e-3), f"max_err={max_err}"

    print("KERNEL_OK")
</pallas_src>

<mosaic_0001>
module attributes {stable_mosaic.version = 11 : i64} {
  func.func @_linear_kernel(%arg0: i32, %arg1: i32, %arg2: i32, %arg3: memref<8x16xf32, #tpu.memory_space<vmem>>, %arg4: memref<16x32xf32, #tpu.memory_space<vmem>>, %arg5: memref<1x32xf32, #tpu.memory_space<vmem>>, %arg6: memref<8x32xf32, #tpu.memory_space<vmem>>, %arg7: memref<8x32xf32, #tpu.memory_space<vmem>>) attributes {dimension_semantics = [#tpu.dimension_semantics<parallel>, #tpu.dimension_semantics<parallel>, #tpu.dimension_semantics<arbitrary>], iteration_bounds = array<i64: 2, 1, 1>, scalar_prefetch = 0 : i64, scratch_operands = 1 : i64, tpu.core_type = #tpu.core_type<tc>, window_params = [{transform_indices = @transform_0, window_bounds = array<i64: 8, 16>}, {transform_indices = @transform_1, window_bounds = array<i64: 16, 32>}, {transform_indices = @transform_2, window_bounds = array<i64: 1, 32>}, {transform_indices = @transform_3, window_bounds = array<i64: 8, 32>}]} {
    %c0_i32 = arith.constant 0 : i32
    %0 = arith.cmpi eq, %arg2, %c0_i32 : i32
    %1 = arith.extui %0 : i1 to i32
    %c0_i32_0 = arith.constant 0 : i32
    %2 = arith.cmpi ne, %1, %c0_i32_0 : i32
    scf.if %2 {
      %cst_10 = arith.constant 0.000000e+00 : f32
      %12 = vector.broadcast %cst_10 : f32 to vector<8x32xf32>
      %c0_11 = arith.constant 0 : index
      %c0_12 = arith.constant 0 : index
      %13 = vector.load %arg7[%c0_11, %c0_12] : memref<8x32xf32, #tpu.memory_space<vmem>>, vector<8x32xf32>
      tpu.vector_store %arg7[%c0_11, %c0_12], %12 {strides = array<i32>} : memref<8x32xf32, #tpu.memory_space<vmem>>, vector<8x32xf32>,
    } else {
    }
    %c0 = arith.constant 0 : index
    %c0_1 = arith.constant 0 : index
    %3 = vector.load %arg7[%c0, %c0_1] : memref<8x32xf32, #tpu.memory_space<vmem>>, vector<8x32xf32>
    %c0_2 = arith.constant 0 : index
    %c0_3 = arith.constant 0 : index
    %4 = vector.load %arg3[%c0_2, %c0_3] : memref<8x16xf32, #tpu.memory_space<vmem>>, vector<8x16xf32>
    %c0_4 = arith.constant 0 : index
    %c0_5 = arith.constant 0 : index
    %5 = vector.load %arg4[%c0_4, %c0_5] : memref<16x32xf32, #tpu.memory_space<vmem>>, vector<16x32xf32>
    %cst = arith.constant dense<0.000000e+00> : vector<8x32xf32>
    %6 = tpu.matmul %4, %5, %cst {dimension_numbers = #tpu.dot_dimension_numbers<[1], [0], [0], [1], [0, 0, 1, 1], [], []>} : vector<8x16xf32>, vector<16x32xf32>, vector<8x32xf32> -> vector<8x32xf32>
    %7 = arith.addf %3, %6 : vector<8x32xf32>
    %c0_6 = arith.constant 0 : index
    %c0_7 = arith.constant 0 : index
    %8 = vector.load %arg7[%c0_6, %c0_7] : memref<8x32xf32, #tpu.memory_space<vmem>>, vector<8x32xf32>
    tpu.vector_store %arg7[%c0_6, %c0_7], %7 {strides = array<i32>} : memref<8x32xf32, #tpu.memory_space<vmem>>, vector<8x32xf32>,
    %c0_i32_8 = arith.constant 0 : i32
    %9 = arith.cmpi eq, %arg2, %c0_i32_8 : i32
    %10 = arith.extui %9 : i1 to i32
    %c0_i32_9 = arith.constant 0 : i32
    %11 = arith.cmpi ne, %10, %c0_i32_9 : i32
    scf.if %11 {
      %c0_10 = arith.constant 0 : index
      %c0_11 = arith.constant 0 : index
      %12 = vector.load %arg7[%c0_10, %c0_11] : memref<8x32xf32, #tpu.memory_space<vmem>>, vector<8x32xf32>
      %c0_12 = arith.constant 0 : index
      %c0_13 = arith.constant 0 : index
      %13 = vector.load %arg5[%c0_12, %c0_13] : memref<1x32xf32, #tpu.memory_space<vmem>>, vector<1x32xf32>
      %14 = vector.broadcast %13 : vector<1x32xf32> to vector<8x32xf32>
      %15 = arith.addf %12, %14 : vector<8x32xf32>
      %c0_14 = arith.constant 0 : index
      %c0_15 = arith.constant 0 : index
      %16 = vector.load %arg6[%c0_14, %c0_15] : memref<8x32xf32, #tpu.memory_space<vmem>>, vector<8x32xf32>
      tpu.vector_store %arg6[%c0_14, %c0_15], %15 {strides = array<i32>} : memref<8x32xf32, #tpu.memory_space<vmem>>, vector<8x32xf32>,
    } else {
    }
    return
  }
  func.func @transform_0(%arg0: i32, %arg1: i32, %arg2: i32) -> (i32, i32) {
    %c0_i32 = arith.constant 0 : i32
    return %arg0, %arg2 : i32, i32
  }
  func.func @transform_1(%arg0: i32, %arg1: i32, %arg2: i32) -> (i32, i32) {
    %c0_i32 = arith.constant 0 : i32
    return %arg2, %arg1 : i32, i32
  }
  func.func @transform_2(%arg0: i32, %arg1: i32, %arg2: i32) -> (i32, i32) {
    %c0_i32 = arith.constant 0 : i32
    %c0_i32_0 = arith.constant 0 : i32
    return %c0_i32, %arg1 : i32, i32
  }
  func.func @transform_3(%arg0: i32, %arg1: i32, %arg2: i32) -> (i32, i32) {
    %c0_i32 = arith.constant 0 : i32
    return %arg0, %arg1 : i32, i32
  }
}

module attributes {stable_mosaic.version = 11 : i64} {
  func.func @_ff_ln_kernel(%arg0: i32, %arg1: i32, %arg2: memref<8x32xf32, #tpu.memory_space<vmem>>, %arg3: memref<32x512xf32, #tpu.memory_space<vmem>>, %arg4: memref<1x512xf32, #tpu.memory_space<vmem>>, %arg5: memref<512x32xf32, #tpu.memory_space<vmem>>, %arg6: memref<1x32xf32, #tpu.memory_space<vmem>>, %arg7: memref<1x32xf32, #tpu.memory_space<vmem>>, %arg8: memref<1x32xf32, #tpu.memory_space<vmem>>, %arg9: memref<8x32xf32, #tpu.memory_space<vmem>>, %arg10: memref<8x32xf32, #tpu.memory_space<vmem>>) attributes {dimension_semantics = [#tpu.dimension_semantics<parallel>, #tpu.dimension_semantics<arbitrary>], iteration_bounds = array<i64: 2, 4>, scalar_prefetch = 0 : i64, scratch_operands = 1 : i64, tpu.core_type = #tpu.core_type<tc>, window_params = [{transform_indices = @transform_0, window_bounds = array<i64: 8, 32>}, {transform_indices = @transform_1, window_bounds = array<i64: 32, 512>}, {transform_indices = @transform_2, window_bounds = array<i64: 1, 512>}, {transform_indices = @transform_3, window_bounds = array<i64: 512, 32>}, {pipeline_mode = #tpu.pipeline_mode<synchronous>, transform_indices = @transform_4, window_bounds = array<i64: 1, 32>}, {pipeline_mode = #tpu.pipeline_mode<synchronous>, transform_indices = @transform_5, window_bounds = array<i64: 1, 32>}, {pipeline_mode = #tpu.pipeline_mode<synchronous>, transform_indices = @transform_6, window_bounds = array<i64: 1, 32>}, {transform_indices = @transform_7, window_bounds = array<i64: 8, 32>}]} {
    %c0_i32 = arith.constant 0 : i32
    %0 = arith.cmpi eq, %arg1, %c0_i32 : i32
    %1 = arith.extui %0 : i1 to i32
    %c0_i32_0 = arith.constant 0 : i32
    %2 = arith.cmpi ne, %1, %c0_i32_0 : i32
    scf.if %2 {
      %cst_15 = arith.constant 0.000000e+00 : f32
      %19 = vector.broadcast %cst_15 : f32 to vector<8x32xf32>
      %c0_16 = arith.constant 0 : index
      %c0_17 = arith.constant 0 : index
      %20 = vector.load %arg10[%c0_16, %c0_17] : memref<8x32xf32, #tpu.memory_space<vmem>>, vector<8x32xf32>
      tpu.vector_store %arg10[%c0_16, %c0_17], %19 {strides = array<i32>} : memref<8x32xf32, #tpu.memory_space<vmem>>, vector<8x32xf32>,
    } else {
    }
    %c0 = arith.constant 0 : index
    %c0_1 = arith.constant 0 : index
    %3 = vector.load %arg2[%c0, %c0_1] : memref<8x32xf32, #tpu.memory_space<vmem>>, vector<8x32xf32>
    %c0_2 = arith.constant 0 : index
    %c0_3 = arith.constant 0 : index
    %4 = vector.load %arg3[%c0_2, %c0_3] : memref<32x512xf32, #tpu.memory_space<vmem>>, vector<32x512xf32>
    %cst = arith.constant dense<0.000000e+00> : vector<8x512xf32>
    %5 = tpu.matmul %3, %4, %cst {dimension_numbers = #tpu.dot_dimension_numbers<[1], [0], [0], [1], [0, 0, 1, 1], [], []>} : vector<8x32xf32>, vector<32x512xf32>, vector<8x512xf32> -> vector<8x512xf32>
    %c0_4 = arith.constant 0 : index
    %c0_5 = arith.constant 0 : index
    %6 = vector.load %arg4[%c0_4, %c0_5] : memref<1x512xf32, #tpu.memory_space<vmem>>, vector<1x512xf32>
    %7 = vector.broadcast %6 : vector<1x512xf32> to vector<8x512xf32>
    %8 = arith.addf %5, %7 : vector<8x512xf32>
    %cst_6 = arith.constant 0.000000e+00 : f32
    %9 = vector.broadcast %cst_6 : f32 to vector<8x512xf32>
    %10 = arith.maximumf %8, %9 : vector<8x512xf32>
    %c0_7 = arith.constant 0 : index
    %c0_8 = arith.constant 0 : index
    %11 = vector.load %arg10[%c0_7, %c0_8] : memref<8x32xf32, #tpu.memory_space<vmem>>, vector<8x32xf32>
    %c0_9 = arith.constant 0 : index
    %c0_10 = arith.constant 0 : index
    %12 = vector.load %arg5[%c0_9, %c0_10] : memref<512x32xf32, #tpu.memory_space<vmem>>, vector<512x32xf32>
    %cst_11 = arith.constant dense<0.000000e+00> : vector<8x32xf32>
    %13 = tpu.matmul %10, %12, %cst_11 {dimension_numbers = #tpu.dot_dimension_numbers<[1], [0], [0], [1], [0, 0, 1, 1], [], []>} : vector<8x512xf32>, vector<512x32xf32>, vector<8x32xf32> -> vector<8x32xf32>
    %14 = arith.addf %11, %13 : vector<8x32xf32>
    %c0_12 = arith.constant 0 : index
    %c0_13 = arith.constant 0 : index
    %15 = vector.load %arg10[%c0_12, %c0_13] : memref<8x32xf32, #tpu.memory_space<vmem>>, vector<8x32xf32>
    tpu.vector_store %arg10[%c0_12, %c0_13], %14 {strides = array<i32>} : memref<8x32xf32, #tpu.memory_space<vmem>>, vector<8x32xf32>,
    %c3_i32 = arith.constant 3 : i32
    %16 = arith.cmpi eq, %arg1, %c3_i32 : i32
    %17 = arith.extui %16 : i1 to i32
    %c0_i32_14 = arith.constant 0 : i32
    %18 = arith.cmpi ne, %17, %c0_i32_14 : i32
    scf.if %18 {
      %c0_15 = arith.constant 0 : index
      %c0_16 = arith.constant 0 : index
      %19 = vector.load %arg10[%c0_15, %c0_16] : memref<8x32xf32, #tpu.memory_space<vmem>>, vector<8x32xf32>
      %20 = arith.addf %3, %19 : vector<8x32xf32>
      %c0_17 = arith.constant 0 : index
      %c0_18 = arith.constant 0 : index
      %21 = vector.load %arg6[%c0_17, %c0_18] : memref<1x32xf32, #tpu.memory_space<vmem>>, vector<1x32xf32>
      %22 = vector.broadcast %21 : vector<1x32xf32> to vector<8x32xf32>
      %23 = arith.addf %20, %22 : vector<8x32xf32>
      %cst_19 = arith.constant dense<0.000000e+00> : vector<8xf32>
      %24 = vector.multi_reduction <add>, %23, %cst_19 [1] : vector<8x32xf32> to vector<8xf32>
      %25 = vector.shape_cast %24 : vector<8xf32> to vector<8x1xf32>
      %cst_20 = arith.constant 3.200000e+01 : f32
      %26 = vector.broadcast %cst_20 : f32 to vector<8x1xf32>
      %27 = arith.divf %25, %26 : vector<8x1xf32>
      %28 = vector.broadcast %27 : vector<8x1xf32> to vector<8x32xf32>
      %29 = arith.subf %23, %28 : vector<8x32xf32>
      %30 = arith.mulf %29, %29 : vector<8x32xf32>
      %cst_21 = arith.constant dense<0.000000e+00> : vector<8xf32>
      %31 = vector.multi_reduction <add>, %30, %cst_21 [1] : vector<8x32xf32> to vector<8xf32>
      %32 = vector.shape_cast %31 : vector<8xf32> to vector<8x1xf32>
      %cst_22 = arith.constant 3.200000e+01 : f32
      %33 = vector.broadcast %cst_22 : f32 to vector<8x1xf32>
      %34 = arith.divf %32, %33 : vector<8x1xf32>
      %35 = vector.broadcast %27 : vector<8x1xf32> to vector<8x32xf32>
      %36 = arith.subf %23, %35 : vector<8x32xf32>
      %cst_23 = arith.constant 9.99999974E-6 : f32
      %37 = vector.broadcast %cst_23 : f32 to vector<8x1xf32>
      %38 = arith.addf %34, %37 : vector<8x1xf32>
      %39 = math.rsqrt %38 : vector<8x1xf32>
      %40 = vector.broadcast %39 : vector<8x1xf32> to vector<8x32xf32>
      %41 = arith.mulf %36, %40 : vector<8x32xf32>
      %c0_24 = arith.constant 0 : index
      %c0_25 = arith.constant 0 : index
      %42 = vector.load %arg7[%c0_24, %c0_25] : memref<1x32xf32, #tpu.memory_space<vmem>>, vector<1x32xf32>
      %43 = vector.broadcast %42 : vector<1x32xf32> to vector<8x32xf32>
      %44 = arith.mulf %41, %43 : vector<8x32xf32>
      %c0_26 = arith.constant 0 : index
      %c0_27 = arith.constant 0 : index
      %45 = vector.load %arg8[%c0_26, %c0_27] : memref<1x32xf32, #tpu.memory_space<vmem>>, vector<1x32xf32>
      %46 = vector.broadcast %45 : vector<1x32xf32> to vector<8x32xf32>
      %47 = arith.addf %44, %46 : vector<8x32xf32>
      %c0_28 = arith.constant 0 : index
      %c0_29 = arith.constant 0 : index
      %48 = vector.load %arg9[%c0_28, %c0_29] : memref<8x32xf32, #tpu.memory_space<vmem>>, vector<8x32xf32>
      tpu.vector_store %arg9[%c0_28, %c0_29], %47 {strides = array<i32>} : memref<8x32xf32, #tpu.memory_space<vmem>>, vector<8x32xf32>,
    } else {
    }
    return
  }
  func.func @transform_0(%arg0: i32, %arg1: i32) -> (i32, i32) {
    %c0_i32 = arith.constant 0 : i32
    %c0_i32_0 = arith.constant 0 : i32
    return %arg0, %c0_i32 : i32, i32
  }
  func.func @transform_1(%arg0: i32, %arg1: i32) -> (i32, i32) {
    %c0_i32 = arith.constant 0 : i32
    %c0_i32_0 = arith.constant 0 : i32
    return %c0_i32, %arg1 : i32, i32
  }
  func.func @transform_2(%arg0: i32, %arg1: i32) -> (i32, i32) {
    %c0_i32 = arith.constant 0 : i32
    %c0_i32_0 = arith.constant 0 : i32
    return %c0_i32, %arg1 : i32, i32
  }
  func.func @transform_3(%arg0: i32, %arg1: i32) -> (i32, i32) {
    %c0_i32 = arith.constant 0 : i32
    %c0_i32_0 = arith.constant 0 : i32
    return %arg1, %c0_i32 : i32, i32
  }
  func.func @transform_4(%arg0: i32, %arg1: i32) -> (i32, i32) {
    %c0_i32 = arith.constant 0 : i32
    %c0_i32_0 = arith.constant 0 : i32
    %c0_i32_1 = arith.constant 0 : i32
    return %c0_i32, %c0_i32_0 : i32, i32
  }
  func.func @transform_5(%arg0: i32, %arg1: i32) -> (i32, i32) {
    %c0_i32 = arith.constant 0 : i32
    %c0_i32_0 = arith.constant 0 : i32
    %c0_i32_1 = arith.constant 0 : i32
    return %c0_i32, %c0_i32_0 : i32, i32
  }
  func.func @transform_6(%arg0: i32, %arg1: i32) -> (i32, i32) {
    %c0_i32 = arith.constant 0 : i32
    %c0_i32_0 = arith.constant 0 : i32
    %c0_i32_1 = arith.constant 0 : i32
    return %c0_i32, %c0_i32_0 : i32, i32
  }
  func.func @transform_7(%arg0: i32, %arg1: i32) -> (i32, i32) {
    %c0_i32 = arith.constant 0 : i32
    %c0_i32_0 = arith.constant 0 : i32
    return %arg0, %c0_i32 : i32, i32
  }
}

module attributes {stable_mosaic.version = 11 : i64} {
  func.func @_attn_ln_kernel(%arg0: i32, %arg1: memref<8x32xf32, #tpu.memory_space<vmem>>, %arg2: memref<32x96xf32, #tpu.memory_space<vmem>>, %arg3: memref<1x96xf32, #tpu.memory_space<vmem>>, %arg4: memref<32x32xf32, #tpu.memory_space<vmem>>, %arg5: memref<1x32xf32, #tpu.memory_space<vmem>>, %arg6: memref<1x32xf32, #tpu.memory_space<vmem>>, %arg7: memref<1x32xf32, #tpu.memory_space<vmem>>, %arg8: memref<8x32xf32, #tpu.memory_space<vmem>>) attributes {dimension_semantics = [#tpu.dimension_semantics<parallel>], iteration_bounds = array<i64: 2>, scalar_prefetch = 0 : i64, scratch_operands = 0 : i64, tpu.core_type = #tpu.core_type<tc>, window_params = [{transform_indices = @transform_0, window_bounds = array<i64: 8, 32>}, {pipeline_mode = #tpu.pipeline_mode<synchronous>, transform_indices = @transform_1, window_bounds = array<i64: 32, 96>}, {pipeline_mode = #tpu.pipeline_mode<synchronous>, transform_indices = @transform_2, window_bounds = array<i64: 1, 96>}, {pipeline_mode = #tpu.pipeline_mode<synchronous>, transform_indices = @transform_3, window_bounds = array<i64: 32, 32>}, {pipeline_mode = #tpu.pipeline_mode<synchronous>, transform_indices = @transform_4, window_bounds = array<i64: 1, 32>}, {pipeline_mode = #tpu.pipeline_mode<synchronous>, transform_indices = @transform_5, window_bounds = array<i64: 1, 32>}, {pipeline_mode = #tpu.pipeline_mode<synchronous>, transform_indices = @transform_6, window_bounds = array<i64: 1, 32>}, {transform_indices = @transform_7, window_bounds = array<i64: 8, 32>}]} {
    %c0 = arith.constant 0 : index
    %c0_0 = arith.constant 0 : index
    %0 = vector.load %arg1[%c0, %c0_0] : memref<8x32xf32, #tpu.memory_space<vmem>>, vector<8x32xf32>
    %c0_1 = arith.constant 0 : index
    %c0_2 = arith.constant 0 : index
    %1 = vector.load %arg2[%c0_1, %c0_2] : memref<32x96xf32, #tpu.memory_space<vmem>>, vector<32x96xf32>
    %cst = arith.constant dense<0.000000e+00> : vector<8x96xf32>
    %2 = tpu.matmul %0, %1, %cst {dimension_numbers = #tpu.dot_dimension_numbers<[1], [0], [0], [1], [0, 0, 1, 1], [], []>} : vector<8x32xf32>, vector<32x96xf32>, vector<8x96xf32> -> vector<8x96xf32>
    %c0_3 = arith.constant 0 : index
    %c0_4 = arith.constant 0 : index
    %3 = vector.load %arg3[%c0_3, %c0_4] : memref<1x96xf32, #tpu.memory_space<vmem>>, vector<1x96xf32>
    %4 = vector.broadcast %3 : vector<1x96xf32> to vector<8x96xf32>
    %5 = arith.addf %2, %4 : vector<8x96xf32>
    %6 = vector.extract_strided_slice %5 {offsets = [0, 0], sizes = [8, 8], strides = [1, 1]} : vector<8x96xf32> to vector<8x8xf32>
    %7 = vector.extract_strided_slice %5 {offsets = [0, 32], sizes = [8, 8], strides = [1, 1]} : vector<8x96xf32> to vector<8x8xf32>
    %8 = vector.extract_strided_slice %5 {offsets = [0, 64], sizes = [8, 8], strides = [1, 1]} : vector<8x96xf32> to vector<8x8xf32>
    %9 = tpu.transpose %7, [1, 0] : vector<8x8xf32> -> vector<8x8xf32>
    %cst_5 = arith.constant dense<0.000000e+00> : vector<8x8xf32>
    %10 = tpu.matmul %6, %9, %cst_5 {dimension_numbers = #tpu.dot_dimension_numbers<[1], [0], [0], [1], [0, 0, 1, 1], [], []>} : vector<8x8xf32>, vector<8x8xf32>, vector<8x8xf32> -> vector<8x8xf32>
    %cst_6 = arith.constant 0.353553385 : f32
    %11 = vector.broadcast %cst_6 : f32 to vector<8x8xf32>
    %12 = arith.mulf %10, %11 : vector<8x8xf32>
    %cst_7 = arith.constant dense<0xFF800000> : vector<8xf32>
    %13 = vector.multi_reduction <maximumf>, %12, %cst_7 [1] : vector<8x8xf32> to vector<8xf32>
    %14 = vector.shape_cast %13 : vector<8xf32> to vector<8x1xf32>
    %15 = vector.broadcast %14 : vector<8x1xf32> to vector<8x8xf32>
    %16 = arith.subf %12, %15 : vector<8x8xf32>
    %17 = math.exp %16 : vector<8x8xf32>
    %cst_8 = arith.constant dense<0.000000e+00> : vector<8xf32>
    %18 = vector.multi_reduction <add>, %17, %cst_8 [1] : vector<8x8xf32> to vector<8xf32>
    %19 = vector.shape_cast %18 : vector<8xf32> to vector<8x1xf32>
    %20 = tpu.reciprocal %19 : vector<8x1xf32> -> vector<8x1xf32>
    %21 = vector.broadcast %20 : vector<8x1xf32> to vector<8x8xf32>
    %22 = arith.mulf %17, %21 : vector<8x8xf32>
    %cst_9 = arith.constant dense<0.000000e+00> : vector<8x8xf32>
    %23 = tpu.matmul %22, %8, %cst_9 {dimension_numbers = #tpu.dot_dimension_numbers<[1], [0], [0], [1], [0, 0, 1, 1], [], []>} : vector<8x8xf32>, vector<8x8xf32>, vector<8x8xf32> -> vector<8x8xf32>
    %24 = vector.extract_strided_slice %5 {offsets = [0, 8], sizes = [8, 8], strides = [1, 1]} : vector<8x96xf32> to vector<8x8xf32>
    %25 = vector.extract_strided_slice %5 {offsets = [0, 40], sizes = [8, 8], strides = [1, 1]} : vector<8x96xf32> to vector<8x8xf32>
    %26 = vector.extract_strided_slice %5 {offsets = [0, 72], sizes = [8, 8], strides = [1, 1]} : vector<8x96xf32> to vector<8x8xf32>
    %27 = tpu.transpose %25, [1, 0] : vector<8x8xf32> -> vector<8x8xf32>
    %cst_10 = arith.constant dense<0.000000e+00> : vector<8x8xf32>
    %28 = tpu.matmul %24, %27, %cst_10 {dimension_numbers = #tpu.dot_dimension_numbers<[1], [0], [0], [1], [0, 0, 1, 1], [], []>} : vector<8x8xf32>, vector<8x8xf32>, vector<8x8xf32> -> vector<8x8xf32>
    %cst_11 = arith.constant 0.353553385 : f32
    %29 = vector.broadcast %cst_11 : f32 to vector<8x8xf32>
    %30 = arith.mulf %28, %29 : vector<8x8xf32>
    %cst_12 = arith.constant dense<0xFF800000> : vector<8xf32>
    %31 = vector.multi_reduction <maximumf>, %30, %cst_12 [1] : vector<8x8xf32> to vector<8xf32>
    %32 = vector.shape_cast %31 : vector<8xf32> to vector<8x1xf32>
    %33 = vector.broadcast %32 : vector<8x1xf32> to vector<8x8xf32>
    %34 = arith.subf %30, %33 : vector<8x8xf32>
    %35 = math.exp %34 : vector<8x8xf32>
    %cst_13 = arith.constant dense<0.000000e+00> : vector<8xf32>
    %36 = vector.multi_reduction <add>, %35, %cst_13 [1] : vector<8x8xf32> to vector<8xf32>
    %37 = vector.shape_cast %36 : vector<8xf32> to vector<8x1xf32>
    %38 = tpu.reciprocal %37 : vector<8x1xf32> -> vector<8x1xf32>
    %39 = vector.broadcast %38 : vector<8x1xf32> to vector<8x8xf32>
    %40 = arith.mulf %35, %39 : vector<8x8xf32>
    %cst_14 = arith.constant dense<0.000000e+00> : vector<8x8xf32>
    %41 = tpu.matmul %40, %26, %cst_14 {dimension_numbers = #tpu.dot_dimension_numbers<[1], [0], [0], [1], [0, 0, 1, 1], [], []>} : vector<8x8xf32>, vector<8x8xf32>, vector<8x8xf32> -> vector<8x8xf32>
    %42 = vector.extract_strided_slice %5 {offsets = [0, 16], sizes = [8, 8], strides = [1, 1]} : vector<8x96xf32> to vector<8x8xf32>
    %43 = vector.extract_strided_slice %5 {offsets = [0, 48], sizes = [8, 8], strides = [1, 1]} : vector<8x96xf32> to vector<8x8xf32>
    %44 = vector.extract_strided_slice %5 {offsets = [0, 80], sizes = [8, 8], strides = [1, 1]} : vector<8x96xf32> to vector<8x8xf32>
    %45 = tpu.transpose %43, [1, 0] : vector<8x8xf32> -> vector<8x8xf32>
    %cst_15 = arith.constant dense<0.000000e+00> : vector<8x8xf32>
    %46 = tpu.matmul %42, %45, %cst_15 {dimension_numbers = #tpu.dot_dimension_numbers<[1], [0], [0], [1], [0, 0, 1, 1], [], []>} : vector<8x8xf32>, vector<8x8xf32>, vector<8x8xf32> -> vector<8x8xf32>
    %cst_16 = arith.constant 0.353553385 : f32
    %47 = vector.broadcast %cst_16 : f32 to vector<8x8xf32>
    %48 = arith.mulf %46, %47 : vector<8x8xf32>
    %cst_17 = arith.constant dense<0xFF800000> : vector<8xf32>
    %49 = vector.multi_reduction <maximumf>, %48, %cst_17 [1] : vector<8x8xf32> to vector<8xf32>
    %50 = vector.shape_cast %49 : vector<8xf32> to vector<8x1xf32>
    %51 = vector.broadcast %50 : vector<8x1xf32> to vector<8x8xf32>
    %52 = arith.subf %48, %51 : vector<8x8xf32>
    %53 = math.exp %52 : vector<8x8xf32>
    %cst_18 = arith.constant dense<0.000000e+00> : vector<8xf32>
    %54 = vector.multi_reduction <add>, %53, %cst_18 [1] : vector<8x8xf32> to vector<8xf32>
    %55 = vector.shape_cast %54 : vector<8xf32> to vector<8x1xf32>
    %56 = tpu.reciprocal %55 : vector<8x1xf32> -> vector<8x1xf32>
    %57 = vector.broadcast %56 : vector<8x1xf32> to vector<8x8xf32>
    %58 = arith.mulf %53, %57 : vector<8x8xf32>
    %cst_19 = arith.constant dense<0.000000e+00> : vector<8x8xf32>
    %59 = tpu.matmul %58, %44, %cst_19 {dimension_numbers = #tpu.dot_dimension_numbers<[1], [0], [0], [1], [0, 0, 1, 1], [], []>} : vector<8x8xf32>, vector<8x8xf32>, vector<8x8xf32> -> vector<8x8xf32>
    %60 = vector.extract_strided_slice %5 {offsets = [0, 24], sizes = [8, 8], strides = [1, 1]} : vector<8x96xf32> to vector<8x8xf32>
    %61 = vector.extract_strided_slice %5 {offsets = [0, 56], sizes = [8, 8], strides = [1, 1]} : vector<8x96xf32> to vector<8x8xf32>
    %62 = vector.extract_strided_slice %5 {offsets = [0, 88], sizes = [8, 8], strides = [1, 1]} : vector<8x96xf32> to vector<8x8xf32>
    %63 = tpu.transpose %61, [1, 0] : vector<8x8xf32> -> vector<8x8xf32>
    %cst_20 = arith.constant dense<0.000000e+00> : vector<8x8xf32>
    %64 = tpu.matmul %60, %63, %cst_20 {dimension_numbers = #tpu.dot_dimension_numbers<[1], [0], [0], [1], [0, 0, 1, 1], [], []>} : vector<8x8xf32>, vector<8x8xf32>, vector<8x8xf32> -> vector<8x8xf32>
    %cst_21 = arith.constant 0.353553385 : f32
    %65 = vector.broadcast %cst_21 : f32 to vector<8x8xf32>
    %66 = arith.mulf %64, %65 : vector<8x8xf32>
    %cst_22 = arith.constant dense<0xFF800000> : vector<8xf32>
    %67 = vector.multi_reduction <maximumf>, %66, %cst_22 [1] : vector<8x8xf32> to vector<8xf32>
    %68 = vector.shape_cast %67 : vector<8xf32> to vector<8x1xf32>
    %69 = vector.broadcast %68 : vector<8x1xf32> to vector<8x8xf32>
    %70 = arith.subf %66, %69 : vector<8x8xf32>
    %71 = math.exp %70 : vector<8x8xf32>
    %cst_23 = arith.constant dense<0.000000e+00> : vector<8xf32>
    %72 = vector.multi_reduction <add>, %71, %cst_23 [1] : vector<8x8xf32> to vector<8xf32>
    %73 = vector.shape_cast %72 : vector<8xf32> to vector<8x1xf32>
    %74 = tpu.reciprocal %73 : vector<8x1xf32> -> vector<8x1xf32>
    %75 = vector.broadcast %74 : vector<8x1xf32> to vector<8x8xf32>
    %76 = arith.mulf %71, %75 : vector<8x8xf32>
    %cst_24 = arith.constant dense<0.000000e+00> : vector<8x8xf32>
    %77 = tpu.matmul %76, %62, %cst_24 {dimension_numbers = #tpu.dot_dimension_numbers<[1], [0], [0], [1], [0, 0, 1, 1], [], []>} : vector<8x8xf32>, vector<8x8xf32>, vector<8x8xf32> -> vector<8x8xf32>
    %78 = tpu.concatenate %23, %41, %59, %77 in 1 : vector<8x8xf32>, vector<8x8xf32>, vector<8x8xf32>, vector<8x8xf32> -> vector<8x32xf32>
    %c0_25 = arith.constant 0 : index
    %c0_26 = arith.constant 0 : index
    %79 = vector.load %arg4[%c0_25, %c0_26] : memref<32x32xf32, #tpu.memory_space<vmem>>, vector<32x32xf32>
    %cst_27 = arith.constant dense<0.000000e+00> : vector<8x32xf32>
    %80 = tpu.matmul %78, %79, %cst_27 {dimension_numbers = #tpu.dot_dimension_numbers<[1], [0], [0], [1], [0, 0, 1, 1], [], []>} : vector<8x32xf32>, vector<32x32xf32>, vector<8x32xf32> -> vector<8x32xf32>
    %c0_28 = arith.constant 0 : index
    %c0_29 = arith.constant 0 : index
    %81 = vector.load %arg5[%c0_28, %c0_29] : memref<1x32xf32, #tpu.memory_space<vmem>>, vector<1x32xf32>
    %82 = vector.broadcast %81 : vector<1x32xf32> to vector<8x32xf32>
    %83 = arith.addf %80, %82 : vector<8x32xf32>
    %84 = arith.addf %0, %83 : vector<8x32xf32>
    %cst_30 = arith.constant dense<0.000000e+00> : vector<8xf32>
    %85 = vector.multi_reduction <add>, %84, %cst_30 [1] : vector<8x32xf32> to vector<8xf32>
    %86 = vector.shape_cast %85 : vector<8xf32> to vector<8x1xf32>
    %cst_31 = arith.constant 3.200000e+01 : f32
    %87 = vector.broadcast %cst_31 : f32 to vector<8x1xf32>
    %88 = arith.divf %86, %87 : vector<8x1xf32>
    %89 = vector.broadcast %88 : vector<8x1xf32> to vector<8x32xf32>
    %90 = arith.subf %84, %89 : vector<8x32xf32>
    %91 = arith.mulf %90, %90 : vector<8x32xf32>
    %cst_32 = arith.constant dense<0.000000e+00> : vector<8xf32>
    %92 = vector.multi_reduction <add>, %91, %cst_32 [1] : vector<8x32xf32> to vector<8xf32>
    %93 = vector.shape_cast %92 : vector<8xf32> to vector<8x1xf32>
    %cst_33 = arith.constant 3.200000e+01 : f32
    %94 = vector.broadcast %cst_33 : f32 to vector<8x1xf32>
    %95 = arith.divf %93, %94 : vector<8x1xf32>
    %96 = vector.broadcast %88 : vector<8x1xf32> to vector<8x32xf32>
    %97 = arith.subf %84, %96 : vector<8x32xf32>
    %cst_34 = arith.constant 9.99999974E-6 : f32
    %98 = vector.broadcast %cst_34 : f32 to vector<8x1xf32>
    %99 = arith.addf %95, %98 : vector<8x1xf32>
    %100 = math.rsqrt %99 : vector<8x1xf32>
    %101 = vector.broadcast %100 : vector<8x1xf32> to vector<8x32xf32>
    %102 = arith.mulf %97, %101 : vector<8x32xf32>
    %c0_35 = arith.constant 0 : index
    %c0_36 = arith.constant 0 : index
    %103 = vector.load %arg6[%c0_35, %c0_36] : memref<1x32xf32, #tpu.memory_space<vmem>>, vector<1x32xf32>
    %104 = vector.broadcast %103 : vector<1x32xf32> to vector<8x32xf32>
    %105 = arith.mulf %102, %104 : vector<8x32xf32>
    %c0_37 = arith.constant 0 : index
    %c0_38 = arith.constant 0 : index
    %106 = vector.load %arg7[%c0_37, %c0_38] : memref<1x32xf32, #tpu.memory_space<vmem>>, vector<1x32xf32>
    %107 = vector.broadcast %106 : vector<1x32xf32> to vector<8x32xf32>
    %108 = arith.addf %105, %107 : vector<8x32xf32>
    %c0_39 = arith.constant 0 : index
    %c0_40 = arith.constant 0 : index
    %109 = vector.load %arg8[%c0_39, %c0_40] : memref<8x32xf32, #tpu.memory_space<vmem>>, vector<8x32xf32>
    tpu.vector_store %arg8[%c0_39, %c0_40], %108 {strides = array<i32>} : memref<8x32xf32, #tpu.memory_space<vmem>>, vector<8x32xf32>,
    return
  }
  func.func @transform_0(%arg0: i32) -> (i32, i32) {
    %c0_i32 = arith.constant 0 : i32
    %c0_i32_0 = arith.constant 0 : i32
    return %arg0, %c0_i32 : i32, i32
  }
  func.func @transform_1(%arg0: i32) -> (i32, i32) {
    %c0_i32 = arith.constant 0 : i32
    %c0_i32_0 = arith.constant 0 : i32
    %c0_i32_1 = arith.constant 0 : i32
    return %c0_i32, %c0_i32_0 : i32, i32
  }
  func.func @transform_2(%arg0: i32) -> (i32, i32) {
    %c0_i32 = arith.constant 0 : i32
    %c0_i32_0 = arith.constant 0 : i32
    %c0_i32_1 = arith.constant 0 : i32
    return %c0_i32, %c0_i32_0 : i32, i32
  }
  func.func @transform_3(%arg0: i32) -> (i32, i32) {
    %c0_i32 = arith.constant 0 : i32
    %c0_i32_0 = arith.constant 0 : i32
    %c0_i32_1 = arith.constant 0 : i32
    return %c0_i32, %c0_i32_0 : i32, i32
  }
  func.func @transform_4(%arg0: i32) -> (i32, i32) {
    %c0_i32 = arith.constant 0 : i32
    %c0_i32_0 = arith.constant 0 : i32
    %c0_i32_1 = arith.constant 0 : i32
    return %c0_i32, %c0_i32_0 : i32, i32
  }
  func.func @transform_5(%arg0: i32) -> (i32, i32) {
    %c0_i32 = arith.constant 0 : i32
    %c0_i32_0 = arith.constant 0 : i32
    %c0_i32_1 = arith.constant 0 : i32
    return %c0_i32, %c0_i32_0 : i32, i32
  }
  func.func @transform_6(%arg0: i32) -> (i32, i32) {
    %c0_i32 = arith.constant 0 : i32
    %c0_i32_0 = arith.constant 0 : i32
    %c0_i32_1 = arith.constant 0 : i32
    return %c0_i32, %c0_i32_0 : i32, i32
  }
  func.func @transform_7(%arg0: i32) -> (i32, i32) {
    %c0_i32 = arith.constant 0 : i32
    %c0_i32_0 = arith.constant 0 : i32
    return %arg0, %c0_i32 : i32, i32
  }
}

module attributes {stable_mosaic.version = 11 : i64} {
  func.func @_linear_kernel(%arg0: i32, %arg1: i32, %arg2: i32, %arg3: memref<2x256xf32, #tpu.memory_space<vmem>>, %arg4: memref<256x8xf32, #tpu.memory_space<vmem>>, %arg5: memref<1x8xf32, #tpu.memory_space<vmem>>, %arg6: memref<2x8xf32, #tpu.memory_space<vmem>>, %arg7: memref<2x8xf32, #tpu.memory_space<vmem>>) attributes {dimension_semantics = [#tpu.dimension_semantics<parallel>, #tpu.dimension_semantics<parallel>, #tpu.dimension_semantics<arbitrary>], iteration_bounds = array<i64: 1, 1, 1>, scalar_prefetch = 0 : i64, scratch_operands = 1 : i64, tpu.core_type = #tpu.core_type<tc>, window_params = [{transform_indices = @transform_0, window_bounds = array<i64: 2, 256>}, {transform_indices = @transform_1, window_bounds = array<i64: 256, 8>}, {transform_indices = @transform_2, window_bounds = array<i64: 1, 8>}, {transform_indices = @transform_3, window_bounds = array<i64: 2, 8>}]} {
    %c0_i32 = arith.constant 0 : i32
    %0 = arith.cmpi eq, %arg2, %c0_i32 : i32
    %1 = arith.extui %0 : i1 to i32
    %c0_i32_0 = arith.constant 0 : i32
    %2 = arith.cmpi ne, %1, %c0_i32_0 : i32
    scf.if %2 {
      %cst_10 = arith.constant 0.000000e+00 : f32
      %12 = vector.broadcast %cst_10 : f32 to vector<2x8xf32>
      %c0_11 = arith.constant 0 : index
      %c0_12 = arith.constant 0 : index
      %13 = vector.load %arg7[%c0_11, %c0_12] : memref<2x8xf32, #tpu.memory_space<vmem>>, vector<2x8xf32>
      tpu.vector_store %arg7[%c0_11, %c0_12], %12 {strides = array<i32>} : memref<2x8xf32, #tpu.memory_space<vmem>>, vector<2x8xf32>,
    } else {
    }
    %c0 = arith.constant 0 : index
    %c0_1 = arith.constant 0 : index
    %3 = vector.load %arg7[%c0, %c0_1] : memref<2x8xf32, #tpu.memory_space<vmem>>, vector<2x8xf32>
    %c0_2 = arith.constant 0 : index
    %c0_3 = arith.constant 0 : index
    %4 = vector.load %arg3[%c0_2, %c0_3] : memref<2x256xf32, #tpu.memory_space<vmem>>, vector<2x256xf32>
    %c0_4 = arith.constant 0 : index
    %c0_5 = arith.constant 0 : index
    %5 = vector.load %arg4[%c0_4, %c0_5] : memref<256x8xf32, #tpu.memory_space<vmem>>, vector<256x8xf32>
    %cst = arith.constant dense<0.000000e+00> : vector<2x8xf32>
    %6 = tpu.matmul %4, %5, %cst {dimension_numbers = #tpu.dot_dimension_numbers<[1], [0], [0], [1], [0, 0, 1, 1], [], []>} : vector<2x256xf32>, vector<256x8xf32>, vector<2x8xf32> -> vector<2x8xf32>
    %7 = arith.addf %3, %6 : vector<2x8xf32>
    %c0_6 = arith.constant 0 : index
    %c0_7 = arith.constant 0 : index
    %8 = vector.load %arg7[%c0_6, %c0_7] : memref<2x8xf32, #tpu.memory_space<vmem>>, vector<2x8xf32>
    tpu.vector_store %arg7[%c0_6, %c0_7], %7 {strides = array<i32>} : memref<2x8xf32, #tpu.memory_space<vmem>>, vector<2x8xf32>,
    %c0_i32_8 = arith.constant 0 : i32
    %9 = arith.cmpi eq, %arg2, %c0_i32_8 : i32
    %10 = arith.extui %9 : i1 to i32
    %c0_i32_9 = arith.constant 0 : i32
    %11 = arith.cmpi ne, %10, %c0_i32_9 : i32
    scf.if %11 {
      %c0_10 = arith.constant 0 : index
      %c0_11 = arith.constant 0 : index
      %12 = vector.load %arg7[%c0_10, %c0_11] : memref<2x8xf32, #tpu.memory_space<vmem>>, vector<2x8xf32>
      %c0_12 = arith.constant 0 : index
      %c0_13 = arith.constant 0 : index
      %13 = vector.load %arg5[%c0_12, %c0_13] : memref<1x8xf32, #tpu.memory_space<vmem>>, vector<1x8xf32>
      %14 = vector.broadcast %13 : vector<1x8xf32> to vector<2x8xf32>
      %15 = arith.addf %12, %14 : vector<2x8xf32>
      %c0_14 = arith.constant 0 : index
      %c0_15 = arith.constant 0 : index
      %16 = vector.load %arg6[%c0_14, %c0_15] : memref<2x8xf32, #tpu.memory_space<vmem>>, vector<2x8xf32>
      tpu.vector_store %arg6[%c0_14, %c0_15], %15 {strides = array<i32>} : memref<2x8xf32, #tpu.memory_space<vmem>>, vector<2x8xf32>,
    } else {
    }
    return
  }
  func.func @transform_0(%arg0: i32, %arg1: i32, %arg2: i32) -> (i32, i32) {
    %c0_i32 = arith.constant 0 : i32
    return %arg0, %arg2 : i32, i32
  }
  func.func @transform_1(%arg0: i32, %arg1: i32, %arg2: i32) -> (i32, i32) {
    %c0_i32 = arith.constant 0 : i32
    return %arg2, %arg1 : i32, i32
  }
  func.func @transform_2(%arg0: i32, %arg1: i32, %arg2: i32) -> (i32, i32) {
    %c0_i32 = arith.constant 0 : i32
    %c0_i32_0 = arith.constant 0 : i32
    return %c0_i32, %arg1 : i32, i32
  }
  func.func @transform_3(%arg0: i32, %arg1: i32, %arg2: i32) -> (i32, i32) {
    %c0_i32 = arith.constant 0 : i32
    return %arg0, %arg1 : i32, i32
  }
}

</mosaic_0001>

<llo_original>
// kernel: _lambda_.6
$region0: #{_lambda_.6}
  #allocation0 [shape = 'u32[]', space=smem, size = 0x4, offset = 0x4, fixed_abs, tag = 'smem constant byte address 0x4 - core index']
  #allocation1 [shape = 'u32[144,128]{1,0:T(1,128)}', space=vmem, size = 0x12000, scoped, tag = 'internal scratch']
  #allocation2 [shape = 'f32[8,32]{1,0:T(8,128)}', space=vmem, size = 0x1000, scoped, tag = 'scratch operand']
  %s0 = inlined_call_operand.vmem [shape: f32[16,16], index: 0, kind: input, shape index: {}]
  %s1 = inlined_call_operand.vmem [shape: f32[16,32], index: 1, kind: input, shape index: {}]
  %s2 = inlined_call_operand.vmem [shape: f32[1,32], index: 2, kind: input, shape index: {}]
  %s3 = inlined_call_operand.vmem [shape: f32[16,32], index: 3, kind: output, shape index: {}]
  %s4 = sld [smem:[#allocation0]]
  $region53: #{_lambda_.6} parent=0
    _
  %s6 = ssub.s32 1, %s4
  %s7 = scalar_select 0, %s6, %s4
  loop: start=0, step=1, limit=4
  $region2: #{_lambda_.6} parent=0 // loop_pre_header
    _
  $region3: #{_lambda_.6} parent=0 // loop_header
    %s9 = sphi 0, %s13
    %p10 = scmp.ge.s32.totalorder %s9, 4
    %s16 = sphi 0, %s35
    %s17 = sphi 0, %s31
    %s18 = sphi 0, %s27
    %s19 = sphi 0, %s16
    %s20 = sphi 0, %s17
    %s21 = sphi 0, %s18
    %s22 = sphi 0, %s19
    %s23 = sphi 0, %s20
    %s24 = sphi 0, %s21
    %s40 = sphi 0, %s42
    %s43 = sphi 0, %s40
    %s44 = sphi 0, %s43
    %s60 = sphi 0, %s44
    %s68 = sphi 0, %s70
    %s71 = sphi 0, %s68
    %s72 = sphi 0, %s71
    %s88 = sphi 0, %s72
    %s94 = sphi 0, %s96
    %s97 = sphi 0, %s94
    %s98 = sphi 0, %s97
    %s114 = sphi 0, %s98
    %s122 = sphi 0, %s124
    %s125 = sphi 0, %s122
    %s126 = sphi 0, %s125
    %s142 = sphi 0, %s126
  $region4: #{_lambda_.6} parent=0 // loop_header_branch
    %12 = sbr.rel (%p10) target = $region8
  $region5: #{_lambda_.6} parent=0 // loop_body
    %s14 = ssub.s32 %s9, 1
    %s15 = ssub.s32 %s9, 2
    %s25 = sadd.s32 1, %s18
    %p26 = scmp.ge.s32.totalorder %s25, 1
    %s27 = scalar_select %p26, 0, %s25
    %s28 = sadd.s32 1, %s17
    %s29 = scalar_select %p26, %s28, %s17
    %p30 = scmp.ge.s32.totalorder %s29, 1
    %s31 = scalar_select %p30, 0, %s29
    %s32 = sadd.s32 1, %s16
    %s33 = scalar_select %p30, %s32, %s16
    %p34 = scmp.ge.s32.totalorder %s33, 2
    %s35 = scalar_select %p34, 0, %s33
    %s36 = ssub.s32 %s16, %s35
    %s37 = ssub.s32 %s18, %s27
    %s38 = sor.u32 %s36, %s37
    %p39 = scmp.eq.s32.totalorder %s38, 0
    %s41 = sadd.s32 %s40, 1
    %s42 = scalar_select %p39, %s40, %s41
    %p45 = pneg %p39
    %p46 = scmp.eq.s32.totalorder %s9, 1
    %p47 = por %p45, %p46
    %p48 = scmp.ne.s32.totalorder %s40, %s43
    %p49 = scmp.eq.s32.totalorder %s9, 0
    %p50 = por %p48, %p49
    %p51 = scmp.ne.s32.totalorder %s40, %s43
    %p52 = scmp.eq.s32.totalorder %s14, 1
    %p53 = por %p51, %p52
    %p54 = scmp.ne.s32.totalorder %s43, %s44
    %p55 = scmp.eq.s32.totalorder %s14, 0
    %p56 = por %p54, %p55
    %p57 = scmp.ne.s32.totalorder %s43, %s44
    %p58 = scmp.eq.s32.totalorder %s15, 1
    %p59 = por %p57, %p58
    %p61 = scmp.ne.s32.totalorder %s44, %s60
    %p62 = scmp.eq.s32.totalorder %s15, 0
    %p63 = por %p61, %p62
    %s64 = ssub.s32 %s18, %s27
    %s65 = ssub.s32 %s17, %s31
    %s66 = sor.u32 %s64, %s65
    %p67 = scmp.eq.s32.totalorder %s66, 0
    %s69 = sadd.s32 %s68, 1
    %s70 = scalar_select %p67, %s68, %s69
    %p73 = pneg %p67
    %p74 = scmp.eq.s32.totalorder %s9, 1
    %p75 = por %p73, %p74
    %p76 = scmp.ne.s32.totalorder %s68, %s71
    %p77 = scmp.eq.s32.totalorder %s9, 0
    %p78 = por %p76, %p77
    %p79 = scmp.ne.s32.totalorder %s68, %s71
    %p80 = scmp.eq.s32.totalorder %s14, 1
    %p81 = por %p79, %p80
    %p82 = scmp.ne.s32.totalorder %s71, %s72
    %p83 = scmp.eq.s32.totalorder %s14, 0
    %p84 = por %p82, %p83
    %p85 = scmp.ne.s32.totalorder %s71, %s72
    %p86 = scmp.eq.s32.totalorder %s15, 1
    %p87 = por %p85, %p86
    %p89 = scmp.ne.s32.totalorder %s72, %s88
    %p90 = scmp.eq.s32.totalorder %s15, 0
    %p91 = por %p89, %p90
    %s92 = ssub.s32 %s17, %s31
    %p93 = scmp.eq.s32.totalorder %s92, 0
    %s95 = sadd.s32 %s94, 1
    %s96 = scalar_select %p93, %s94, %s95
    %p99 = pneg %p93
    %p100 = scmp.eq.s32.totalorder %s9, 1
    %p101 = por %p99, %p100
    %p102 = scmp.ne.s32.totalorder %s94, %s97
    %p103 = scmp.eq.s32.totalorder %s9, 0
    %p104 = por %p102, %p103
    %p105 = scmp.ne.s32.totalorder %s94, %s97
    %p106 = scmp.eq.s32.totalorder %s14, 1
    %p107 = por %p105, %p106
    %p108 = scmp.ne.s32.totalorder %s97, %s98
    %p109 = scmp.eq.s32.totalorder %s14, 0
    %p110 = por %p108, %p109
    %p111 = scmp.ne.s32.totalorder %s97, %s98
    %p112 = scmp.eq.s32.totalorder %s15, 1
    %p113 = por %p111, %p112
    %p115 = scmp.ne.s32.totalorder %s98, %s114
    %p116 = scmp.eq.s32.totalorder %s15, 0
    %p117 = por %p115, %p116
    %s118 = ssub.s32 %s16, %s35
    %s119 = ssub.s32 %s17, %s31
    %s120 = sor.u32 %s118, %s119
    %p121 = scmp.eq.s32.totalorder %s120, 0
    %s123 = sadd.s32 %s122, 1
    %s124 = scalar_select %p121, %s122, %s123
    %p127 = pneg %p121
    %p128 = scmp.eq.s32.totalorder %s9, 1
    %p129 = por %p127, %p128
    %p130 = scmp.ne.s32.totalorder %s122, %s125
    %p131 = scmp.eq.s32.totalorder %s9, 0
    %p132 = por %p130, %p131
    %p133 = scmp.ne.s32.totalorder %s122, %s125
    %p134 = scmp.eq.s32.totalorder %s14, 1
    %p135 = por %p133, %p134
    %p136 = scmp.ne.s32.totalorder %s125, %s126
    %p137 = scmp.eq.s32.totalorder %s14, 0
    %p138 = por %p136, %p137
    %p139 = scmp.ne.s32.totalorder %s125, %s126
    %p140 = scmp.eq.s32.totalorder %s15, 1
    %p141 = por %p139, %p140
    %p143 = scmp.ne.s32.totalorder %s126, %s142
    %p144 = scmp.eq.s32.totalorder %s15, 0
    %p145 = por %p143, %p144
    %p146 = scmp.le.s32.totalorder 1, %s9
    %p147 = scmp.lt.s32.totalorder %s9, 3
    %p148 = pnand %p146, %p147
    %p149 = pneg %p148
    // Predicated region
    $region9: #{_lambda_.6} parent=5 // pred_check
      _
    $region10: #{_lambda_.6} parent=5 // pred_check_branch
      %151 = sbr.rel (%p148) target = $region12
    $region11: #{_lambda_.6} parent=5 // pred_region
      %s152 = ssub.s32 %s9, 1
      // Predicated region
      $region13: #{_lambda_.6} parent=11 // pred_check
        %p153 = pneg %p84
      $region14: #{_lambda_.6} parent=11 // pred_check_branch
        %155 = sbr.rel (%p153) target = $region16
      $region15: #{_lambda_.6} parent=11 // pred_region
        %s156 = smul.u32 2, %s21
        %p157 = scmp.lt.s32.totalorder %s156, 1
        %s158 = scalar_select %p157, %s156, 1
        %p159 = scmp.lt.s32.totalorder %s20, 0
        %s160 = scalar_select %p159, %s20, 0
        %s161 = sadd.s32 %s160, %s158
        %s162 = smul.addr %s161, 8
        %s163 = scalar_lea.vmem %s1, %s162
        %s164 = smul.u32 2, %s21
      $region16: #{_lambda_.6} parent=11 // pred_fallthru
        _
      // Predicated region
      $region17: #{_lambda_.6} parent=11 // pred_check
        %p165 = pneg %p110
      $region18: #{_lambda_.6} parent=11 // pred_check_branch
        %167 = sbr.rel (%p165) target = $region20
      $region19: #{_lambda_.6} parent=11 // pred_region
        %p168 = scmp.lt.s32.totalorder %s20, 0
        %s169 = scalar_select %p168, %s20, 0
        %s170 = scalar_lea.vmem %s2, %s169
      $region20: #{_lambda_.6} parent=11 // pred_fallthru
        _
    $region12: #{_lambda_.6} parent=5 // pred_fallthru
      _
    %p171 = scmp.lt.s32.totalorder %s9, 2
    // Predicated region
    $region21: #{_lambda_.6} parent=5 // pred_check
      %p172 = pneg %p171
    $region22: #{_lambda_.6} parent=5 // pred_check_branch
      %174 = sbr.rel (%p172) target = $region24
    $region23: #{_lambda_.6} parent=5 // pred_region
      // Predicated region
      $region25: #{_lambda_.6} parent=23 // pred_check
        %p175 = pneg %p50
      $region26: #{_lambda_.6} parent=23 // pred_check_branch
        %177 = sbr.rel (%p175) target = $region28
      $region27: #{_lambda_.6} parent=23 // pred_region
        %p178 = scmp.lt.s32.totalorder %s16, 1
        %s179 = scalar_select %p178, %s16, 1
        %p180 = scmp.lt.s32.totalorder %s18, 0
        %s181 = scalar_select %p180, %s18, 0
        %s182 = sadd.s32 %s181, %s179
        %s183 = smul.addr %s182, 8
        %s184 = scalar_lea.vmem %s0, %s183
      $region28: #{_lambda_.6} parent=23 // pred_fallthru
        _
    $region24: #{_lambda_.6} parent=5 // pred_fallthru
      _
    %p185 = scmp.le.s32.totalorder 1, %s9
    %p186 = scmp.lt.s32.totalorder %s9, 3
    %p187 = pnand %p185, %p186
    %p188 = pneg %p187
    // Predicated region
    $region29: #{_lambda_.6} parent=5 // pred_check
      _
    $region30: #{_lambda_.6} parent=5 // pred_check_branch
      %190 = sbr.rel (%p187) target = $region32
    $region31: #{_lambda_.6} parent=5 // pred_region
      %s191 = ssub.s32 %s9, 1
      %p192 = scmp.lt.s32.totalorder %s19, 1
      %s193 = scalar_select %p192, %s19, 1
      %p194 = scmp.lt.s32.totalorder %s21, 0
      %s195 = scalar_select %p194, %s21, 0
      %s196 = sadd.s32 %s195, %s193
      %s197 = smul.addr %s196, 8
      %s198 = scalar_lea.vmem %s0, %s197
      %p199 = pneg %p56
      %p200 = pneg %p53
      %s201 = smul.u32 2, %s21
      %p202 = scmp.lt.s32.totalorder %s201, 1
      %s203 = scalar_select %p202, %s201, 1
      %p204 = scmp.lt.s32.totalorder %s20, 0
      %s205 = scalar_select %p204, %s20, 0
      %s206 = sadd.s32 %s205, %s203
      %s207 = smul.addr %s206, 8
      %s208 = scalar_lea.vmem %s1, %s207
      %p209 = pneg %p84
      %p210 = pneg %p81
      %p211 = scmp.lt.s32.totalorder %s20, 0
      %s212 = scalar_select %p211, %s20, 0
      %s213 = scalar_lea.vmem %s2, %s212
      %p214 = pneg %p110
      %p215 = pneg %p107
      %p216 = pneg %p138
      %p217 = pneg %p135
      %p218 = scmp.lt.s32.totalorder %s19, 1
      %s219 = scalar_select %p218, %s19, 1
      %p220 = scmp.lt.s32.totalorder %s20, 0
      %s221 = scalar_select %p220, %s20, 0
      %s222 = sadd.s32 %s221, %s219
      %s223 = smul.addr %s222, 8
      %s224 = scalar_lea.vmem %s3, %s223
      %p225 = scmp.lt.s32.totalorder %s19, 1
      %s226 = scalar_select %p225, %s19, 1
      %p227 = scmp.lt.s32.totalorder %s21, 0
      %s228 = scalar_select %p227, %s21, 0
      %s229 = sadd.s32 %s228, %s226
      %s230 = smul.addr %s229, 8
      %s231 = scalar_lea.vmem %s0, %s230
      %s232 = smul.u32 2, %s21
      %p233 = scmp.lt.s32.totalorder %s232, 1
      %s234 = scalar_select %p233, %s232, 1
      %p235 = scmp.lt.s32.totalorder %s20, 0
      %s236 = scalar_select %p235, %s20, 0
      %s237 = sadd.s32 %s236, %s234
      %s238 = smul.addr %s237, 8
      %s239 = scalar_lea.vmem %s1, %s238
      %s240 = smul.u32 2, %s21
      %p241 = scmp.lt.s32.totalorder %s20, 0
      %s242 = scalar_select %p241, %s20, 0
      %s243 = scalar_lea.vmem %s2, %s242
      %p244 = scmp.lt.s32.totalorder %s19, 1
      %s245 = scalar_select %p244, %s19, 1
      %p246 = scmp.lt.s32.totalorder %s20, 0
      %s247 = scalar_select %p246, %s20, 0
      %s248 = sadd.s32 %s247, %s245
      %s249 = smul.addr %s248, 8
      %s250 = scalar_lea.vmem %s3, %s249
      %p251 = scmp.eq.s32.totalorder %s21, 0
      // Predicated region
      $region33: #{_lambda_.6} parent=31 // pred_check
        %p252 = pneg %p251
      $region34: #{_lambda_.6} parent=31 // pred_check_branch
        %254 = sbr.rel (%p252) target = $region36
      $region35: #{_lambda_.6} parent=31 // pred_region
        %vm255 = vcmask 261120
        %256 = vst.msk [vmem:[#allocation2] sm:$0xff] %vm255, 0.0
      $region36: #{_lambda_.6} parent=31 // pred_fallthru
        _
      %v257 = vld [vmem:[#allocation2] sm:$0xff]
      %v258 = vld [vmem:[%s231] sm:$0xff]
      %v259 = vld [vmem:[%s239] sm:$0xff]
      %v260 = vld [vmem:[%s239 + $0x8] sm:$0xff]
      %vm261 = vcmask 130048
      %v263 = vsel %vm261, %v258, 0
      %265 = vmatprep.subr.mxu0 0.0
      %266 = vmatpush1.msra.mxu0 %v259
      %267 = vmatprep.subr.mxu0 0.0
      %268 = vmatpush1.msra.mxu0 %v260
      %269 = vmatprep.subr.mxu0 0.0
      %270 = vmatpush1.msra.mxu0 0.0
      %271 = vmatprep.subr.mxu0 0.0
      %272 = vmatpush1.msra.mxu0 0.0
      %273 = vmatprep.subr.mxu0 0.0
      %274 = vmatpush1.msra.mxu0 0.0
      %275 = vmatprep.subr.mxu0 0.0
      %276 = vmatpush1.msra.mxu0 0.0
      %277 = vmatprep.subr.mxu0 0.0
      %278 = vmatpush1.msra.mxu0 0.0
      %279 = vmatprep.subr.mxu0 0.0
      %280 = vmatpush1.msra.mxu0 0.0
      %281 = vmatprep.subr.mxu0 0.0
      %282 = vmatpush1.msra.mxu0 0.0
      %283 = vmatprep.subr.mxu0 0.0
      %284 = vmatpush1.msra.mxu0 0.0
      %285 = vmatprep.subr.mxu0 0.0
      %286 = vmatpush1.msra.mxu0 0.0
      %287 = vmatprep.subr.mxu0 0.0
      %288 = vmatpush1.msra.mxu0 0.0
      %289 = vmatprep.subr.mxu0 0.0
      %290 = vmatpush1.msra.mxu0 0.0
      %291 = vmatprep.subr.mxu0 0.0
      %292 = vmatpush1.msra.mxu0 0.0
      %293 = vmatprep.subr.mxu0 0.0
      %294 = vmatpush1.msra.mxu0 0.0
      %295 = vmatprep.subr.mxu0 0.0
      %296 = vmatpush1.msra.mxu0 0.0
      %297 = vmatprep.subr.mxu0 0.0
      %298 = vmatpush1.msra.mxu0 0.0
      %299 = vmatprep.subr.mxu0 0.0
      %300 = vmatpush1.msra.mxu0 0.0
      %301 = vmatprep.subr.mxu0 0.0
      %302 = vmatpush1.msra.mxu0 0.0
      %303 = vmatprep.subr.mxu0 0.0
      %304 = vmatpush1.msra.mxu0 0.0
      %305 = vmatprep.subr.mxu0 0.0
      %306 = vmatpush1.msra.mxu0 0.0
      %307 = vmatprep.subr.mxu0 0.0
      %308 = vmatpush1.msra.mxu0 0.0
      %309 = vmatprep.subr.mxu0 0.0
      %310 = vmatpush1.msra.mxu0 0.0
      %311 = vmatprep.subr.mxu0 0.0
      %312 = vmatpush1.msra.mxu0 0.0
      %313 = vmatprep.subr.mxu0 0.0
      %314 = vmatpush1.msra.mxu0 0.0
      %315 = vmatprep.subr.mxu0 0.0
      %316 = vmatpush1.msra.mxu0 0.0
      %317 = vmatprep.subr.mxu0 0.0
      %318 = vmatpush1.msra.mxu0 0.0
      %319 = vmatprep.subr.mxu0 0.0
      %320 = vmatpush1.msra.mxu0 0.0
      %321 = vmatprep.subr.mxu0 0.0
      %322 = vmatpush1.msra.mxu0 0.0
      %323 = vmatprep.subr.mxu0 0.0
      %324 = vmatpush1.msra.mxu0 0.0
      %325 = vmatprep.subr.mxu0 0.0
      %326 = vmatpush1.msra.mxu0 0.0
      %327 = vmatprep.subr.mxu0 0.0
      %328 = vmatpush1.msra.mxu0 0.0
      %329 = vmatprep.mubr.f32.mxu0 0.0
      %330 = vmatmul.mubr.f32.gmra.mrb[0].mxu0 %v263
      %v331 = vpop.f32.mrb[0].mxu0
      %v332 = vadd.f32 0.0, %v331
      %v333 = vpop.f32.mrb[0].mxu0
      %334 = vdwg.mxu0
      %v335 = vadd.f32 %v257, %v332
      %vm336 = vcmask 261120
      %337 = vst.msk [vmem:[#allocation2] sm:$0xff] %vm336, %v335
      // Predicated region
      $region37: #{_lambda_.6} parent=31 // pred_check
        %p338 = pneg %p251
      $region38: #{_lambda_.6} parent=31 // pred_check_branch
        %340 = sbr.rel (%p338) target = $region40
      $region39: #{_lambda_.6} parent=31 // pred_region
        %v341 = vld [vmem:[#allocation2] sm:$0xff]
        %v342 = vld [vmem:[%s243] sm:$0x1]
        %v344 = vlaneseq
        %v345 = vshrl.u32 %v344, 7
        %v346 = vsub.s32 0, %v345
        %v347 = vrot.slane %v342, %v346
        %v349 = vadd.f32 %v341, %v347
        %350 = vst.msk [vmem:[%s250] sm:$0xff] %vm336, %v349
      $region40: #{_lambda_.6} parent=31 // pred_fallthru
        _
      %p351 = scmp.lt.s32.totalorder %s19, 1
      %s352 = scalar_select %p351, %s19, 1
      %p353 = scmp.lt.s32.totalorder %s20, 0
      %s354 = scalar_select %p353, %s20, 0
      %s355 = sadd.s32 %s354, %s352
      %s356 = smul.addr %s355, 8
      %s357 = scalar_lea.vmem %s3, %s356
      // Predicated region
      $region41: #{_lambda_.6} parent=31 // pred_check
        %p358 = pneg %p135
      $region42: #{_lambda_.6} parent=31 // pred_check_branch
        %360 = sbr.rel (%p358) target = $region44
      $region43: #{_lambda_.6} parent=31 // pred_region
        _
      $region44: #{_lambda_.6} parent=31 // pred_fallthru
        _
    $region32: #{_lambda_.6} parent=5 // pred_fallthru
      _
    %p361 = scmp.le.s32.totalorder 2, %s9
    // Predicated region
    $region45: #{_lambda_.6} parent=5 // pred_check
      %p362 = pneg %p361
    $region46: #{_lambda_.6} parent=5 // pred_check_branch
      %364 = sbr.rel (%p362) target = $region48
    $region47: #{_lambda_.6} parent=5 // pred_region
      %s365 = ssub.s32 %s9, 2
      // Predicated region
      $region49: #{_lambda_.6} parent=47 // pred_check
        %p366 = pneg %p141
      $region50: #{_lambda_.6} parent=47 // pred_check_branch
        %368 = sbr.rel (%p366) target = $region52
      $region51: #{_lambda_.6} parent=47 // pred_region
        %p369 = scmp.lt.s32.totalorder %s22, 1
        %s370 = scalar_select %p369, %s22, 1
        %p371 = scmp.lt.s32.totalorder %s23, 0
        %s372 = scalar_select %p371, %s23, 0
        %s373 = sadd.s32 %s372, %s370
        %s374 = smul.addr %s373, 8
        %s375 = scalar_lea.vmem %s3, %s374
      $region52: #{_lambda_.6} parent=47 // pred_fallthru
        _
    $region48: #{_lambda_.6} parent=5 // pred_fallthru
      _
  $region6: #{_lambda_.6} parent=0 // loop_footer
    %s13 = sadd.s32 1, %s9
  $region7: #{_lambda_.6} parent=0 // loop_footer_branch
    %8 = sbr.rel target = $region3
  $region8: #{_lambda_.6} parent=0 // loop_exit
    _

// kernel: _lambda_.8
$region0: #{_lambda_.8}
  #allocation0 [shape = 'u32[]', space=smem, size = 0x4, offset = 0x4, fixed_abs, tag = 'smem constant byte address 0x4 - core index']
  #allocation1 [shape = 'u32[144,128]{1,0:T(1,128)}', space=vmem, size = 0x12000, scoped, tag = 'internal scratch']
  #allocation2 [shape = 'f32[8,32]{1,0:T(8,128)}', space=vmem, size = 0x1000, scoped, tag = 'scratch operand']
  %s0 = inlined_call_operand.vmem [shape: f32[16,32], index: 0, kind: input, shape index: {}]
  %s1 = inlined_call_operand.vmem [shape: f32[32,2048], index: 1, kind: input, shape index: {}]
  %s2 = inlined_call_operand.vmem [shape: f32[1,2048], index: 2, kind: input, shape index: {}]
  %s3 = inlined_call_operand.vmem [shape: f32[2048,32], index: 3, kind: input, shape index: {}]
  %s4 = inlined_call_operand.vmem [shape: f32[1,32], index: 4, kind: input, shape index: {}]
  %s5 = inlined_call_operand.vmem [shape: f32[1,32], index: 5, kind: input, shape index: {}]
  %s6 = inlined_call_operand.vmem [shape: f32[1,32], index: 6, kind: input, shape index: {}]
  %s7 = inlined_call_operand.vmem [shape: f32[16,32], index: 7, kind: output, shape index: {}]
  %s8 = sld [smem:[#allocation0]]
  $region92: #{_lambda_.8} parent=0
    _
  %s10 = ssub.s32 1, %s8
  %s11 = scalar_select 0, %s10, %s8
  $region1: #{_lambda_.8} parent=0
    #allocation3 [shape = 'u8[131072]{0}', space=vmem, size = 0x20000, scoped, tag = 'input window, operand 1']
    loop: start=0, step=1, limit=10
    $region2: #{_lambda_.8} parent=1 // loop_pre_header
      _
    $region3: #{_lambda_.8} parent=1 // loop_header
      %s13 = sphi 0, %s17
      %p14 = scmp.ge.s32.totalorder %s13, 10
      %s20 = sphi 0, %s32
      %s21 = sphi 0, %s28
      %s22 = sphi 0, %s20
      %s23 = sphi 0, %s21
      %s24 = sphi 0, %s22
      %s25 = sphi 0, %s23
      %s35 = sphi 0, %s37
      %s38 = sphi 0, %s35
      %s39 = sphi 0, %s38
      %s55 = sphi 0, %s39
      %s61 = sphi 0, %s63
      %s64 = sphi 0, %s61
      %s65 = sphi 0, %s64
      %s81 = sphi 0, %s65
      %s87 = sphi 0, %s89
      %s90 = sphi 0, %s87
      %s91 = sphi 0, %s90
      %s107 = sphi 0, %s91
      %s113 = sphi 0, %s115
      %s116 = sphi 0, %s113
      %s117 = sphi 0, %s116
      %s133 = sphi 0, %s117
      %s137 = sphi 0, %s137
      %s139 = sphi 0, %s137
      %s140 = sphi 0, %s139
      %s154 = sphi 0, %s140
      %s158 = sphi 0, %s158
      %s160 = sphi 0, %s158
      %s161 = sphi 0, %s160
      %s175 = sphi 0, %s161
      %s179 = sphi 0, %s179
      %s181 = sphi 0, %s179
      %s182 = sphi 0, %s181
      %s196 = sphi 0, %s182
      %s202 = sphi 0, %s204
      %s205 = sphi 0, %s202
      %s206 = sphi 0, %s205
      %s222 = sphi 0, %s206
    $region4: #{_lambda_.8} parent=1 // loop_header_branch
      %16 = sbr.rel (%p14) target = $region8
    $region5: #{_lambda_.8} parent=1 // loop_body
      %s18 = ssub.s32 %s13, 1
      %s19 = ssub.s32 %s13, 2
      %s26 = sadd.s32 1, %s21
      %p27 = scmp.ge.s32.totalorder %s26, 4
      %s28 = scalar_select %p27, 0, %s26
      %s29 = sadd.s32 1, %s20
      %s30 = scalar_select %p27, %s29, %s20
      %p31 = scmp.ge.s32.totalorder %s30, 2
      %s32 = scalar_select %p31, 0, %s30
      %s33 = ssub.s32 %s20, %s32
      %p34 = scmp.eq.s32.totalorder %s33, 0
      %s36 = sadd.s32 %s35, 1
      %s37 = scalar_select %p34, %s35, %s36
      %p40 = pneg %p34
      %p41 = scmp.eq.s32.totalorder %s13, 7
      %p42 = por %p40, %p41
      %p43 = scmp.ne.s32.totalorder %s35, %s38
      %p44 = scmp.eq.s32.totalorder %s13, 0
      %p45 = por %p43, %p44
      %p46 = scmp.ne.s32.totalorder %s35, %s38
      %p47 = scmp.eq.s32.totalorder %s18, 7
      %p48 = por %p46, %p47
      %p49 = scmp.ne.s32.totalorder %s38, %s39
      %p50 = scmp.eq.s32.totalorder %s18, 0
      %p51 = por %p49, %p50
      %p52 = scmp.ne.s32.totalorder %s38, %s39
      %p53 = scmp.eq.s32.totalorder %s19, 7
      %p54 = por %p52, %p53
      %p56 = scmp.ne.s32.totalorder %s39, %s55
      %p57 = scmp.eq.s32.totalorder %s19, 0
      %p58 = por %p56, %p57
      %s59 = ssub.s32 %s21, %s28
      %p60 = scmp.eq.s32.totalorder %s59, 0
      %s62 = sadd.s32 %s61, 1
      %s63 = scalar_select %p60, %s61, %s62
      %p66 = pneg %p60
      %p67 = scmp.eq.s32.totalorder %s13, 7
      %p68 = por %p66, %p67
      %p69 = scmp.ne.s32.totalorder %s61, %s64
      %p70 = scmp.eq.s32.totalorder %s13, 0
      %p71 = por %p69, %p70
      %p72 = scmp.ne.s32.totalorder %s61, %s64
      %p73 = scmp.eq.s32.totalorder %s18, 7
      %p74 = por %p72, %p73
      %p75 = scmp.ne.s32.totalorder %s64, %s65
      %p76 = scmp.eq.s32.totalorder %s18, 0
      %p77 = por %p75, %p76
      %p78 = scmp.ne.s32.totalorder %s64, %s65
      %p79 = scmp.eq.s32.totalorder %s19, 7
      %p80 = por %p78, %p79
      %p82 = scmp.ne.s32.totalorder %s65, %s81
      %p83 = scmp.eq.s32.totalorder %s19, 0
      %p84 = por %p82, %p83
      %s85 = ssub.s32 %s21, %s28
      %p86 = scmp.eq.s32.totalorder %s85, 0
      %s88 = sadd.s32 %s87, 1
      %s89 = scalar_select %p86, %s87, %s88
      %p92 = pneg %p86
      %p93 = scmp.eq.s32.totalorder %s13, 7
      %p94 = por %p92, %p93
      %p95 = scmp.ne.s32.totalorder %s87, %s90
      %p96 = scmp.eq.s32.totalorder %s13, 0
      %p97 = por %p95, %p96
      %p98 = scmp.ne.s32.totalorder %s87, %s90
      %p99 = scmp.eq.s32.totalorder %s18, 7
      %p100 = por %p98, %p99
      %p101 = scmp.ne.s32.totalorder %s90, %s91
      %p102 = scmp.eq.s32.totalorder %s18, 0
      %p103 = por %p101, %p102
      %p104 = scmp.ne.s32.totalorder %s90, %s91
      %p105 = scmp.eq.s32.totalorder %s19, 7
      %p106 = por %p104, %p105
      %p108 = scmp.ne.s32.totalorder %s91, %s107
      %p109 = scmp.eq.s32.totalorder %s19, 0
      %p110 = por %p108, %p109
      %s111 = ssub.s32 %s21, %s28
      %p112 = scmp.eq.s32.totalorder %s111, 0
      %s114 = sadd.s32 %s113, 1
      %s115 = scalar_select %p112, %s113, %s114
      %p118 = pneg %p112
      %p119 = scmp.eq.s32.totalorder %s13, 7
      %p120 = por %p118, %p119
      %p121 = scmp.ne.s32.totalorder %s113, %s116
      %p122 = scmp.eq.s32.totalorder %s13, 0
      %p123 = por %p121, %p122
      %p124 = scmp.ne.s32.totalorder %s113, %s116
      %p125 = scmp.eq.s32.totalorder %s18, 7
      %p126 = por %p124, %p125
      %p127 = scmp.ne.s32.totalorder %s116, %s117
      %p128 = scmp.eq.s32.totalorder %s18, 0
      %p129 = por %p127, %p128
      %p130 = scmp.ne.s32.totalorder %s116, %s117
      %p131 = scmp.eq.s32.totalorder %s19, 7
      %p132 = por %p130, %p131
      %p134 = scmp.ne.s32.totalorder %s117, %s133
      %p135 = scmp.eq.s32.totalorder %s19, 0
      %p136 = por %p134, %p135
      %s138 = sadd.s32 %s137, 1
      %p141 = scmp.eq.s32.totalorder %s13, 7
      %p142 = scmp.ne.s32.totalorder %s137, %s139
      %p143 = scmp.eq.s32.totalorder %s13, 0
      %p144 = por %p142, %p143
      %p145 = scmp.ne.s32.totalorder %s137, %s139
      %p146 = scmp.eq.s32.totalorder %s18, 7
      %p147 = por %p145, %p146
      %p148 = scmp.ne.s32.totalorder %s139, %s140
      %p149 = scmp.eq.s32.totalorder %s18, 0
      %p150 = por %p148, %p149
      %p151 = scmp.ne.s32.totalorder %s139, %s140
      %p152 = scmp.eq.s32.totalorder %s19, 7
      %p153 = por %p151, %p152
      %p155 = scmp.ne.s32.totalorder %s140, %s154
      %p156 = scmp.eq.s32.totalorder %s19, 0
      %p157 = por %p155, %p156
      %s159 = sadd.s32 %s158, 1
      %p162 = scmp.eq.s32.totalorder %s13, 7
      %p163 = scmp.ne.s32.totalorder %s158, %s160
      %p164 = scmp.eq.s32.totalorder %s13, 0
      %p165 = por %p163, %p164
      %p166 = scmp.ne.s32.totalorder %s158, %s160
      %p167 = scmp.eq.s32.totalorder %s18, 7
      %p168 = por %p166, %p167
      %p169 = scmp.ne.s32.totalorder %s160, %s161
      %p170 = scmp.eq.s32.totalorder %s18, 0
      %p171 = por %p169, %p170
      %p172 = scmp.ne.s32.totalorder %s160, %s161
      %p173 = scmp.eq.s32.totalorder %s19, 7
      %p174 = por %p172, %p173
      %p176 = scmp.ne.s32.totalorder %s161, %s175
      %p177 = scmp.eq.s32.totalorder %s19, 0
      %p178 = por %p176, %p177
      %s180 = sadd.s32 %s179, 1
      %p183 = scmp.eq.s32.totalorder %s13, 7
      %p184 = scmp.ne.s32.totalorder %s179, %s181
      %p185 = scmp.eq.s32.totalorder %s13, 0
      %p186 = por %p184, %p185
      %p187 = scmp.ne.s32.totalorder %s179, %s181
      %p188 = scmp.eq.s32.totalorder %s18, 7
      %p189 = por %p187, %p188
      %p190 = scmp.ne.s32.totalorder %s181, %s182
      %p191 = scmp.eq.s32.totalorder %s18, 0
      %p192 = por %p190, %p191
      %p193 = scmp.ne.s32.totalorder %s181, %s182
      %p194 = scmp.eq.s32.totalorder %s19, 7
      %p195 = por %p193, %p194
      %p197 = scmp.ne.s32.totalorder %s182, %s196
      %p198 = scmp.eq.s32.totalorder %s19, 0
      %p199 = por %p197, %p198
      %s200 = ssub.s32 %s20, %s32
      %p201 = scmp.eq.s32.totalorder %s200, 0
      %s203 = sadd.s32 %s202, 1
      %s204 = scalar_select %p201, %s202, %s203
      %p207 = pneg %p201
      %p208 = scmp.eq.s32.totalorder %s13, 7
      %p209 = por %p207, %p208
      %p210 = scmp.ne.s32.totalorder %s202, %s205
      %p211 = scmp.eq.s32.totalorder %s13, 0
      %p212 = por %p210, %p211
      %p213 = scmp.ne.s32.totalorder %s202, %s205
      %p214 = scmp.eq.s32.totalorder %s18, 7
      %p215 = por %p213, %p214
      %p216 = scmp.ne.s32.totalorder %s205, %s206
      %p217 = scmp.eq.s32.totalorder %s18, 0
      %p218 = por %p216, %p217
      %p219 = scmp.ne.s32.totalorder %s205, %s206
      %p220 = scmp.eq.s32.totalorder %s19, 7
      %p221 = por %p219, %p220
      %p223 = scmp.ne.s32.totalorder %s206, %s222
      %p224 = scmp.eq.s32.totalorder %s19, 0
      %p225 = por %p223, %p224
      %p226 = scmp.le.s32.totalorder 1, %s13
      %p227 = scmp.lt.s32.totalorder %s13, 9
      %p228 = pnand %p226, %p227
      %p229 = pneg %p228
      // Predicated region
      $region9: #{_lambda_.8} parent=5 // pred_check
        _
      $region10: #{_lambda_.8} parent=5 // pred_check_branch
        %231 = sbr.rel (%p228) target = $region12
      $region11: #{_lambda_.8} parent=5 // pred_region
        %s232 = ssub.s32 %s13, 1
        // Predicated region
        $region13: #{_lambda_.8} parent=11 // pred_check
          %p233 = pneg %p150
        $region14: #{_lambda_.8} parent=11 // pred_check_branch
          %235 = sbr.rel (%p233) target = $region16
        $region15: #{_lambda_.8} parent=11 // pred_region
          _
        $region16: #{_lambda_.8} parent=11 // pred_fallthru
          _
        // Predicated region
        $region17: #{_lambda_.8} parent=11 // pred_check
          %p236 = pneg %p171
        $region18: #{_lambda_.8} parent=11 // pred_check_branch
          %238 = sbr.rel (%p236) target = $region20
        $region19: #{_lambda_.8} parent=11 // pred_region
          _
        $region20: #{_lambda_.8} parent=11 // pred_fallthru
          _
        // Predicated region
        $region21: #{_lambda_.8} parent=11 // pred_check
          %p239 = pneg %p192
        $region22: #{_lambda_.8} parent=11 // pred_check_branch
          %241 = sbr.rel (%p239) target = $region24
        $region23: #{_lambda_.8} parent=11 // pred_region
          _
        $region24: #{_lambda_.8} parent=11 // pred_fallthru
          _
      $region12: #{_lambda_.8} parent=5 // pred_fallthru
        _
      %p242 = scmp.lt.s32.totalorder %s13, 8
      // Predicated region
      $region25: #{_lambda_.8} parent=5 // pred_check
        %p243 = pneg %p242
      $region26: #{_lambda_.8} parent=5 // pred_check_branch
        %245 = sbr.rel (%p243) target = $region28
      $region27: #{_lambda_.8} parent=5 // pred_region
        // Predicated region
        $region29: #{_lambda_.8} parent=27 // pred_check
          %p246 = pneg %p45
        $region30: #{_lambda_.8} parent=27 // pred_check_branch
          %248 = sbr.rel (%p246) target = $region32
        $region31: #{_lambda_.8} parent=27 // pred_region
          %p249 = scmp.lt.s32.totalorder %s20, 1
          %s250 = scalar_select %p249, %s20, 1
          %s251 = smul.addr %s250, 8
          %s252 = scalar_lea.vmem %s0, %s251
        $region32: #{_lambda_.8} parent=27 // pred_fallthru
          _
        // Predicated region
        $region33: #{_lambda_.8} parent=27 // pred_check
          %p253 = pneg %p71
        $region34: #{_lambda_.8} parent=27 // pred_check_branch
          %255 = sbr.rel (%p253) target = $region36
        $region35: #{_lambda_.8} parent=27 // pred_region
          %s256 = sand.u32 %s61, 1
          %s257 = sand.u32 %s61, 1
          %s258 = smul.addr %s257, 128
          %s259 = scalar_lea.vmem [#allocation3], %s258
          %s260 = smul.u32 4, %s21
          %s261 = smul.addr %s260, 8
          %s262 = scalar_lea.vmem %s1, %s261
          // Predicated region
          $region37: #{_lambda_.8} parent=35 // pred_check
            _
          $region38: #{_lambda_.8} parent=35 // pred_check_branch
            %264 = sbr.rel (0) target = $region40
          $region39: #{_lambda_.8} parent=35 // pred_region
            // Predicated region
            $region41: #{_lambda_.8} parent=39 // pred_check
              _
            $region42: #{_lambda_.8} parent=39 // pred_check_branch
              %266 = sbr.rel (0) target = $region44
            $region43: #{_lambda_.8} parent=39 // pred_region
              loop: start=0, step=1, limit=1
              $region45: #{_lambda_.8} parent=43 // loop_pre_header
                _
              $region46: #{_lambda_.8} parent=43 // loop_header
                %s268 = sphi 0, %s272
                %p269 = scmp.ge.s32.totalorder %s268, 1
                %s273 = sphi %s262, %s262
                %s274 = sphi %s259, %s259
              $region47: #{_lambda_.8} parent=43 // loop_header_branch
                %271 = sbr.rel (%p269) target = $region51
              $region48: #{_lambda_.8} parent=43 // loop_body
                %v275 = vld [vmem:[%s273] sm:$0xff]
                %276 = vst [vmem:[%s274] sm:$0xff] %v275
                %v277 = vld [vmem:[%s273 + $0x8] sm:$0xff]
                %278 = vst [vmem:[%s274 + $0x8] sm:$0xff] %v277
                %v279 = vld [vmem:[%s273 + $0x10] sm:$0xff]
                %280 = vst [vmem:[%s274 + $0x10] sm:$0xff] %v279
                %v281 = vld [vmem:[%s273 + $0x18] sm:$0xff]
                %282 = vst [vmem:[%s274 + $0x18] sm:$0xff] %v281
                %v283 = vld [vmem:[%s273 + $0x80] sm:$0xff]
                %284 = vst [vmem:[%s274 + $0x20] sm:$0xff] %v283
                %v285 = vld [vmem:[%s273 + $0x88] sm:$0xff]
                %286 = vst [vmem:[%s274 + $0x28] sm:$0xff] %v285
                %v287 = vld [vmem:[%s273 + $0x90] sm:$0xff]
                %288 = vst [vmem:[%s274 + $0x30] sm:$0xff] %v287
                %v289 = vld [vmem:[%s273 + $0x98] sm:$0xff]
                %290 = vst [vmem:[%s274 + $0x38] sm:$0xff] %v289
                %v291 = vld [vmem:[%s273 + $0x100] sm:$0xff]
                %292 = vst [vmem:[%s274 + $0x40] sm:$0xff] %v291
                %v293 = vld [vmem:[%s273 + $0x108] sm:$0xff]
                %294 = vst [vmem:[%s274 + $0x48] sm:$0xff] %v293
                %v295 = vld [vmem:[%s273 + $0x110] sm:$0xff]
                %296 = vst [vmem:[%s274 + $0x50] sm:$0xff] %v295
                %v297 = vld [vmem:[%s273 + $0x118] sm:$0xff]
                %298 = vst [vmem:[%s274 + $0x58] sm:$0xff] %v297
                %v299 = vld [vmem:[%s273 + $0x180] sm:$0xff]
                %300 = vst [vmem:[%s274 + $0x60] sm:$0xff] %v299
                %v301 = vld [vmem:[%s273 + $0x188] sm:$0xff]
                %302 = vst [vmem:[%s274 + $0x68] sm:$0xff] %v301
                %v303 = vld [vmem:[%s273 + $0x190] sm:$0xff]
                %304 = vst [vmem:[%s274 + $0x70] sm:$0xff] %v303
                %v305 = vld [vmem:[%s273 + $0x198] sm:$0xff]
                %306 = vst [vmem:[%s274 + $0x78] sm:$0xff] %v305
              $region49: #{_lambda_.8} parent=43 // loop_footer
                %s272 = sadd.s32 1, %s268
              $region50: #{_lambda_.8} parent=43 // loop_footer_branch
                %267 = sbr.rel target = $region46
              $region51: #{_lambda_.8} parent=43 // loop_exit
                _
            $region44: #{_lambda_.8} parent=39 // pred_fallthru
              _
            // Predicated region
            $region52: #{_lambda_.8} parent=39 // pred_check
              _
            $region53: #{_lambda_.8} parent=39 // pred_check_branch
              %308 = sbr.rel target = $region55
            $region54: #{_lambda_.8} parent=39 // pred_region
              _
            $region55: #{_lambda_.8} parent=39 // pred_fallthru
              _
          $region40: #{_lambda_.8} parent=35 // pred_fallthru
            _
          %309 = vnop
        $region36: #{_lambda_.8} parent=27 // pred_fallthru
          _
        // Predicated region
        $region56: #{_lambda_.8} parent=27 // pred_check
          %p310 = pneg %p97
        $region57: #{_lambda_.8} parent=27 // pred_check_branch
          %312 = sbr.rel (%p310) target = $region59
        $region58: #{_lambda_.8} parent=27 // pred_region
          %s313 = smul.u32 4, %s21
          %p314 = scmp.lt.s32.totalorder %s313, 15
          %s315 = scalar_select %p314, %s313, 15
          %s316 = scalar_lea.vmem %s2, %s315
          %s317 = smul.u32 4, %s21
        $region59: #{_lambda_.8} parent=27 // pred_fallthru
          _
        // Predicated region
        $region60: #{_lambda_.8} parent=27 // pred_check
          %p318 = pneg %p123
        $region61: #{_lambda_.8} parent=27 // pred_check_branch
          %320 = sbr.rel (%p318) target = $region63
        $region62: #{_lambda_.8} parent=27 // pred_region
          %s321 = smul.u32 64, %s21
          %p322 = scmp.lt.s32.totalorder %s321, 255
          %s323 = scalar_select %p322, %s321, 255
          %s324 = smul.addr %s323, 8
          %s325 = scalar_lea.vmem %s3, %s324
          %s326 = smul.u32 64, %s21
        $region63: #{_lambda_.8} parent=27 // pred_fallthru
          _
      $region28: #{_lambda_.8} parent=5 // pred_fallthru
        _
      %p327 = scmp.le.s32.totalorder 1, %s13
      %p328 = scmp.lt.s32.totalorder %s13, 9
      %p329 = pnand %p327, %p328
      %p330 = pneg %p329
      // Predicated region
      $region64: #{_lambda_.8} parent=5 // pred_check
        _
      $region65: #{_lambda_.8} parent=5 // pred_check_branch
        %332 = sbr.rel (%p329) target = $region67
      $region66: #{_lambda_.8} parent=5 // pred_region
        %s333 = ssub.s32 %s13, 1
        %s334 = sand.u32 %s64, 1
        %s335 = sand.u32 %s64, 1
        %s336 = smul.addr %s335, 128
        %s337 = scalar_lea.vmem [#allocation3], %s336
        // Predicated region
        $region68: #{_lambda_.8} parent=66 // pred_check
          %p338 = pneg %p77
        $region69: #{_lambda_.8} parent=66 // pred_check_branch
          %340 = sbr.rel (%p338) target = $region71
        $region70: #{_lambda_.8} parent=66 // pred_region
          _
        $region71: #{_lambda_.8} parent=66 // pred_fallthru
          _
        %p341 = scmp.lt.s32.totalorder %s22, 1
        %s342 = scalar_select %p341, %s22, 1
        %s343 = smul.addr %s342, 8
        %s344 = scalar_lea.vmem %s0, %s343
        %p345 = pneg %p51
        %p346 = pneg %p48
        %s347 = sand.u32 %s64, 1
        %s348 = sand.u32 %s64, 1
        %s349 = smul.addr %s348, 128
        %s350 = scalar_lea.vmem [#allocation3], %s349
        %p351 = pneg %p77
        %p352 = pneg %p74
        %s353 = smul.u32 4, %s23
        %p354 = scmp.lt.s32.totalorder %s353, 15
        %s355 = scalar_select %p354, %s353, 15
        %s356 = scalar_lea.vmem %s2, %s355
        %p357 = pneg %p103
        %p358 = pneg %p100
        %s359 = smul.u32 64, %s23
        %p360 = scmp.lt.s32.totalorder %s359, 255
        %s361 = scalar_select %p360, %s359, 255
        %s362 = smul.addr %s361, 8
        %s363 = scalar_lea.vmem %s3, %s362
        %p364 = pneg %p129
        %p365 = pneg %p126
        %p366 = pneg %p150
        %p367 = pneg %p147
        %p368 = pneg %p171
        %p369 = pneg %p168
        %p370 = pneg %p192
        %p371 = pneg %p189
        %p372 = pneg %p218
        %p373 = pneg %p215
        %p374 = scmp.lt.s32.totalorder %s22, 1
        %s375 = scalar_select %p374, %s22, 1
        %s376 = smul.addr %s375, 8
        %s377 = scalar_lea.vmem %s7, %s376
        %p378 = scmp.lt.s32.totalorder %s22, 1
        %s379 = scalar_select %p378, %s22, 1
        %s380 = smul.addr %s379, 8
        %s381 = scalar_lea.vmem %s0, %s380
        %s382 = smul.u32 4, %s23
        %s383 = smul.u32 4, %s23
        %p384 = scmp.lt.s32.totalorder %s383, 15
        %s385 = scalar_select %p384, %s383, 15
        %s386 = scalar_lea.vmem %s2, %s385
        %s387 = smul.u32 4, %s23
        %s388 = smul.u32 64, %s23
        %p389 = scmp.lt.s32.totalorder %s388, 255
        %s390 = scalar_select %p389, %s388, 255
        %s391 = smul.addr %s390, 8
        %s392 = scalar_lea.vmem %s3, %s391
        %s393 = smul.u32 64, %s23
        %p394 = scmp.lt.s32.totalorder %s22, 1
        %s395 = scalar_select %p394, %s22, 1
        %s396 = smul.addr %s395, 8
        %s397 = scalar_lea.vmem %s7, %s396
        %p398 = scmp.eq.s32.totalorder %s23, 0
        // Predicated region
        $region72: #{_lambda_.8} parent=66 // pred_check
          %p399 = pneg %p398
        $region73: #{_lambda_.8} parent=66 // pred_check_branch
          %401 = sbr.rel (%p399) target = $region75
        $region74: #{_lambda_.8} parent=66 // pred_region
          %vm402 = vcmask 261120
          %403 = vst.msk [vmem:[#allocation2] sm:$0xff] %vm402, 0.0
        $region75: #{_lambda_.8} parent=66 // pred_fallthru
          _
        %v404 = vld [vmem:[%s381] sm:$0xff]
        %v405 = vld [vmem:[%s337] sm:$0xff]
        %v406 = vld [vmem:[%s337 + $0x8] sm:$0xff]
        %v407 = vld [vmem:[%s337 + $0x10] sm:$0xff]
        %v408 = vld [vmem:[%s337 + $0x18] sm:$0xff]
        %v409 = vld [vmem:[%s337 + $0x20] sm:$0xff]
        %v410 = vld [vmem:[%s337 + $0x28] sm:$0xff]
        %v411 = vld [vmem:[%s337 + $0x30] sm:$0xff]
        %v412 = vld [vmem:[%s337 + $0x38] sm:$0xff]
        %v413 = vld [vmem:[%s337 + $0x40] sm:$0xff]
        %v414 = vld [vmem:[%s337 + $0x48] sm:$0xff]
        %v415 = vld [vmem:[%s337 + $0x50] sm:$0xff]
        %v416 = vld [vmem:[%s337 + $0x58] sm:$0xff]
        %v417 = vld [vmem:[%s337 + $0x60] sm:$0xff]
        %v418 = vld [vmem:[%s337 + $0x68] sm:$0xff]
        %v419 = vld [vmem:[%s337 + $0x70] sm:$0xff]
        %v420 = vld [vmem:[%s337 + $0x78] sm:$0xff]
        %v421 = vld [vmem:[%s386] sm:$0xf]
        %v423 = vlaneseq
        %v424 = vshrl.u32 %v423, 7
        %v425 = vsub.s32 0, %v424
        %v426 = vrot.slane %v421, %v425
        %v427 = vlaneseq
        %v428 = vshrl.u32 %v427, 7
        %v429 = vsub.s32 1, %v428
        %v430 = vrot.slane %v421, %v429
        %v431 = vlaneseq
        %v432 = vshrl.u32 %v431, 7
        %v433 = vsub.s32 2, %v432
        %v434 = vrot.slane %v421, %v433
        %v435 = vlaneseq
        %v436 = vshrl.u32 %v435, 7
        %v437 = vsub.s32 3, %v436
        %v438 = vrot.slane %v421, %v437
        %vm443 = vcmask 261120
        %v445 = vsel %vm443, %v404, 0
        %447 = vmatprep.subr.mxu0 %v406
        %448 = vmatpush1.msra.mxu0 %v405
        %449 = vmatprep.subr.mxu0 %v410
        %450 = vmatpush1.msra.mxu0 %v409
        %451 = vmatprep.subr.mxu0 %v414
        %452 = vmatpush1.msra.mxu0 %v413
        %453 = vmatprep.subr.mxu0 %v418
        %454 = vmatpush1.msra.mxu0 %v417
        %455 = vmatprep.subr.mxu0 0.0
        %456 = vmatpush1.msra.mxu0 0.0
        %457 = vmatprep.subr.mxu0 0.0
        %458 = vmatpush1.msra.mxu0 0.0
        %459 = vmatprep.subr.mxu0 0.0
        %460 = vmatpush1.msra.mxu0 0.0
        %461 = vmatprep.subr.mxu0 0.0
        %462 = vmatpush1.msra.mxu0 0.0
        %463 = vmatprep.subr.mxu0 0.0
        %464 = vmatpush1.msra.mxu0 0.0
        %465 = vmatprep.subr.mxu0 0.0
        %466 = vmatpush1.msra.mxu0 0.0
        %467 = vmatprep.subr.mxu0 0.0
        %468 = vmatpush1.msra.mxu0 0.0
        %469 = vmatprep.subr.mxu0 0.0
        %470 = vmatpush1.msra.mxu0 0.0
        %471 = vmatprep.subr.mxu0 0.0
        %472 = vmatpush1.msra.mxu0 0.0
        %473 = vmatprep.subr.mxu0 0.0
        %474 = vmatpush1.msra.mxu0 0.0
        %475 = vmatprep.subr.mxu0 0.0
        %476 = vmatpush1.msra.mxu0 0.0
        %477 = vmatprep.subr.mxu0 0.0
        %478 = vmatpush1.msra.mxu0 0.0
        %479 = vmatprep.subr.mxu0 0.0
        %480 = vmatpush1.msra.mxu0 0.0
        %481 = vmatprep.subr.mxu0 0.0
        %482 = vmatpush1.msra.mxu0 0.0
        %483 = vmatprep.subr.mxu0 0.0
        %484 = vmatpush1.msra.mxu0 0.0
        %485 = vmatprep.subr.mxu0 0.0
        %486 = vmatpush1.msra.mxu0 0.0
        %487 = vmatprep.subr.mxu0 0.0
        %488 = vmatpush1.msra.mxu0 0.0
        %489 = vmatprep.subr.mxu0 0.0
        %490 = vmatpush1.msra.mxu0 0.0
        %491 = vmatprep.subr.mxu0 0.0
        %492 = vmatpush1.msra.mxu0 0.0
        %493 = vmatprep.subr.mxu0 0.0
        %494 = vmatpush1.msra.mxu0 0.0
        %495 = vmatprep.subr.mxu0 0.0
        %496 = vmatpush1.msra.mxu0 0.0
        %497 = vmatprep.subr.mxu0 0.0
        %498 = vmatpush1.msra.mxu0 0.0
        %499 = vmatprep.subr.mxu0 0.0
        %500 = vmatpush1.msra.mxu0 0.0
        %501 = vmatprep.subr.mxu0 0.0
        %502 = vmatpush1.msra.mxu0 0.0
        %503 = vmatprep.subr.mxu0 0.0
        %504 = vmatpush1.msra.mxu0 0.0
        %505 = vmatprep.subr.mxu0 0.0
        %506 = vmatpush1.msra.mxu0 0.0
        %507 = vmatprep.subr.mxu0 0.0
        %508 = vmatpush1.msra.mxu0 0.0
        %509 = vmatprep.subr.mxu0 0.0
        %510 = vmatpush1.msra.mxu0 0.0
        %511 = vmatprep.mubr.f32.mxu0 0.0
        %512 = vmatmul.mubr.f32.gmra.mrb[0].mxu0 %v445
        %v513 = vpop.f32.mrb[0].mxu0
        %v514 = vadd.f32 %v426, %v513
        %v515 = vpop.f32.mrb[0].mxu0
        %v516 = vadd.f32 %v430, %v515
        %517 = vdwg.mxu0
        %518 = vmatprep.subr.mxu0 %v408
        %519 = vmatpush1.msra.mxu0 %v407
        %520 = vmatprep.subr.mxu0 %v412
        %521 = vmatpush1.msra.mxu0 %v411
        %522 = vmatprep.subr.mxu0 %v416
        %523 = vmatpush1.msra.mxu0 %v415
        %524 = vmatprep.subr.mxu0 %v420
        %525 = vmatpush1.msra.mxu0 %v419
        %526 = vmatprep.subr.mxu0 0.0
        %527 = vmatpush1.msra.mxu0 0.0
        %528 = vmatprep.subr.mxu0 0.0
        %529 = vmatpush1.msra.mxu0 0.0
        %530 = vmatprep.subr.mxu0 0.0
        %531 = vmatpush1.msra.mxu0 0.0
        %532 = vmatprep.subr.mxu0 0.0
        %533 = vmatpush1.msra.mxu0 0.0
        %534 = vmatprep.subr.mxu0 0.0
        %535 = vmatpush1.msra.mxu0 0.0
        %536 = vmatprep.subr.mxu0 0.0
        %537 = vmatpush1.msra.mxu0 0.0
        %538 = vmatprep.subr.mxu0 0.0
        %539 = vmatpush1.msra.mxu0 0.0
        %540 = vmatprep.subr.mxu0 0.0
        %541 = vmatpush1.msra.mxu0 0.0
        %542 = vmatprep.subr.mxu0 0.0
        %543 = vmatpush1.msra.mxu0 0.0
        %544 = vmatprep.subr.mxu0 0.0
        %545 = vmatpush1.msra.mxu0 0.0
        %546 = vmatprep.subr.mxu0 0.0
        %547 = vmatpush1.msra.mxu0 0.0
        %548 = vmatprep.subr.mxu0 0.0
        %549 = vmatpush1.msra.mxu0 0.0
        %550 = vmatprep.subr.mxu0 0.0
        %551 = vmatpush1.msra.mxu0 0.0
        %552 = vmatprep.subr.mxu0 0.0
        %553 = vmatpush1.msra.mxu0 0.0
        %554 = vmatprep.subr.mxu0 0.0
        %555 = vmatpush1.msra.mxu0 0.0
        %556 = vmatprep.subr.mxu0 0.0
        %557 = vmatpush1.msra.mxu0 0.0
        %558 = vmatprep.subr.mxu0 0.0
        %559 = vmatpush1.msra.mxu0 0.0
        %560 = vmatprep.subr.mxu0 0.0
        %561 = vmatpush1.msra.mxu0 0.0
        %562 = vmatprep.subr.mxu0 0.0
        %563 = vmatpush1.msra.mxu0 0.0
        %564 = vmatprep.subr.mxu0 0.0
        %565 = vmatpush1.msra.mxu0 0.0
        %566 = vmatprep.subr.mxu0 0.0
        %567 = vmatpush1.msra.mxu0 0.0
        %568 = vmatprep.subr.mxu0 0.0
        %569 = vmatpush1.msra.mxu0 0.0
        %570 = vmatprep.subr.mxu0 0.0
        %571 = vmatpush1.msra.mxu0 0.0
        %572 = vmatprep.subr.mxu0 0.0
        %573 = vmatpush1.msra.mxu0 0.0
        %574 = vmatprep.subr.mxu0 0.0
        %575 = vmatpush1.msra.mxu0 0.0
        %576 = vmatprep.subr.mxu0 0.0
        %577 = vmatpush1.msra.mxu0 0.0
        %578 = vmatprep.subr.mxu0 0.0
        %579 = vmatpush1.msra.mxu0 0.0
        %580 = vmatprep.subr.mxu0 0.0
        %581 = vmatpush1.msra.mxu0 0.0
        %582 = vmatprep.mubr.f32.mxu0 0.0
        %583 = vmatmul.mubr.f32.gmra.mrb[0].mxu0 %v445
        %v584 = vpop.f32.mrb[0].mxu0
        %v585 = vadd.f32 %v434, %v584
        %v586 = vpop.f32.mrb[0].mxu0
        %v587 = vadd.f32 %v438, %v586
        %588 = vdwg.mxu0
        %v589 = vmax.f32 %v514, 0.0
        %v590 = vmax.f32 %v516, 0.0
        %v591 = vmax.f32 %v585, 0.0
        %v592 = vmax.f32 %v587, 0.0
        %v593 = vld [vmem:[#allocation2] sm:$0xff]
        %v594 = vld [vmem:[%s392] sm:$0xff]
        %v595 = vld [vmem:[%s392 + $0x8] sm:$0xff]
        %v596 = vld [vmem:[%s392 + $0x10] sm:$0xff]
        %v597 = vld [vmem:[%s392 + $0x18] sm:$0xff]
        %v598 = vld [vmem:[%s392 + $0x20] sm:$0xff]
        %v599 = vld [vmem:[%s392 + $0x28] sm:$0xff]
        %v600 = vld [vmem:[%s392 + $0x30] sm:$0xff]
        %v601 = vld [vmem:[%s392 + $0x38] sm:$0xff]
        %v602 = vld [vmem:[%s392 + $0x40] sm:$0xff]
        %v603 = vld [vmem:[%s392 + $0x48] sm:$0xff]
        %v604 = vld [vmem:[%s392 + $0x50] sm:$0xff]
        %v605 = vld [vmem:[%s392 + $0x58] sm:$0xff]
        %v606 = vld [vmem:[%s392 + $0x60] sm:$0xff]
        %v607 = vld [vmem:[%s392 + $0x68] sm:$0xff]
        %v608 = vld [vmem:[%s392 + $0x70] sm:$0xff]
        %v609 = vld [vmem:[%s392 + $0x78] sm:$0xff]
        %v610 = vld [vmem:[%s392 + $0x80] sm:$0xff]
        %v611 = vld [vmem:[%s392 + $0x88] sm:$0xff]
        %v612 = vld [vmem:[%s392 + $0x90] sm:$0xff]
        %v613 = vld [vmem:[%s392 + $0x98] sm:$0xff]
        %v614 = vld [vmem:[%s392 + $0xa0] sm:$0xff]
        %v615 = vld [vmem:[%s392 + $0xa8] sm:$0xff]
        %v616 = vld [vmem:[%s392 + $0xb0] sm:$0xff]
        %v617 = vld [vmem:[%s392 + $0xb8] sm:$0xff]
        %v618 = vld [vmem:[%s392 + $0xc0] sm:$0xff]
        %v619 = vld [vmem:[%s392 + $0xc8] sm:$0xff]
        %v620 = vld [vmem:[%s392 + $0xd0] sm:$0xff]
        %v621 = vld [vmem:[%s392 + $0xd8] sm:$0xff]
        %v622 = vld [vmem:[%s392 + $0xe0] sm:$0xff]
        %v623 = vld [vmem:[%s392 + $0xe8] sm:$0xff]
        %v624 = vld [vmem:[%s392 + $0xf0] sm:$0xff]
        %v625 = vld [vmem:[%s392 + $0xf8] sm:$0xff]
        %v626 = vld [vmem:[%s392 + $0x100] sm:$0xff]
        %v627 = vld [vmem:[%s392 + $0x108] sm:$0xff]
        %v628 = vld [vmem:[%s392 + $0x110] sm:$0xff]
        %v629 = vld [vmem:[%s392 + $0x118] sm:$0xff]
        %v630 = vld [vmem:[%s392 + $0x120] sm:$0xff]
        %v631 = vld [vmem:[%s392 + $0x128] sm:$0xff]
        %v632 = vld [vmem:[%s392 + $0x130] sm:$0xff]
        %v633 = vld [vmem:[%s392 + $0x138] sm:$0xff]
        %v634 = vld [vmem:[%s392 + $0x140] sm:$0xff]
        %v635 = vld [vmem:[%s392 + $0x148] sm:$0xff]
        %v636 = vld [vmem:[%s392 + $0x150] sm:$0xff]
        %v637 = vld [vmem:[%s392 + $0x158] sm:$0xff]
        %v638 = vld [vmem:[%s392 + $0x160] sm:$0xff]
        %v639 = vld [vmem:[%s392 + $0x168] sm:$0xff]
        %v640 = vld [vmem:[%s392 + $0x170] sm:$0xff]
        %v641 = vld [vmem:[%s392 + $0x178] sm:$0xff]
        %v642 = vld [vmem:[%s392 + $0x180] sm:$0xff]
        %v643 = vld [vmem:[%s392 + $0x188] sm:$0xff]
        %v644 = vld [vmem:[%s392 + $0x190] sm:$0xff]
        %v645 = vld [vmem:[%s392 + $0x198] sm:$0xff]
        %v646 = vld [vmem:[%s392 + $0x1a0] sm:$0xff]
        %v647 = vld [vmem:[%s392 + $0x1a8] sm:$0xff]
        %v648 = vld [vmem:[%s392 + $0x1b0] sm:$0xff]
        %v649 = vld [vmem:[%s392 + $0x1b8] sm:$0xff]
        %v650 = vld [vmem:[%s392 + $0x1c0] sm:$0xff]
        %v651 = vld [vmem:[%s392 + $0x1c8] sm:$0xff]
        %v652 = vld [vmem:[%s392 + $0x1d0] sm:$0xff]
        %v653 = vld [vmem:[%s392 + $0x1d8] sm:$0xff]
        %v654 = vld [vmem:[%s392 + $0x1e0] sm:$0xff]
        %v655 = vld [vmem:[%s392 + $0x1e8] sm:$0xff]
        %v656 = vld [vmem:[%s392 + $0x1f0] sm:$0xff]
        %v657 = vld [vmem:[%s392 + $0x1f8] sm:$0xff]
        %658 = vmatprep.subr.mxu0 0.0
        %659 = vmatpush1.msra.mxu0 %v594
        %660 = vmatprep.subr.mxu0 0.0
        %661 = vmatpush1.msra.mxu0 %v595
        %662 = vmatprep.subr.mxu0 0.0
        %663 = vmatpush1.msra.mxu0 %v596
        %664 = vmatprep.subr.mxu0 0.0
        %665 = vmatpush1.msra.mxu0 %v597
        %666 = vmatprep.subr.mxu0 0.0
        %667 = vmatpush1.msra.mxu0 %v598
        %668 = vmatprep.subr.mxu0 0.0
        %669 = vmatpush1.msra.mxu0 %v599
        %670 = vmatprep.subr.mxu0 0.0
        %671 = vmatpush1.msra.mxu0 %v600
        %672 = vmatprep.subr.mxu0 0.0
        %673 = vmatpush1.msra.mxu0 %v601
        %674 = vmatprep.subr.mxu0 0.0
        %675 = vmatpush1.msra.mxu0 %v602
        %676 = vmatprep.subr.mxu0 0.0
        %677 = vmatpush1.msra.mxu0 %v603
        %678 = vmatprep.subr.mxu0 0.0
        %679 = vmatpush1.msra.mxu0 %v604
        %680 = vmatprep.subr.mxu0 0.0
        %681 = vmatpush1.msra.mxu0 %v605
        %682 = vmatprep.subr.mxu0 0.0
        %683 = vmatpush1.msra.mxu0 %v606
        %684 = vmatprep.subr.mxu0 0.0
        %685 = vmatpush1.msra.mxu0 %v607
        %686 = vmatprep.subr.mxu0 0.0
        %687 = vmatpush1.msra.mxu0 %v608
        %688 = vmatprep.subr.mxu0 0.0
        %689 = vmatpush1.msra.mxu0 %v609
        %690 = vmatprep.subr.mxu0 0.0
        %691 = vmatpush1.msra.mxu0 %v610
        %692 = vmatprep.subr.mxu0 0.0
        %693 = vmatpush1.msra.mxu0 %v611
        %694 = vmatprep.subr.mxu0 0.0
        %695 = vmatpush1.msra.mxu0 %v612
        %696 = vmatprep.subr.mxu0 0.0
        %697 = vmatpush1.msra.mxu0 %v613
        %698 = vmatprep.subr.mxu0 0.0
        %699 = vmatpush1.msra.mxu0 %v614
        %700 = vmatprep.subr.mxu0 0.0
        %701 = vmatpush1.msra.mxu0 %v615
        %702 = vmatprep.subr.mxu0 0.0
        %703 = vmatpush1.msra.mxu0 %v616
        %704 = vmatprep.subr.mxu0 0.0
        %705 = vmatpush1.msra.mxu0 %v617
        %706 = vmatprep.subr.mxu0 0.0
        %707 = vmatpush1.msra.mxu0 %v618
        %708 = vmatprep.subr.mxu0 0.0
        %709 = vmatpush1.msra.mxu0 %v619
        %710 = vmatprep.subr.mxu0 0.0
        %711 = vmatpush1.msra.mxu0 %v620
        %712 = vmatprep.subr.mxu0 0.0
        %713 = vmatpush1.msra.mxu0 %v621
        %714 = vmatprep.subr.mxu0 0.0
        %715 = vmatpush1.msra.mxu0 %v622
        %716 = vmatprep.subr.mxu0 0.0
        %717 = vmatpush1.msra.mxu0 %v623
        %718 = vmatprep.subr.mxu0 0.0
        %719 = vmatpush1.msra.mxu0 %v624
        %720 = vmatprep.subr.mxu0 0.0
        %721 = vmatpush1.msra.mxu0 %v625
        %722 = vmatprep.mubr.f32.mxu0 %v590
        %723 = vmatmul.mubr.f32.gmra.mrb[0].mxu0 %v589
        %v724 = vpop.f32.mrb[0].mxu0
        %v725 = vadd.f32 0.0, %v724
        %v726 = vpop.f32.mrb[0].mxu0
        %727 = vdwg.mxu0
        %728 = vmatprep.subr.mxu0 0.0
        %729 = vmatpush1.msra.mxu0 %v626
        %730 = vmatprep.subr.mxu0 0.0
        %731 = vmatpush1.msra.mxu0 %v627
        %732 = vmatprep.subr.mxu0 0.0
        %733 = vmatpush1.msra.mxu0 %v628
        %734 = vmatprep.subr.mxu0 0.0
        %735 = vmatpush1.msra.mxu0 %v629
        %736 = vmatprep.subr.mxu0 0.0
        %737 = vmatpush1.msra.mxu0 %v630
        %738 = vmatprep.subr.mxu0 0.0
        %739 = vmatpush1.msra.mxu0 %v631
        %740 = vmatprep.subr.mxu0 0.0
        %741 = vmatpush1.msra.mxu0 %v632
        %742 = vmatprep.subr.mxu0 0.0
        %743 = vmatpush1.msra.mxu0 %v633
        %744 = vmatprep.subr.mxu0 0.0
        %745 = vmatpush1.msra.mxu0 %v634
        %746 = vmatprep.subr.mxu0 0.0
        %747 = vmatpush1.msra.mxu0 %v635
        %748 = vmatprep.subr.mxu0 0.0
        %749 = vmatpush1.msra.mxu0 %v636
        %750 = vmatprep.subr.mxu0 0.0
        %751 = vmatpush1.msra.mxu0 %v637
        %752 = vmatprep.subr.mxu0 0.0
        %753 = vmatpush1.msra.mxu0 %v638
        %754 = vmatprep.subr.mxu0 0.0
        %755 = vmatpush1.msra.mxu0 %v639
        %756 = vmatprep.subr.mxu0 0.0
        %757 = vmatpush1.msra.mxu0 %v640
        %758 = vmatprep.subr.mxu0 0.0
        %759 = vmatpush1.msra.mxu0 %v641
        %760 = vmatprep.subr.mxu0 0.0
        %761 = vmatpush1.msra.mxu0 %v642
        %762 = vmatprep.subr.mxu0 0.0
        %763 = vmatpush1.msra.mxu0 %v643
        %764 = vmatprep.subr.mxu0 0.0
        %765 = vmatpush1.msra.mxu0 %v644
        %766 = vmatprep.subr.mxu0 0.0
        %767 = vmatpush1.msra.mxu0 %v645
        %768 = vmatprep.subr.mxu0 0.0
        %769 = vmatpush1.msra.mxu0 %v646
        %770 = vmatprep.subr.mxu0 0.0
        %771 = vmatpush1.msra.mxu0 %v647
        %772 = vmatprep.subr.mxu0 0.0
        %773 = vmatpush1.msra.mxu0 %v648
        %774 = vmatprep.subr.mxu0 0.0
        %775 = vmatpush1.msra.mxu0 %v649
        %776 = vmatprep.subr.mxu0 0.0
        %777 = vmatpush1.msra.mxu0 %v650
        %778 = vmatprep.subr.mxu0 0.0
        %779 = vmatpush1.msra.mxu0 %v651
        %780 = vmatprep.subr.mxu0 0.0
        %781 = vmatpush1.msra.mxu0 %v652
        %782 = vmatprep.subr.mxu0 0.0
        %783 = vmatpush1.msra.mxu0 %v653
        %784 = vmatprep.subr.mxu0 0.0
        %785 = vmatpush1.msra.mxu0 %v654
        %786 = vmatprep.subr.mxu0 0.0
        %787 = vmatpush1.msra.mxu0 %v655
        %788 = vmatprep.subr.mxu0 0.0
        %789 = vmatpush1.msra.mxu0 %v656
        %790 = vmatprep.subr.mxu0 0.0
        %791 = vmatpush1.msra.mxu0 %v657
        %792 = vmatprep.mubr.f32.mxu0 %v592
        %793 = vmatmul.mubr.f32.gmra.mrb[0].mxu0 %v591
        %v794 = vpop.f32.mrb[0].mxu0
        %v795 = vadd.f32 %v725, %v794
        %v796 = vpop.f32.mrb[0].mxu0
        %797 = vdwg.mxu0
        %v798 = vadd.f32 %v593, %v795
        %799 = vst.msk [vmem:[#allocation2] sm:$0xff] %vm443, %v798
        %p800 = scmp.eq.s32.totalorder %s23, 3
        // Predicated region
        $region76: #{_lambda_.8} parent=66 // pred_check
          %p801 = pneg %p800
        $region77: #{_lambda_.8} parent=66 // pred_check_branch
          %803 = sbr.rel (%p801) target = $region79
        $region78: #{_lambda_.8} parent=66 // pred_region
          %v804 = vld [vmem:[#allocation2] sm:$0xff]
          %v805 = vadd.f32 %v404, %v804
          %v806 = vld [vmem:[%s4] sm:$0x1]
          %v808 = vlaneseq
          %v809 = vshrl.u32 %v808, 7
          %v810 = vsub.s32 0, %v809
          %v811 = vrot.slane %v806, %v810
          %v813 = vadd.f32 %v805, %v811
          %v814 = vsel %vm443, %v813, 0.0
          %815 = vadd.xlane.f32.xlu0 %v814
          %v816 = vpop.xlane.xlu0 %815
          %v817 = vrcp.pop 32.0
          %v818 = vmul.f32 %v816, %v817
          %v819 = vsub.f32 %v813, %v818
          %v820 = vmul.f32 %v819, %v819
          %v821 = vsel %vm443, %v820, 0.0
          %822 = vadd.xlane.f32.xlu0 %v821
          %v823 = vpop.xlane.xlu0 %822
          %v824 = vmul.f32 %v823, %v817
          %v825 = vadd.f32 %v824, 1e-05
          %v826 = vrsqrt.pop %v825
          %v827 = vmul.f32 %v819, %v826
          %v828 = vld [vmem:[%s5] sm:$0x1]
          %v830 = vlaneseq
          %v831 = vshrl.u32 %v830, 7
          %v832 = vsub.s32 0, %v831
          %v833 = vrot.slane %v828, %v832
          %v835 = vmul.f32 %v827, %v833
          %v836 = vld [vmem:[%s6] sm:$0x1]
          %v838 = vlaneseq
          %v839 = vshrl.u32 %v838, 7
          %v840 = vsub.s32 0, %v839
          %v841 = vrot.slane %v836, %v840
          %v843 = vadd.f32 %v835, %v841
          %844 = vst.msk [vmem:[%s397] sm:$0xff] %vm443, %v843
        $region79: #{_lambda_.8} parent=66 // pred_fallthru
          _
        %p845 = scmp.lt.s32.totalorder %s22, 1
        %s846 = scalar_select %p845, %s22, 1
        %s847 = smul.addr %s846, 8
        %s848 = scalar_lea.vmem %s7, %s847
        // Predicated region
        $region80: #{_lambda_.8} parent=66 // pred_check
          %p849 = pneg %p215
        $region81: #{_lambda_.8} parent=66 // pred_check_branch
          %851 = sbr.rel (%p849) target = $region83
        $region82: #{_lambda_.8} parent=66 // pred_region
          _
        $region83: #{_lambda_.8} parent=66 // pred_fallthru
          _
      $region67: #{_lambda_.8} parent=5 // pred_fallthru
        _
      %p852 = scmp.le.s32.totalorder 2, %s13
      // Predicated region
      $region84: #{_lambda_.8} parent=5 // pred_check
        %p853 = pneg %p852
      $region85: #{_lambda_.8} parent=5 // pred_check_branch
        %855 = sbr.rel (%p853) target = $region87
      $region86: #{_lambda_.8} parent=5 // pred_region
        %s856 = ssub.s32 %s13, 2
        // Predicated region
        $region88: #{_lambda_.8} parent=86 // pred_check
          %p857 = pneg %p221
        $region89: #{_lambda_.8} parent=86 // pred_check_branch
          %859 = sbr.rel (%p857) target = $region91
        $region90: #{_lambda_.8} parent=86 // pred_region
          %p860 = scmp.lt.s32.totalorder %s24, 1
          %s861 = scalar_select %p860, %s24, 1
          %s862 = smul.addr %s861, 8
          %s863 = scalar_lea.vmem %s7, %s862
        $region91: #{_lambda_.8} parent=86 // pred_fallthru
          _
      $region87: #{_lambda_.8} parent=5 // pred_fallthru
        _
    $region6: #{_lambda_.8} parent=1 // loop_footer
      %s17 = sadd.s32 1, %s13
    $region7: #{_lambda_.8} parent=1 // loop_footer_branch
      %12 = sbr.rel target = $region3
    $region8: #{_lambda_.8} parent=1 // loop_exit
      _

// kernel: _lambda_.7
$region0: #{_lambda_.7}
  #allocation0 [shape = 'u32[]', space=smem, size = 0x4, offset = 0x4, fixed_abs, tag = 'smem constant byte address 0x4 - core index']
  #allocation1 [shape = 'u32[144,128]{1,0:T(1,128)}', space=vmem, size = 0x12000, scoped, tag = 'internal scratch']
  %s0 = inlined_call_operand.vmem [shape: f32[16,32], index: 0, kind: input, shape index: {}]
  %s1 = inlined_call_operand.vmem [shape: f32[32,96], index: 1, kind: input, shape index: {}]
  %s2 = inlined_call_operand.vmem [shape: f32[1,96], index: 2, kind: input, shape index: {}]
  %s3 = inlined_call_operand.vmem [shape: f32[32,32], index: 3, kind: input, shape index: {}]
  %s4 = inlined_call_operand.vmem [shape: f32[1,32], index: 4, kind: input, shape index: {}]
  %s5 = inlined_call_operand.vmem [shape: f32[1,32], index: 5, kind: input, shape index: {}]
  %s6 = inlined_call_operand.vmem [shape: f32[1,32], index: 6, kind: input, shape index: {}]
  %s7 = inlined_call_operand.vmem [shape: f32[16,32], index: 7, kind: output, shape index: {}]
  %s8 = sld [smem:[#allocation0]]
  $region61: #{_lambda_.7} parent=0
    _
  %s10 = ssub.s32 1, %s8
  %s11 = scalar_select 0, %s10, %s8
  loop: start=0, step=1, limit=4
  $region2: #{_lambda_.7} parent=0 // loop_pre_header
    _
  $region3: #{_lambda_.7} parent=0 // loop_header
    %s13 = sphi 0, %s17
    %p14 = scmp.ge.s32.totalorder %s13, 4
    %s23 = sphi 0, %s25
    %s26 = sphi 0, %s23
    %s27 = sphi 0, %s26
    %s43 = sphi 0, %s27
    %s47 = sphi 0, %s47
    %s49 = sphi 0, %s47
    %s50 = sphi 0, %s49
    %s64 = sphi 0, %s50
    %s68 = sphi 0, %s68
    %s70 = sphi 0, %s68
    %s71 = sphi 0, %s70
    %s85 = sphi 0, %s71
    %s89 = sphi 0, %s89
    %s91 = sphi 0, %s89
    %s92 = sphi 0, %s91
    %s106 = sphi 0, %s92
    %s110 = sphi 0, %s110
    %s112 = sphi 0, %s110
    %s113 = sphi 0, %s112
    %s127 = sphi 0, %s113
    %s131 = sphi 0, %s131
    %s133 = sphi 0, %s131
    %s134 = sphi 0, %s133
    %s148 = sphi 0, %s134
    %s152 = sphi 0, %s152
    %s154 = sphi 0, %s152
    %s155 = sphi 0, %s154
    %s169 = sphi 0, %s155
    %s175 = sphi 0, %s177
    %s178 = sphi 0, %s175
    %s179 = sphi 0, %s178
    %s195 = sphi 0, %s179
  $region4: #{_lambda_.7} parent=0 // loop_header_branch
    %16 = sbr.rel (%p14) target = $region8
  $region5: #{_lambda_.7} parent=0 // loop_body
    %s18 = ssub.s32 %s13, 1
    %s19 = ssub.s32 %s13, 2
    %s20 = sadd.s32 %s13, 1
    %s21 = ssub.s32 %s13, %s20
    %p22 = scmp.eq.s32.totalorder %s21, 0
    %s24 = sadd.s32 %s23, 1
    %s25 = scalar_select %p22, %s23, %s24
    %p28 = pneg %p22
    %p29 = scmp.eq.s32.totalorder %s13, 1
    %p30 = por %p28, %p29
    %p31 = scmp.ne.s32.totalorder %s23, %s26
    %p32 = scmp.eq.s32.totalorder %s13, 0
    %p33 = por %p31, %p32
    %p34 = scmp.ne.s32.totalorder %s23, %s26
    %p35 = scmp.eq.s32.totalorder %s18, 1
    %p36 = por %p34, %p35
    %p37 = scmp.ne.s32.totalorder %s26, %s27
    %p38 = scmp.eq.s32.totalorder %s18, 0
    %p39 = por %p37, %p38
    %p40 = scmp.ne.s32.totalorder %s26, %s27
    %p41 = scmp.eq.s32.totalorder %s19, 1
    %p42 = por %p40, %p41
    %p44 = scmp.ne.s32.totalorder %s27, %s43
    %p45 = scmp.eq.s32.totalorder %s19, 0
    %p46 = por %p44, %p45
    %s48 = sadd.s32 %s47, 1
    %p51 = scmp.eq.s32.totalorder %s13, 1
    %p52 = scmp.ne.s32.totalorder %s47, %s49
    %p53 = scmp.eq.s32.totalorder %s13, 0
    %p54 = por %p52, %p53
    %p55 = scmp.ne.s32.totalorder %s47, %s49
    %p56 = scmp.eq.s32.totalorder %s18, 1
    %p57 = por %p55, %p56
    %p58 = scmp.ne.s32.totalorder %s49, %s50
    %p59 = scmp.eq.s32.totalorder %s18, 0
    %p60 = por %p58, %p59
    %p61 = scmp.ne.s32.totalorder %s49, %s50
    %p62 = scmp.eq.s32.totalorder %s19, 1
    %p63 = por %p61, %p62
    %p65 = scmp.ne.s32.totalorder %s50, %s64
    %p66 = scmp.eq.s32.totalorder %s19, 0
    %p67 = por %p65, %p66
    %s69 = sadd.s32 %s68, 1
    %p72 = scmp.eq.s32.totalorder %s13, 1
    %p73 = scmp.ne.s32.totalorder %s68, %s70
    %p74 = scmp.eq.s32.totalorder %s13, 0
    %p75 = por %p73, %p74
    %p76 = scmp.ne.s32.totalorder %s68, %s70
    %p77 = scmp.eq.s32.totalorder %s18, 1
    %p78 = por %p76, %p77
    %p79 = scmp.ne.s32.totalorder %s70, %s71
    %p80 = scmp.eq.s32.totalorder %s18, 0
    %p81 = por %p79, %p80
    %p82 = scmp.ne.s32.totalorder %s70, %s71
    %p83 = scmp.eq.s32.totalorder %s19, 1
    %p84 = por %p82, %p83
    %p86 = scmp.ne.s32.totalorder %s71, %s85
    %p87 = scmp.eq.s32.totalorder %s19, 0
    %p88 = por %p86, %p87
    %s90 = sadd.s32 %s89, 1
    %p93 = scmp.eq.s32.totalorder %s13, 1
    %p94 = scmp.ne.s32.totalorder %s89, %s91
    %p95 = scmp.eq.s32.totalorder %s13, 0
    %p96 = por %p94, %p95
    %p97 = scmp.ne.s32.totalorder %s89, %s91
    %p98 = scmp.eq.s32.totalorder %s18, 1
    %p99 = por %p97, %p98
    %p100 = scmp.ne.s32.totalorder %s91, %s92
    %p101 = scmp.eq.s32.totalorder %s18, 0
    %p102 = por %p100, %p101
    %p103 = scmp.ne.s32.totalorder %s91, %s92
    %p104 = scmp.eq.s32.totalorder %s19, 1
    %p105 = por %p103, %p104
    %p107 = scmp.ne.s32.totalorder %s92, %s106
    %p108 = scmp.eq.s32.totalorder %s19, 0
    %p109 = por %p107, %p108
    %s111 = sadd.s32 %s110, 1
    %p114 = scmp.eq.s32.totalorder %s13, 1
    %p115 = scmp.ne.s32.totalorder %s110, %s112
    %p116 = scmp.eq.s32.totalorder %s13, 0
    %p117 = por %p115, %p116
    %p118 = scmp.ne.s32.totalorder %s110, %s112
    %p119 = scmp.eq.s32.totalorder %s18, 1
    %p120 = por %p118, %p119
    %p121 = scmp.ne.s32.totalorder %s112, %s113
    %p122 = scmp.eq.s32.totalorder %s18, 0
    %p123 = por %p121, %p122
    %p124 = scmp.ne.s32.totalorder %s112, %s113
    %p125 = scmp.eq.s32.totalorder %s19, 1
    %p126 = por %p124, %p125
    %p128 = scmp.ne.s32.totalorder %s113, %s127
    %p129 = scmp.eq.s32.totalorder %s19, 0
    %p130 = por %p128, %p129
    %s132 = sadd.s32 %s131, 1
    %p135 = scmp.eq.s32.totalorder %s13, 1
    %p136 = scmp.ne.s32.totalorder %s131, %s133
    %p137 = scmp.eq.s32.totalorder %s13, 0
    %p138 = por %p136, %p137
    %p139 = scmp.ne.s32.totalorder %s131, %s133
    %p140 = scmp.eq.s32.totalorder %s18, 1
    %p141 = por %p139, %p140
    %p142 = scmp.ne.s32.totalorder %s133, %s134
    %p143 = scmp.eq.s32.totalorder %s18, 0
    %p144 = por %p142, %p143
    %p145 = scmp.ne.s32.totalorder %s133, %s134
    %p146 = scmp.eq.s32.totalorder %s19, 1
    %p147 = por %p145, %p146
    %p149 = scmp.ne.s32.totalorder %s134, %s148
    %p150 = scmp.eq.s32.totalorder %s19, 0
    %p151 = por %p149, %p150
    %s153 = sadd.s32 %s152, 1
    %p156 = scmp.eq.s32.totalorder %s13, 1
    %p157 = scmp.ne.s32.totalorder %s152, %s154
    %p158 = scmp.eq.s32.totalorder %s13, 0
    %p159 = por %p157, %p158
    %p160 = scmp.ne.s32.totalorder %s152, %s154
    %p161 = scmp.eq.s32.totalorder %s18, 1
    %p162 = por %p160, %p161
    %p163 = scmp.ne.s32.totalorder %s154, %s155
    %p164 = scmp.eq.s32.totalorder %s18, 0
    %p165 = por %p163, %p164
    %p166 = scmp.ne.s32.totalorder %s154, %s155
    %p167 = scmp.eq.s32.totalorder %s19, 1
    %p168 = por %p166, %p167
    %p170 = scmp.ne.s32.totalorder %s155, %s169
    %p171 = scmp.eq.s32.totalorder %s19, 0
    %p172 = por %p170, %p171
    %s173 = ssub.s32 %s13, %s20
    %p174 = scmp.eq.s32.totalorder %s173, 0
    %s176 = sadd.s32 %s175, 1
    %s177 = scalar_select %p174, %s175, %s176
    %p180 = pneg %p174
    %p181 = scmp.eq.s32.totalorder %s13, 1
    %p182 = por %p180, %p181
    %p183 = scmp.ne.s32.totalorder %s175, %s178
    %p184 = scmp.eq.s32.totalorder %s13, 0
    %p185 = por %p183, %p184
    %p186 = scmp.ne.s32.totalorder %s175, %s178
    %p187 = scmp.eq.s32.totalorder %s18, 1
    %p188 = por %p186, %p187
    %p189 = scmp.ne.s32.totalorder %s178, %s179
    %p190 = scmp.eq.s32.totalorder %s18, 0
    %p191 = por %p189, %p190
    %p192 = scmp.ne.s32.totalorder %s178, %s179
    %p193 = scmp.eq.s32.totalorder %s19, 1
    %p194 = por %p192, %p193
    %p196 = scmp.ne.s32.totalorder %s179, %s195
    %p197 = scmp.eq.s32.totalorder %s19, 0
    %p198 = por %p196, %p197
    %p199 = scmp.le.s32.totalorder 1, %s13
    %p200 = scmp.lt.s32.totalorder %s13, 3
    %p201 = pnand %p199, %p200
    %p202 = pneg %p201
    // Predicated region
    $region9: #{_lambda_.7} parent=5 // pred_check
      _
    $region10: #{_lambda_.7} parent=5 // pred_check_branch
      %204 = sbr.rel (%p201) target = $region12
    $region11: #{_lambda_.7} parent=5 // pred_region
      %s205 = ssub.s32 %s13, 1
      // Predicated region
      $region13: #{_lambda_.7} parent=11 // pred_check
        %p206 = pneg %p60
      $region14: #{_lambda_.7} parent=11 // pred_check_branch
        %208 = sbr.rel (%p206) target = $region16
      $region15: #{_lambda_.7} parent=11 // pred_region
        _
      $region16: #{_lambda_.7} parent=11 // pred_fallthru
        _
      // Predicated region
      $region17: #{_lambda_.7} parent=11 // pred_check
        %p209 = pneg %p81
      $region18: #{_lambda_.7} parent=11 // pred_check_branch
        %211 = sbr.rel (%p209) target = $region20
      $region19: #{_lambda_.7} parent=11 // pred_region
        _
      $region20: #{_lambda_.7} parent=11 // pred_fallthru
        _
      // Predicated region
      $region21: #{_lambda_.7} parent=11 // pred_check
        %p212 = pneg %p102
      $region22: #{_lambda_.7} parent=11 // pred_check_branch
        %214 = sbr.rel (%p212) target = $region24
      $region23: #{_lambda_.7} parent=11 // pred_region
        _
      $region24: #{_lambda_.7} parent=11 // pred_fallthru
        _
      // Predicated region
      $region25: #{_lambda_.7} parent=11 // pred_check
        %p215 = pneg %p123
      $region26: #{_lambda_.7} parent=11 // pred_check_branch
        %217 = sbr.rel (%p215) target = $region28
      $region27: #{_lambda_.7} parent=11 // pred_region
        _
      $region28: #{_lambda_.7} parent=11 // pred_fallthru
        _
      // Predicated region
      $region29: #{_lambda_.7} parent=11 // pred_check
        %p218 = pneg %p144
      $region30: #{_lambda_.7} parent=11 // pred_check_branch
        %220 = sbr.rel (%p218) target = $region32
      $region31: #{_lambda_.7} parent=11 // pred_region
        _
      $region32: #{_lambda_.7} parent=11 // pred_fallthru
        _
      // Predicated region
      $region33: #{_lambda_.7} parent=11 // pred_check
        %p221 = pneg %p165
      $region34: #{_lambda_.7} parent=11 // pred_check_branch
        %223 = sbr.rel (%p221) target = $region36
      $region35: #{_lambda_.7} parent=11 // pred_region
        _
      $region36: #{_lambda_.7} parent=11 // pred_fallthru
        _
    $region12: #{_lambda_.7} parent=5 // pred_fallthru
      _
    %p224 = scmp.lt.s32.totalorder %s13, 2
    // Predicated region
    $region37: #{_lambda_.7} parent=5 // pred_check
      %p225 = pneg %p224
    $region38: #{_lambda_.7} parent=5 // pred_check_branch
      %227 = sbr.rel (%p225) target = $region40
    $region39: #{_lambda_.7} parent=5 // pred_region
      // Predicated region
      $region41: #{_lambda_.7} parent=39 // pred_check
        %p228 = pneg %p33
      $region42: #{_lambda_.7} parent=39 // pred_check_branch
        %230 = sbr.rel (%p228) target = $region44
      $region43: #{_lambda_.7} parent=39 // pred_region
        %p231 = scmp.lt.s32.totalorder %s13, 1
        %s232 = scalar_select %p231, %s13, 1
        %s233 = smul.addr %s232, 8
        %s234 = scalar_lea.vmem %s0, %s233
      $region44: #{_lambda_.7} parent=39 // pred_fallthru
        _
    $region40: #{_lambda_.7} parent=5 // pred_fallthru
      _
    %p235 = scmp.le.s32.totalorder 1, %s13
    %p236 = scmp.lt.s32.totalorder %s13, 3
    %p237 = pnand %p235, %p236
    %p238 = pneg %p237
    // Predicated region
    $region45: #{_lambda_.7} parent=5 // pred_check
      _
    $region46: #{_lambda_.7} parent=5 // pred_check_branch
      %240 = sbr.rel (%p237) target = $region48
    $region47: #{_lambda_.7} parent=5 // pred_region
      %s241 = ssub.s32 %s13, 1
      %p242 = scmp.lt.s32.totalorder %s18, 1
      %s243 = scalar_select %p242, %s18, 1
      %s244 = smul.addr %s243, 8
      %s245 = scalar_lea.vmem %s0, %s244
      %p246 = pneg %p39
      %p247 = pneg %p36
      %p248 = pneg %p60
      %p249 = pneg %p57
      %p250 = pneg %p81
      %p251 = pneg %p78
      %p252 = pneg %p102
      %p253 = pneg %p99
      %p254 = pneg %p123
      %p255 = pneg %p120
      %p256 = pneg %p144
      %p257 = pneg %p141
      %p258 = pneg %p165
      %p259 = pneg %p162
      %p260 = pneg %p191
      %p261 = pneg %p188
      %p262 = scmp.lt.s32.totalorder %s18, 1
      %s263 = scalar_select %p262, %s18, 1
      %s264 = smul.addr %s263, 8
      %s265 = scalar_lea.vmem %s7, %s264
      %p266 = scmp.lt.s32.totalorder %s18, 1
      %s267 = scalar_select %p266, %s18, 1
      %s268 = smul.addr %s267, 8
      %s269 = scalar_lea.vmem %s0, %s268
      %p270 = scmp.lt.s32.totalorder %s18, 1
      %s271 = scalar_select %p270, %s18, 1
      %s272 = smul.addr %s271, 8
      %s273 = scalar_lea.vmem %s7, %s272
      %v274 = vld [vmem:[%s269] sm:$0xff]
      %v275 = vld [vmem:[%s1] sm:$0xff]
      %v276 = vld [vmem:[%s1 + $0x8] sm:$0xff]
      %v277 = vld [vmem:[%s1 + $0x10] sm:$0xff]
      %v278 = vld [vmem:[%s1 + $0x18] sm:$0xff]
      %v279 = vld [vmem:[%s2] sm:$0x1]
      %v281 = vlaneseq
      %v282 = vshrl.u32 %v281, 7
      %v283 = vsub.s32 0, %v282
      %v284 = vrot.slane %v279, %v283
      %vm286 = vcmask 261120
      %v288 = vsel %vm286, %v274, 0
      %290 = vmatprep.subr.mxu0 0.0
      %291 = vmatpush1.msra.mxu0 %v275
      %292 = vmatprep.subr.mxu0 0.0
      %293 = vmatpush1.msra.mxu0 %v276
      %294 = vmatprep.subr.mxu0 0.0
      %295 = vmatpush1.msra.mxu0 %v277
      %296 = vmatprep.subr.mxu0 0.0
      %297 = vmatpush1.msra.mxu0 %v278
      %298 = vmatprep.subr.mxu0 0.0
      %299 = vmatpush1.msra.mxu0 0.0
      %300 = vmatprep.subr.mxu0 0.0
      %301 = vmatpush1.msra.mxu0 0.0
      %302 = vmatprep.subr.mxu0 0.0
      %303 = vmatpush1.msra.mxu0 0.0
      %304 = vmatprep.subr.mxu0 0.0
      %305 = vmatpush1.msra.mxu0 0.0
      %306 = vmatprep.subr.mxu0 0.0
      %307 = vmatpush1.msra.mxu0 0.0
      %308 = vmatprep.subr.mxu0 0.0
      %309 = vmatpush1.msra.mxu0 0.0
      %310 = vmatprep.subr.mxu0 0.0
      %311 = vmatpush1.msra.mxu0 0.0
      %312 = vmatprep.subr.mxu0 0.0
      %313 = vmatpush1.msra.mxu0 0.0
      %314 = vmatprep.subr.mxu0 0.0
      %315 = vmatpush1.msra.mxu0 0.0
      %316 = vmatprep.subr.mxu0 0.0
      %317 = vmatpush1.msra.mxu0 0.0
      %318 = vmatprep.subr.mxu0 0.0
      %319 = vmatpush1.msra.mxu0 0.0
      %320 = vmatprep.subr.mxu0 0.0
      %321 = vmatpush1.msra.mxu0 0.0
      %322 = vmatprep.subr.mxu0 0.0
      %323 = vmatpush1.msra.mxu0 0.0
      %324 = vmatprep.subr.mxu0 0.0
      %325 = vmatpush1.msra.mxu0 0.0
      %326 = vmatprep.subr.mxu0 0.0
      %327 = vmatpush1.msra.mxu0 0.0
      %328 = vmatprep.subr.mxu0 0.0
      %329 = vmatpush1.msra.mxu0 0.0
      %330 = vmatprep.subr.mxu0 0.0
      %331 = vmatpush1.msra.mxu0 0.0
      %332 = vmatprep.subr.mxu0 0.0
      %333 = vmatpush1.msra.mxu0 0.0
      %334 = vmatprep.subr.mxu0 0.0
      %335 = vmatpush1.msra.mxu0 0.0
      %336 = vmatprep.subr.mxu0 0.0
      %337 = vmatpush1.msra.mxu0 0.0
      %338 = vmatprep.subr.mxu0 0.0
      %339 = vmatpush1.msra.mxu0 0.0
      %340 = vmatprep.subr.mxu0 0.0
      %341 = vmatpush1.msra.mxu0 0.0
      %342 = vmatprep.subr.mxu0 0.0
      %343 = vmatpush1.msra.mxu0 0.0
      %344 = vmatprep.subr.mxu0 0.0
      %345 = vmatpush1.msra.mxu0 0.0
      %346 = vmatprep.subr.mxu0 0.0
      %347 = vmatpush1.msra.mxu0 0.0
      %348 = vmatprep.subr.mxu0 0.0
      %349 = vmatpush1.msra.mxu0 0.0
      %350 = vmatprep.subr.mxu0 0.0
      %351 = vmatpush1.msra.mxu0 0.0
      %352 = vmatprep.subr.mxu0 0.0
      %353 = vmatpush1.msra.mxu0 0.0
      %354 = vmatprep.mubr.f32.mxu0 0.0
      %355 = vmatmul.mubr.f32.gmra.mrb[0].mxu0 %v288
      %v356 = vpop.f32.mrb[0].mxu0
      %v357 = vadd.f32 %v284, %v356
      %v358 = vpop.f32.mrb[0].mxu0
      %359 = vdwg.mxu0
      %361 = vrot.lane.b32.xlu0 %v357, 96
      %v362 = vpop.permute.xlu0 %361
      %vm363 = vcmask 64512
      %v364 = vsel %vm363, %v357, 0
      %v366 = vsel %vm363, %v362, 0
      %368 = vmatprep.subr.mxu0 0.0
      %369 = vmatpush1.xpose.msra.mxu0 %v366
      %370 = vmatprep.subr.mxu0 0.0
      %371 = vmatpush1.xpose.msra.mxu0 0.0
      %372 = vmatprep.subr.mxu0 0.0
      %373 = vmatpush1.xpose.msra.mxu0 0.0
      %374 = vmatprep.subr.mxu0 0.0
      %375 = vmatpush1.xpose.msra.mxu0 0.0
      %376 = vmatprep.subr.mxu0 0.0
      %377 = vmatpush1.xpose.msra.mxu0 0.0
      %378 = vmatprep.subr.mxu0 0.0
      %379 = vmatpush1.xpose.msra.mxu0 0.0
      %380 = vmatprep.subr.mxu0 0.0
      %381 = vmatpush1.xpose.msra.mxu0 0.0
      %382 = vmatprep.subr.mxu0 0.0
      %383 = vmatpush1.xpose.msra.mxu0 0.0
      %384 = vmatprep.subr.mxu0 0.0
      %385 = vmatpush1.xpose.msra.mxu0 0.0
      %386 = vmatprep.subr.mxu0 0.0
      %387 = vmatpush1.xpose.msra.mxu0 0.0
      %388 = vmatprep.subr.mxu0 0.0
      %389 = vmatpush1.xpose.msra.mxu0 0.0
      %390 = vmatprep.subr.mxu0 0.0
      %391 = vmatpush1.xpose.msra.mxu0 0.0
      %392 = vmatprep.subr.mxu0 0.0
      %393 = vmatpush1.xpose.msra.mxu0 0.0
      %394 = vmatprep.subr.mxu0 0.0
      %395 = vmatpush1.xpose.msra.mxu0 0.0
      %396 = vmatprep.subr.mxu0 0.0
      %397 = vmatpush1.xpose.msra.mxu0 0.0
      %398 = vmatprep.subr.mxu0 0.0
      %399 = vmatpush1.xpose.msra.mxu0 0.0
      %400 = vmatprep.subr.mxu0 0.0
      %401 = vmatpush1.xpose.msra.mxu0 0.0
      %402 = vmatprep.subr.mxu0 0.0
      %403 = vmatpush1.xpose.msra.mxu0 0.0
      %404 = vmatprep.subr.mxu0 0.0
      %405 = vmatpush1.xpose.msra.mxu0 0.0
      %406 = vmatprep.subr.mxu0 0.0
      %407 = vmatpush1.xpose.msra.mxu0 0.0
      %408 = vmatprep.subr.mxu0 0.0
      %409 = vmatpush1.xpose.msra.mxu0 0.0
      %410 = vmatprep.subr.mxu0 0.0
      %411 = vmatpush1.xpose.msra.mxu0 0.0
      %412 = vmatprep.subr.mxu0 0.0
      %413 = vmatpush1.xpose.msra.mxu0 0.0
      %414 = vmatprep.subr.mxu0 0.0
      %415 = vmatpush1.xpose.msra.mxu0 0.0
      %416 = vmatprep.subr.mxu0 0.0
      %417 = vmatpush1.xpose.msra.mxu0 0.0
      %418 = vmatprep.subr.mxu0 0.0
      %419 = vmatpush1.xpose.msra.mxu0 0.0
      %420 = vmatprep.subr.mxu0 0.0
      %421 = vmatpush1.xpose.msra.mxu0 0.0
      %422 = vmatprep.subr.mxu0 0.0
      %423 = vmatpush1.xpose.msra.mxu0 0.0
      %424 = vmatprep.subr.mxu0 0.0
      %425 = vmatpush1.xpose.msra.mxu0 0.0
      %426 = vmatprep.subr.mxu0 0.0
      %427 = vmatpush1.xpose.msra.mxu0 0.0
      %428 = vmatprep.subr.mxu0 0.0
      %429 = vmatpush1.xpose.msra.mxu0 0.0
      %430 = vmatprep.subr.mxu0 0.0
      %431 = vmatpush1.xpose.msra.mxu0 0.0
      %432 = vmatprep.mubr.f32.mxu0 0.0
      %433 = vmatmul.mubr.f32.gmra.mrb[0].mxu0 %v364
      %v434 = vpop.f32.mrb[0].mxu0
      %v435 = vadd.f32 0.0, %v434
      %v436 = vpop.f32.mrb[0].mxu0
      %437 = vdwg.mxu0
      %v438 = vmul.f32 %v435, 0.35355338
      %v439 = vsel %vm363, %v438, -inf
      %440 = vmax.xlane.f32.xlu0 %v439
      %v441 = vpop.xlane.xlu0 %440
      %v442 = vsub.f32 %v438, %v441
      %v443 = vmul.f32 %v442, 1.442695
      %v444 = vpow.pop %v443
      %v445 = vsel %vm363, %v444, 0.0
      %446 = vadd.xlane.f32.xlu0 %v445
      %v447 = vpop.xlane.xlu0 %446
      %v448 = vrcp.pop %v447
      %v449 = vmul.f32 %v444, %v448
      %450 = vrot.lane.b32.xlu0 %v357, 64
      %v451 = vpop.permute.xlu0 %450
      %v454 = vsel %vm363, %v449, 0
      %456 = vmatprep.subr.mxu0 0.0
      %457 = vmatpush1.msra.mxu0 %v451
      %458 = vmatprep.subr.mxu0 0.0
      %459 = vmatpush1.msra.mxu0 0.0
      %460 = vmatprep.subr.mxu0 0.0
      %461 = vmatpush1.msra.mxu0 0.0
      %462 = vmatprep.subr.mxu0 0.0
      %463 = vmatpush1.msra.mxu0 0.0
      %464 = vmatprep.subr.mxu0 0.0
      %465 = vmatpush1.msra.mxu0 0.0
      %466 = vmatprep.subr.mxu0 0.0
      %467 = vmatpush1.msra.mxu0 0.0
      %468 = vmatprep.subr.mxu0 0.0
      %469 = vmatpush1.msra.mxu0 0.0
      %470 = vmatprep.subr.mxu0 0.0
      %471 = vmatpush1.msra.mxu0 0.0
      %472 = vmatprep.subr.mxu0 0.0
      %473 = vmatpush1.msra.mxu0 0.0
      %474 = vmatprep.subr.mxu0 0.0
      %475 = vmatpush1.msra.mxu0 0.0
      %476 = vmatprep.subr.mxu0 0.0
      %477 = vmatpush1.msra.mxu0 0.0
      %478 = vmatprep.subr.mxu0 0.0
      %479 = vmatpush1.msra.mxu0 0.0
      %480 = vmatprep.subr.mxu0 0.0
      %481 = vmatpush1.msra.mxu0 0.0
      %482 = vmatprep.subr.mxu0 0.0
      %483 = vmatpush1.msra.mxu0 0.0
      %484 = vmatprep.subr.mxu0 0.0
      %485 = vmatpush1.msra.mxu0 0.0
      %486 = vmatprep.subr.mxu0 0.0
      %487 = vmatpush1.msra.mxu0 0.0
      %488 = vmatprep.subr.mxu0 0.0
      %489 = vmatpush1.msra.mxu0 0.0
      %490 = vmatprep.subr.mxu0 0.0
      %491 = vmatpush1.msra.mxu0 0.0
      %492 = vmatprep.subr.mxu0 0.0
      %493 = vmatpush1.msra.mxu0 0.0
      %494 = vmatprep.subr.mxu0 0.0
      %495 = vmatpush1.msra.mxu0 0.0
      %496 = vmatprep.subr.mxu0 0.0
      %497 = vmatpush1.msra.mxu0 0.0
      %498 = vmatprep.subr.mxu0 0.0
      %499 = vmatpush1.msra.mxu0 0.0
      %500 = vmatprep.subr.mxu0 0.0
      %501 = vmatpush1.msra.mxu0 0.0
      %502 = vmatprep.subr.mxu0 0.0
      %503 = vmatpush1.msra.mxu0 0.0
      %504 = vmatprep.subr.mxu0 0.0
      %505 = vmatpush1.msra.mxu0 0.0
      %506 = vmatprep.subr.mxu0 0.0
      %507 = vmatpush1.msra.mxu0 0.0
      %508 = vmatprep.subr.mxu0 0.0
      %509 = vmatpush1.msra.mxu0 0.0
      %510 = vmatprep.subr.mxu0 0.0
      %511 = vmatpush1.msra.mxu0 0.0
      %512 = vmatprep.subr.mxu0 0.0
      %513 = vmatpush1.msra.mxu0 0.0
      %514 = vmatprep.subr.mxu0 0.0
      %515 = vmatpush1.msra.mxu0 0.0
      %516 = vmatprep.subr.mxu0 0.0
      %517 = vmatpush1.msra.mxu0 0.0
      %518 = vmatprep.subr.mxu0 0.0
      %519 = vmatpush1.msra.mxu0 0.0
      %520 = vmatprep.mubr.f32.mxu0 0.0
      %521 = vmatmul.mubr.f32.gmra.mrb[0].mxu0 %v454
      %v522 = vpop.f32.mrb[0].mxu0
      %v523 = vadd.f32 0.0, %v522
      %v524 = vpop.f32.mrb[0].mxu0
      %525 = vdwg.mxu0
      %526 = vrot.lane.b32.xlu0 %v357, 120
      %v527 = vpop.permute.xlu0 %526
      %528 = vrot.lane.b32.xlu0 %v357, 88
      %v529 = vpop.permute.xlu0 %528
      %v530 = vsel %vm363, %v527, 0
      %v532 = vsel %vm363, %v529, 0
      %534 = vmatprep.subr.mxu0 0.0
      %535 = vmatpush1.xpose.msra.mxu0 %v532
      %536 = vmatprep.subr.mxu0 0.0
      %537 = vmatpush1.xpose.msra.mxu0 0.0
      %538 = vmatprep.subr.mxu0 0.0
      %539 = vmatpush1.xpose.msra.mxu0 0.0
      %540 = vmatprep.subr.mxu0 0.0
      %541 = vmatpush1.xpose.msra.mxu0 0.0
      %542 = vmatprep.subr.mxu0 0.0
      %543 = vmatpush1.xpose.msra.mxu0 0.0
      %544 = vmatprep.subr.mxu0 0.0
      %545 = vmatpush1.xpose.msra.mxu0 0.0
      %546 = vmatprep.subr.mxu0 0.0
      %547 = vmatpush1.xpose.msra.mxu0 0.0
      %548 = vmatprep.subr.mxu0 0.0
      %549 = vmatpush1.xpose.msra.mxu0 0.0
      %550 = vmatprep.subr.mxu0 0.0
      %551 = vmatpush1.xpose.msra.mxu0 0.0
      %552 = vmatprep.subr.mxu0 0.0
      %553 = vmatpush1.xpose.msra.mxu0 0.0
      %554 = vmatprep.subr.mxu0 0.0
      %555 = vmatpush1.xpose.msra.mxu0 0.0
      %556 = vmatprep.subr.mxu0 0.0
      %557 = vmatpush1.xpose.msra.mxu0 0.0
      %558 = vmatprep.subr.mxu0 0.0
      %559 = vmatpush1.xpose.msra.mxu0 0.0
      %560 = vmatprep.subr.mxu0 0.0
      %561 = vmatpush1.xpose.msra.mxu0 0.0
      %562 = vmatprep.subr.mxu0 0.0
      %563 = vmatpush1.xpose.msra.mxu0 0.0
      %564 = vmatprep.subr.mxu0 0.0
      %565 = vmatpush1.xpose.msra.mxu0 0.0
      %566 = vmatprep.subr.mxu0 0.0
      %567 = vmatpush1.xpose.msra.mxu0 0.0
      %568 = vmatprep.subr.mxu0 0.0
      %569 = vmatpush1.xpose.msra.mxu0 0.0
      %570 = vmatprep.subr.mxu0 0.0
      %571 = vmatpush1.xpose.msra.mxu0 0.0
      %572 = vmatprep.subr.mxu0 0.0
      %573 = vmatpush1.xpose.msra.mxu0 0.0
      %574 = vmatprep.subr.mxu0 0.0
      %575 = vmatpush1.xpose.msra.mxu0 0.0
      %576 = vmatprep.subr.mxu0 0.0
      %577 = vmatpush1.xpose.msra.mxu0 0.0
      %578 = vmatprep.subr.mxu0 0.0
      %579 = vmatpush1.xpose.msra.mxu0 0.0
      %580 = vmatprep.subr.mxu0 0.0
      %581 = vmatpush1.xpose.msra.mxu0 0.0
      %582 = vmatprep.subr.mxu0 0.0
      %583 = vmatpush1.xpose.msra.mxu0 0.0
      %584 = vmatprep.subr.mxu0 0.0
      %585 = vmatpush1.xpose.msra.mxu0 0.0
      %586 = vmatprep.subr.mxu0 0.0
      %587 = vmatpush1.xpose.msra.mxu0 0.0
      %588 = vmatprep.subr.mxu0 0.0
      %589 = vmatpush1.xpose.msra.mxu0 0.0
      %590 = vmatprep.subr.mxu0 0.0
      %591 = vmatpush1.xpose.msra.mxu0 0.0
      %592 = vmatprep.subr.mxu0 0.0
      %593 = vmatpush1.xpose.msra.mxu0 0.0
      %594 = vmatprep.subr.mxu0 0.0
      %595 = vmatpush1.xpose.msra.mxu0 0.0
      %596 = vmatprep.subr.mxu0 0.0
      %597 = vmatpush1.xpose.msra.mxu0 0.0
      %598 = vmatprep.mubr.f32.mxu0 0.0
      %599 = vmatmul.mubr.f32.gmra.mrb[0].mxu0 %v530
      %v600 = vpop.f32.mrb[0].mxu0
      %v601 = vadd.f32 0.0, %v600
      %v602 = vpop.f32.mrb[0].mxu0
      %603 = vdwg.mxu0
      %v604 = vmul.f32 %v601, 0.35355338
      %v605 = vsel %vm363, %v604, -inf
      %606 = vmax.xlane.f32.xlu0 %v605
      %v607 = vpop.xlane.xlu0 %606
      %v608 = vsub.f32 %v604, %v607
      %v609 = vmul.f32 %v608, 1.442695
      %v610 = vpow.pop %v609
      %v611 = vsel %vm363, %v610, 0.0
      %612 = vadd.xlane.f32.xlu0 %v611
      %v613 = vpop.xlane.xlu0 %612
      %v614 = vrcp.pop %v613
      %v615 = vmul.f32 %v610, %v614
      %616 = vrot.lane.b32.xlu0 %v357, 56
      %v617 = vpop.permute.xlu0 %616
      %v620 = vsel %vm363, %v615, 0
      %622 = vmatprep.subr.mxu0 0.0
      %623 = vmatpush1.msra.mxu0 %v617
      %624 = vmatprep.subr.mxu0 0.0
      %625 = vmatpush1.msra.mxu0 0.0
      %626 = vmatprep.subr.mxu0 0.0
      %627 = vmatpush1.msra.mxu0 0.0
      %628 = vmatprep.subr.mxu0 0.0
      %629 = vmatpush1.msra.mxu0 0.0
      %630 = vmatprep.subr.mxu0 0.0
      %631 = vmatpush1.msra.mxu0 0.0
      %632 = vmatprep.subr.mxu0 0.0
      %633 = vmatpush1.msra.mxu0 0.0
      %634 = vmatprep.subr.mxu0 0.0
      %635 = vmatpush1.msra.mxu0 0.0
      %636 = vmatprep.subr.mxu0 0.0
      %637 = vmatpush1.msra.mxu0 0.0
      %638 = vmatprep.subr.mxu0 0.0
      %639 = vmatpush1.msra.mxu0 0.0
      %640 = vmatprep.subr.mxu0 0.0
      %641 = vmatpush1.msra.mxu0 0.0
      %642 = vmatprep.subr.mxu0 0.0
      %643 = vmatpush1.msra.mxu0 0.0
      %644 = vmatprep.subr.mxu0 0.0
      %645 = vmatpush1.msra.mxu0 0.0
      %646 = vmatprep.subr.mxu0 0.0
      %647 = vmatpush1.msra.mxu0 0.0
      %648 = vmatprep.subr.mxu0 0.0
      %649 = vmatpush1.msra.mxu0 0.0
      %650 = vmatprep.subr.mxu0 0.0
      %651 = vmatpush1.msra.mxu0 0.0
      %652 = vmatprep.subr.mxu0 0.0
      %653 = vmatpush1.msra.mxu0 0.0
      %654 = vmatprep.subr.mxu0 0.0
      %655 = vmatpush1.msra.mxu0 0.0
      %656 = vmatprep.subr.mxu0 0.0
      %657 = vmatpush1.msra.mxu0 0.0
      %658 = vmatprep.subr.mxu0 0.0
      %659 = vmatpush1.msra.mxu0 0.0
      %660 = vmatprep.subr.mxu0 0.0
      %661 = vmatpush1.msra.mxu0 0.0
      %662 = vmatprep.subr.mxu0 0.0
      %663 = vmatpush1.msra.mxu0 0.0
      %664 = vmatprep.subr.mxu0 0.0
      %665 = vmatpush1.msra.mxu0 0.0
      %666 = vmatprep.subr.mxu0 0.0
      %667 = vmatpush1.msra.mxu0 0.0
      %668 = vmatprep.subr.mxu0 0.0
      %669 = vmatpush1.msra.mxu0 0.0
      %670 = vmatprep.subr.mxu0 0.0
      %671 = vmatpush1.msra.mxu0 0.0
      %672 = vmatprep.subr.mxu0 0.0
      %673 = vmatpush1.msra.mxu0 0.0
      %674 = vmatprep.subr.mxu0 0.0
      %675 = vmatpush1.msra.mxu0 0.0
      %676 = vmatprep.subr.mxu0 0.0
      %677 = vmatpush1.msra.mxu0 0.0
      %678 = vmatprep.subr.mxu0 0.0
      %679 = vmatpush1.msra.mxu0 0.0
      %680 = vmatprep.subr.mxu0 0.0
      %681 = vmatpush1.msra.mxu0 0.0
      %682 = vmatprep.subr.mxu0 0.0
      %683 = vmatpush1.msra.mxu0 0.0
      %684 = vmatprep.subr.mxu0 0.0
      %685 = vmatpush1.msra.mxu0 0.0
      %686 = vmatprep.mubr.f32.mxu0 0.0
      %687 = vmatmul.mubr.f32.gmra.mrb[0].mxu0 %v620
      %v688 = vpop.f32.mrb[0].mxu0
      %v689 = vadd.f32 0.0, %v688
      %v690 = vpop.f32.mrb[0].mxu0
      %691 = vdwg.mxu0
      %692 = vrot.lane.b32.xlu0 %v357, 112
      %v693 = vpop.permute.xlu0 %692
      %694 = vrot.lane.b32.xlu0 %v357, 80
      %v695 = vpop.permute.xlu0 %694
      %v696 = vsel %vm363, %v693, 0
      %v698 = vsel %vm363, %v695, 0
      %700 = vmatprep.subr.mxu0 0.0
      %701 = vmatpush1.xpose.msra.mxu0 %v698
      %702 = vmatprep.subr.mxu0 0.0
      %703 = vmatpush1.xpose.msra.mxu0 0.0
      %704 = vmatprep.subr.mxu0 0.0
      %705 = vmatpush1.xpose.msra.mxu0 0.0
      %706 = vmatprep.subr.mxu0 0.0
      %707 = vmatpush1.xpose.msra.mxu0 0.0
      %708 = vmatprep.subr.mxu0 0.0
      %709 = vmatpush1.xpose.msra.mxu0 0.0
      %710 = vmatprep.subr.mxu0 0.0
      %711 = vmatpush1.xpose.msra.mxu0 0.0
      %712 = vmatprep.subr.mxu0 0.0
      %713 = vmatpush1.xpose.msra.mxu0 0.0
      %714 = vmatprep.subr.mxu0 0.0
      %715 = vmatpush1.xpose.msra.mxu0 0.0
      %716 = vmatprep.subr.mxu0 0.0
      %717 = vmatpush1.xpose.msra.mxu0 0.0
      %718 = vmatprep.subr.mxu0 0.0
      %719 = vmatpush1.xpose.msra.mxu0 0.0
      %720 = vmatprep.subr.mxu0 0.0
      %721 = vmatpush1.xpose.msra.mxu0 0.0
      %722 = vmatprep.subr.mxu0 0.0
      %723 = vmatpush1.xpose.msra.mxu0 0.0
      %724 = vmatprep.subr.mxu0 0.0
      %725 = vmatpush1.xpose.msra.mxu0 0.0
      %726 = vmatprep.subr.mxu0 0.0
      %727 = vmatpush1.xpose.msra.mxu0 0.0
      %728 = vmatprep.subr.mxu0 0.0
      %729 = vmatpush1.xpose.msra.mxu0 0.0
      %730 = vmatprep.subr.mxu0 0.0
      %731 = vmatpush1.xpose.msra.mxu0 0.0
      %732 = vmatprep.subr.mxu0 0.0
      %733 = vmatpush1.xpose.msra.mxu0 0.0
      %734 = vmatprep.subr.mxu0 0.0
      %735 = vmatpush1.xpose.msra.mxu0 0.0
      %736 = vmatprep.subr.mxu0 0.0
      %737 = vmatpush1.xpose.msra.mxu0 0.0
      %738 = vmatprep.subr.mxu0 0.0
      %739 = vmatpush1.xpose.msra.mxu0 0.0
      %740 = vmatprep.subr.mxu0 0.0
      %741 = vmatpush1.xpose.msra.mxu0 0.0
      %742 = vmatprep.subr.mxu0 0.0
      %743 = vmatpush1.xpose.msra.mxu0 0.0
      %744 = vmatprep.subr.mxu0 0.0
      %745 = vmatpush1.xpose.msra.mxu0 0.0
      %746 = vmatprep.subr.mxu0 0.0
      %747 = vmatpush1.xpose.msra.mxu0 0.0
      %748 = vmatprep.subr.mxu0 0.0
      %749 = vmatpush1.xpose.msra.mxu0 0.0
      %750 = vmatprep.subr.mxu0 0.0
      %751 = vmatpush1.xpose.msra.mxu0 0.0
      %752 = vmatprep.subr.mxu0 0.0
      %753 = vmatpush1.xpose.msra.mxu0 0.0
      %754 = vmatprep.subr.mxu0 0.0
      %755 = vmatpush1.xpose.msra.mxu0 0.0
      %756 = vmatprep.subr.mxu0 0.0
      %757 = vmatpush1.xpose.msra.mxu0 0.0
      %758 = vmatprep.subr.mxu0 0.0
      %759 = vmatpush1.xpose.msra.mxu0 0.0
      %760 = vmatprep.subr.mxu0 0.0
      %761 = vmatpush1.xpose.msra.mxu0 0.0
      %762 = vmatprep.subr.mxu0 0.0
      %763 = vmatpush1.xpose.msra.mxu0 0.0
      %764 = vmatprep.mubr.f32.mxu0 0.0
      %765 = vmatmul.mubr.f32.gmra.mrb[0].mxu0 %v696
      %v766 = vpop.f32.mrb[0].mxu0
      %v767 = vadd.f32 0.0, %v766
      %v768 = vpop.f32.mrb[0].mxu0
      %769 = vdwg.mxu0
      %v770 = vmul.f32 %v767, 0.35355338
      %v771 = vsel %vm363, %v770, -inf
      %772 = vmax.xlane.f32.xlu0 %v771
      %v773 = vpop.xlane.xlu0 %772
      %v774 = vsub.f32 %v770, %v773
      %v775 = vmul.f32 %v774, 1.442695
      %v776 = vpow.pop %v775
      %v777 = vsel %vm363, %v776, 0.0
      %778 = vadd.xlane.f32.xlu0 %v777
      %v779 = vpop.xlane.xlu0 %778
      %v780 = vrcp.pop %v779
      %v781 = vmul.f32 %v776, %v780
      %782 = vrot.lane.b32.xlu0 %v357, 48
      %v783 = vpop.permute.xlu0 %782
      %v786 = vsel %vm363, %v781, 0
      %788 = vmatprep.subr.mxu0 0.0
      %789 = vmatpush1.msra.mxu0 %v783
      %790 = vmatprep.subr.mxu0 0.0
      %791 = vmatpush1.msra.mxu0 0.0
      %792 = vmatprep.subr.mxu0 0.0
      %793 = vmatpush1.msra.mxu0 0.0
      %794 = vmatprep.subr.mxu0 0.0
      %795 = vmatpush1.msra.mxu0 0.0
      %796 = vmatprep.subr.mxu0 0.0
      %797 = vmatpush1.msra.mxu0 0.0
      %798 = vmatprep.subr.mxu0 0.0
      %799 = vmatpush1.msra.mxu0 0.0
      %800 = vmatprep.subr.mxu0 0.0
      %801 = vmatpush1.msra.mxu0 0.0
      %802 = vmatprep.subr.mxu0 0.0
      %803 = vmatpush1.msra.mxu0 0.0
      %804 = vmatprep.subr.mxu0 0.0
      %805 = vmatpush1.msra.mxu0 0.0
      %806 = vmatprep.subr.mxu0 0.0
      %807 = vmatpush1.msra.mxu0 0.0
      %808 = vmatprep.subr.mxu0 0.0
      %809 = vmatpush1.msra.mxu0 0.0
      %810 = vmatprep.subr.mxu0 0.0
      %811 = vmatpush1.msra.mxu0 0.0
      %812 = vmatprep.subr.mxu0 0.0
      %813 = vmatpush1.msra.mxu0 0.0
      %814 = vmatprep.subr.mxu0 0.0
      %815 = vmatpush1.msra.mxu0 0.0
      %816 = vmatprep.subr.mxu0 0.0
      %817 = vmatpush1.msra.mxu0 0.0
      %818 = vmatprep.subr.mxu0 0.0
      %819 = vmatpush1.msra.mxu0 0.0
      %820 = vmatprep.subr.mxu0 0.0
      %821 = vmatpush1.msra.mxu0 0.0
      %822 = vmatprep.subr.mxu0 0.0
      %823 = vmatpush1.msra.mxu0 0.0
      %824 = vmatprep.subr.mxu0 0.0
      %825 = vmatpush1.msra.mxu0 0.0
      %826 = vmatprep.subr.mxu0 0.0
      %827 = vmatpush1.msra.mxu0 0.0
      %828 = vmatprep.subr.mxu0 0.0
      %829 = vmatpush1.msra.mxu0 0.0
      %830 = vmatprep.subr.mxu0 0.0
      %831 = vmatpush1.msra.mxu0 0.0
      %832 = vmatprep.subr.mxu0 0.0
      %833 = vmatpush1.msra.mxu0 0.0
      %834 = vmatprep.subr.mxu0 0.0
      %835 = vmatpush1.msra.mxu0 0.0
      %836 = vmatprep.subr.mxu0 0.0
      %837 = vmatpush1.msra.mxu0 0.0
      %838 = vmatprep.subr.mxu0 0.0
      %839 = vmatpush1.msra.mxu0 0.0
      %840 = vmatprep.subr.mxu0 0.0
      %841 = vmatpush1.msra.mxu0 0.0
      %842 = vmatprep.subr.mxu0 0.0
      %843 = vmatpush1.msra.mxu0 0.0
      %844 = vmatprep.subr.mxu0 0.0
      %845 = vmatpush1.msra.mxu0 0.0
      %846 = vmatprep.subr.mxu0 0.0
      %847 = vmatpush1.msra.mxu0 0.0
      %848 = vmatprep.subr.mxu0 0.0
      %849 = vmatpush1.msra.mxu0 0.0
      %850 = vmatprep.subr.mxu0 0.0
      %851 = vmatpush1.msra.mxu0 0.0
      %852 = vmatprep.mubr.f32.mxu0 0.0
      %853 = vmatmul.mubr.f32.gmra.mrb[0].mxu0 %v786
      %v854 = vpop.f32.mrb[0].mxu0
      %v855 = vadd.f32 0.0, %v854
      %v856 = vpop.f32.mrb[0].mxu0
      %857 = vdwg.mxu0
      %858 = vrot.lane.b32.xlu0 %v357, 104
      %v859 = vpop.permute.xlu0 %858
      %860 = vrot.lane.b32.xlu0 %v357, 72
      %v861 = vpop.permute.xlu0 %860
      %v862 = vsel %vm363, %v859, 0
      %v864 = vsel %vm363, %v861, 0
      %866 = vmatprep.subr.mxu0 0.0
      %867 = vmatpush1.xpose.msra.mxu0 %v864
      %868 = vmatprep.subr.mxu0 0.0
      %869 = vmatpush1.xpose.msra.mxu0 0.0
      %870 = vmatprep.subr.mxu0 0.0
      %871 = vmatpush1.xpose.msra.mxu0 0.0
      %872 = vmatprep.subr.mxu0 0.0
      %873 = vmatpush1.xpose.msra.mxu0 0.0
      %874 = vmatprep.subr.mxu0 0.0
      %875 = vmatpush1.xpose.msra.mxu0 0.0
      %876 = vmatprep.subr.mxu0 0.0
      %877 = vmatpush1.xpose.msra.mxu0 0.0
      %878 = vmatprep.subr.mxu0 0.0
      %879 = vmatpush1.xpose.msra.mxu0 0.0
      %880 = vmatprep.subr.mxu0 0.0
      %881 = vmatpush1.xpose.msra.mxu0 0.0
      %882 = vmatprep.subr.mxu0 0.0
      %883 = vmatpush1.xpose.msra.mxu0 0.0
      %884 = vmatprep.subr.mxu0 0.0
      %885 = vmatpush1.xpose.msra.mxu0 0.0
      %886 = vmatprep.subr.mxu0 0.0
      %887 = vmatpush1.xpose.msra.mxu0 0.0
      %888 = vmatprep.subr.mxu0 0.0
      %889 = vmatpush1.xpose.msra.mxu0 0.0
      %890 = vmatprep.subr.mxu0 0.0
      %891 = vmatpush1.xpose.msra.mxu0 0.0
      %892 = vmatprep.subr.mxu0 0.0
      %893 = vmatpush1.xpose.msra.mxu0 0.0
      %894 = vmatprep.subr.mxu0 0.0
      %895 = vmatpush1.xpose.msra.mxu0 0.0
      %896 = vmatprep.subr.mxu0 0.0
      %897 = vmatpush1.xpose.msra.mxu0 0.0
      %898 = vmatprep.subr.mxu0 0.0
      %899 = vmatpush1.xpose.msra.mxu0 0.0
      %900 = vmatprep.subr.mxu0 0.0
      %901 = vmatpush1.xpose.msra.mxu0 0.0
      %902 = vmatprep.subr.mxu0 0.0
      %903 = vmatpush1.xpose.msra.mxu0 0.0
      %904 = vmatprep.subr.mxu0 0.0
      %905 = vmatpush1.xpose.msra.mxu0 0.0
      %906 = vmatprep.subr.mxu0 0.0
      %907 = vmatpush1.xpose.msra.mxu0 0.0
      %908 = vmatprep.subr.mxu0 0.0
      %909 = vmatpush1.xpose.msra.mxu0 0.0
      %910 = vmatprep.subr.mxu0 0.0
      %911 = vmatpush1.xpose.msra.mxu0 0.0
      %912 = vmatprep.subr.mxu0 0.0
      %913 = vmatpush1.xpose.msra.mxu0 0.0
      %914 = vmatprep.subr.mxu0 0.0
      %915 = vmatpush1.xpose.msra.mxu0 0.0
      %916 = vmatprep.subr.mxu0 0.0
      %917 = vmatpush1.xpose.msra.mxu0 0.0
      %918 = vmatprep.subr.mxu0 0.0
      %919 = vmatpush1.xpose.msra.mxu0 0.0
      %920 = vmatprep.subr.mxu0 0.0
      %921 = vmatpush1.xpose.msra.mxu0 0.0
      %922 = vmatprep.subr.mxu0 0.0
      %923 = vmatpush1.xpose.msra.mxu0 0.0
      %924 = vmatprep.subr.mxu0 0.0
      %925 = vmatpush1.xpose.msra.mxu0 0.0
      %926 = vmatprep.subr.mxu0 0.0
      %927 = vmatpush1.xpose.msra.mxu0 0.0
      %928 = vmatprep.subr.mxu0 0.0
      %929 = vmatpush1.xpose.msra.mxu0 0.0
      %930 = vmatprep.mubr.f32.mxu0 0.0
      %931 = vmatmul.mubr.f32.gmra.mrb[0].mxu0 %v862
      %v932 = vpop.f32.mrb[0].mxu0
      %v933 = vadd.f32 0.0, %v932
      %v934 = vpop.f32.mrb[0].mxu0
      %935 = vdwg.mxu0
      %v936 = vmul.f32 %v933, 0.35355338
      %v937 = vsel %vm363, %v936, -inf
      %938 = vmax.xlane.f32.xlu0 %v937
      %v939 = vpop.xlane.xlu0 %938
      %v940 = vsub.f32 %v936, %v939
      %v941 = vmul.f32 %v940, 1.442695
      %v942 = vpow.pop %v941
      %v943 = vsel %vm363, %v942, 0.0
      %944 = vadd.xlane.f32.xlu0 %v943
      %v945 = vpop.xlane.xlu0 %944
      %v946 = vrcp.pop %v945
      %v947 = vmul.f32 %v942, %v946
      %948 = vrot.lane.b32.xlu0 %v357, 40
      %v949 = vpop.permute.xlu0 %948
      %v952 = vsel %vm363, %v947, 0
      %954 = vmatprep.subr.mxu0 0.0
      %955 = vmatpush1.msra.mxu0 %v949
      %956 = vmatprep.subr.mxu0 0.0
      %957 = vmatpush1.msra.mxu0 0.0
      %958 = vmatprep.subr.mxu0 0.0
      %959 = vmatpush1.msra.mxu0 0.0
      %960 = vmatprep.subr.mxu0 0.0
      %961 = vmatpush1.msra.mxu0 0.0
      %962 = vmatprep.subr.mxu0 0.0
      %963 = vmatpush1.msra.mxu0 0.0
      %964 = vmatprep.subr.mxu0 0.0
      %965 = vmatpush1.msra.mxu0 0.0
      %966 = vmatprep.subr.mxu0 0.0
      %967 = vmatpush1.msra.mxu0 0.0
      %968 = vmatprep.subr.mxu0 0.0
      %969 = vmatpush1.msra.mxu0 0.0
      %970 = vmatprep.subr.mxu0 0.0
      %971 = vmatpush1.msra.mxu0 0.0
      %972 = vmatprep.subr.mxu0 0.0
      %973 = vmatpush1.msra.mxu0 0.0
      %974 = vmatprep.subr.mxu0 0.0
      %975 = vmatpush1.msra.mxu0 0.0
      %976 = vmatprep.subr.mxu0 0.0
      %977 = vmatpush1.msra.mxu0 0.0
      %978 = vmatprep.subr.mxu0 0.0
      %979 = vmatpush1.msra.mxu0 0.0
      %980 = vmatprep.subr.mxu0 0.0
      %981 = vmatpush1.msra.mxu0 0.0
      %982 = vmatprep.subr.mxu0 0.0
      %983 = vmatpush1.msra.mxu0 0.0
      %984 = vmatprep.subr.mxu0 0.0
      %985 = vmatpush1.msra.mxu0 0.0
      %986 = vmatprep.subr.mxu0 0.0
      %987 = vmatpush1.msra.mxu0 0.0
      %988 = vmatprep.subr.mxu0 0.0
      %989 = vmatpush1.msra.mxu0 0.0
      %990 = vmatprep.subr.mxu0 0.0
      %991 = vmatpush1.msra.mxu0 0.0
      %992 = vmatprep.subr.mxu0 0.0
      %993 = vmatpush1.msra.mxu0 0.0
      %994 = vmatprep.subr.mxu0 0.0
      %995 = vmatpush1.msra.mxu0 0.0
      %996 = vmatprep.subr.mxu0 0.0
      %997 = vmatpush1.msra.mxu0 0.0
      %998 = vmatprep.subr.mxu0 0.0
      %999 = vmatpush1.msra.mxu0 0.0
      %1000 = vmatprep.subr.mxu0 0.0
      %1001 = vmatpush1.msra.mxu0 0.0
      %1002 = vmatprep.subr.mxu0 0.0
      %1003 = vmatpush1.msra.mxu0 0.0
      %1004 = vmatprep.subr.mxu0 0.0
      %1005 = vmatpush1.msra.mxu0 0.0
      %1006 = vmatprep.subr.mxu0 0.0
      %1007 = vmatpush1.msra.mxu0 0.0
      %1008 = vmatprep.subr.mxu0 0.0
      %1009 = vmatpush1.msra.mxu0 0.0
      %1010 = vmatprep.subr.mxu0 0.0
      %1011 = vmatpush1.msra.mxu0 0.0
      %1012 = vmatprep.subr.mxu0 0.0
      %1013 = vmatpush1.msra.mxu0 0.0
      %1014 = vmatprep.subr.mxu0 0.0
      %1015 = vmatpush1.msra.mxu0 0.0
      %1016 = vmatprep.subr.mxu0 0.0
      %1017 = vmatpush1.msra.mxu0 0.0
      %1018 = vmatprep.mubr.f32.mxu0 0.0
      %1019 = vmatmul.mubr.f32.gmra.mrb[0].mxu0 %v952
      %v1020 = vpop.f32.mrb[0].mxu0
      %v1021 = vadd.f32 0.0, %v1020
      %v1022 = vpop.f32.mrb[0].mxu0
      %1023 = vdwg.mxu0
      %1025 = vrot.lane.b32.xlu0 %v689, 8
      %v1026 = vpop.permute.xlu0 %1025
      %1029 = vrot.lane.b32.xlu0 %v855, 16
      %v1030 = vpop.permute.xlu0 %1029
      %1033 = vrot.lane.b32.xlu0 %v1021, 24
      %v1034 = vpop.permute.xlu0 %1033
      %v1036 = vsel %vm363, %v523, %v1026
      %vm1037 = vcmask 130048
      %v1038 = vsel %vm1037, %v1036, %v1030
      %vm1039 = vcmask 195584
      %v1040 = vsel %vm1039, %v1038, %v1034
      %v1041 = vld [vmem:[%s3] sm:$0xff]
      %v1042 = vld [vmem:[%s3 + $0x8] sm:$0xff]
      %v1043 = vld [vmem:[%s3 + $0x10] sm:$0xff]
      %v1044 = vld [vmem:[%s3 + $0x18] sm:$0xff]
      %v1045 = vld [vmem:[%s4] sm:$0x1]
      %v1047 = vlaneseq
      %v1048 = vshrl.u32 %v1047, 7
      %v1049 = vsub.s32 0, %v1048
      %v1050 = vrot.slane %v1045, %v1049
      %v1053 = vsel %vm286, %v1040, 0
      %1055 = vmatprep.subr.mxu0 0.0
      %1056 = vmatpush1.msra.mxu0 %v1041
      %1057 = vmatprep.subr.mxu0 0.0
      %1058 = vmatpush1.msra.mxu0 %v1042
      %1059 = vmatprep.subr.mxu0 0.0
      %1060 = vmatpush1.msra.mxu0 %v1043
      %1061 = vmatprep.subr.mxu0 0.0
      %1062 = vmatpush1.msra.mxu0 %v1044
      %1063 = vmatprep.subr.mxu0 0.0
      %1064 = vmatpush1.msra.mxu0 0.0
      %1065 = vmatprep.subr.mxu0 0.0
      %1066 = vmatpush1.msra.mxu0 0.0
      %1067 = vmatprep.subr.mxu0 0.0
      %1068 = vmatpush1.msra.mxu0 0.0
      %1069 = vmatprep.subr.mxu0 0.0
      %1070 = vmatpush1.msra.mxu0 0.0
      %1071 = vmatprep.subr.mxu0 0.0
      %1072 = vmatpush1.msra.mxu0 0.0
      %1073 = vmatprep.subr.mxu0 0.0
      %1074 = vmatpush1.msra.mxu0 0.0
      %1075 = vmatprep.subr.mxu0 0.0
      %1076 = vmatpush1.msra.mxu0 0.0
      %1077 = vmatprep.subr.mxu0 0.0
      %1078 = vmatpush1.msra.mxu0 0.0
      %1079 = vmatprep.subr.mxu0 0.0
      %1080 = vmatpush1.msra.mxu0 0.0
      %1081 = vmatprep.subr.mxu0 0.0
      %1082 = vmatpush1.msra.mxu0 0.0
      %1083 = vmatprep.subr.mxu0 0.0
      %1084 = vmatpush1.msra.mxu0 0.0
      %1085 = vmatprep.subr.mxu0 0.0
      %1086 = vmatpush1.msra.mxu0 0.0
      %1087 = vmatprep.subr.mxu0 0.0
      %1088 = vmatpush1.msra.mxu0 0.0
      %1089 = vmatprep.subr.mxu0 0.0
      %1090 = vmatpush1.msra.mxu0 0.0
      %1091 = vmatprep.subr.mxu0 0.0
      %1092 = vmatpush1.msra.mxu0 0.0
      %1093 = vmatprep.subr.mxu0 0.0
      %1094 = vmatpush1.msra.mxu0 0.0
      %1095 = vmatprep.subr.mxu0 0.0
      %1096 = vmatpush1.msra.mxu0 0.0
      %1097 = vmatprep.subr.mxu0 0.0
      %1098 = vmatpush1.msra.mxu0 0.0
      %1099 = vmatprep.subr.mxu0 0.0
      %1100 = vmatpush1.msra.mxu0 0.0
      %1101 = vmatprep.subr.mxu0 0.0
      %1102 = vmatpush1.msra.mxu0 0.0
      %1103 = vmatprep.subr.mxu0 0.0
      %1104 = vmatpush1.msra.mxu0 0.0
      %1105 = vmatprep.subr.mxu0 0.0
      %1106 = vmatpush1.msra.mxu0 0.0
      %1107 = vmatprep.subr.mxu0 0.0
      %1108 = vmatpush1.msra.mxu0 0.0
      %1109 = vmatprep.subr.mxu0 0.0
      %1110 = vmatpush1.msra.mxu0 0.0
      %1111 = vmatprep.subr.mxu0 0.0
      %1112 = vmatpush1.msra.mxu0 0.0
      %1113 = vmatprep.subr.mxu0 0.0
      %1114 = vmatpush1.msra.mxu0 0.0
      %1115 = vmatprep.subr.mxu0 0.0
      %1116 = vmatpush1.msra.mxu0 0.0
      %1117 = vmatprep.subr.mxu0 0.0
      %1118 = vmatpush1.msra.mxu0 0.0
      %1119 = vmatprep.mubr.f32.mxu0 0.0
      %1120 = vmatmul.mubr.f32.gmra.mrb[0].mxu0 %v1053
      %v1121 = vpop.f32.mrb[0].mxu0
      %v1122 = vadd.f32 %v1050, %v1121
      %v1123 = vpop.f32.mrb[0].mxu0
      %1124 = vdwg.mxu0
      %v1125 = vadd.f32 %v274, %v1122
      %v1126 = vsel %vm286, %v1125, 0.0
      %1127 = vadd.xlane.f32.xlu0 %v1126
      %v1128 = vpop.xlane.xlu0 %1127
      %v1129 = vrcp.pop 32.0
      %v1130 = vmul.f32 %v1128, %v1129
      %v1131 = vsub.f32 %v1125, %v1130
      %v1132 = vmul.f32 %v1131, %v1131
      %v1133 = vsel %vm286, %v1132, 0.0
      %1134 = vadd.xlane.f32.xlu0 %v1133
      %v1135 = vpop.xlane.xlu0 %1134
      %v1136 = vmul.f32 %v1135, %v1129
      %v1137 = vadd.f32 %v1136, 1e-05
      %v1138 = vrsqrt.pop %v1137
      %v1139 = vmul.f32 %v1131, %v1138
      %v1140 = vld [vmem:[%s5] sm:$0x1]
      %v1142 = vlaneseq
      %v1143 = vshrl.u32 %v1142, 7
      %v1144 = vsub.s32 0, %v1143
      %v1145 = vrot.slane %v1140, %v1144
      %v1147 = vmul.f32 %v1139, %v1145
      %v1148 = vld [vmem:[%s6] sm:$0x1]
      %v1150 = vlaneseq
      %v1151 = vshrl.u32 %v1150, 7
      %v1152 = vsub.s32 0, %v1151
      %v1153 = vrot.slane %v1148, %v1152
      %v1155 = vadd.f32 %v1147, %v1153
      %1156 = vst.msk [vmem:[%s273] sm:$0xff] %vm286, %v1155
      %p1157 = scmp.lt.s32.totalorder %s18, 1
      %s1158 = scalar_select %p1157, %s18, 1
      %s1159 = smul.addr %s1158, 8
      %s1160 = scalar_lea.vmem %s7, %s1159
      // Predicated region
      $region49: #{_lambda_.7} parent=47 // pred_check
        %p1161 = pneg %p188
      $region50: #{_lambda_.7} parent=47 // pred_check_branch
        %1163 = sbr.rel (%p1161) target = $region52
      $region51: #{_lambda_.7} parent=47 // pred_region
        _
      $region52: #{_lambda_.7} parent=47 // pred_fallthru
        _
    $region48: #{_lambda_.7} parent=5 // pred_fallthru
      _
    %p1164 = scmp.le.s32.totalorder 2, %s13
    // Predicated region
    $region53: #{_lambda_.7} parent=5 // pred_check
      %p1165 = pneg %p1164
    $region54: #{_lambda_.7} parent=5 // pred_check_branch
      %1167 = sbr.rel (%p1165) target = $region56
    $region55: #{_lambda_.7} parent=5 // pred_region
      %s1168 = ssub.s32 %s13, 2
      // Predicated region
      $region57: #{_lambda_.7} parent=55 // pred_check
        %p1169 = pneg %p194
      $region58: #{_lambda_.7} parent=55 // pred_check_branch
        %1171 = sbr.rel (%p1169) target = $region60
      $region59: #{_lambda_.7} parent=55 // pred_region
        %p1172 = scmp.lt.s32.totalorder %s19, 1
        %s1173 = scalar_select %p1172, %s19, 1
        %s1174 = smul.addr %s1173, 8
        %s1175 = scalar_lea.vmem %s7, %s1174
      $region60: #{_lambda_.7} parent=55 // pred_fallthru
        _
    $region56: #{_lambda_.7} parent=5 // pred_fallthru
      _
  $region6: #{_lambda_.7} parent=0 // loop_footer
    %s17 = sadd.s32 1, %s13
  $region7: #{_lambda_.7} parent=0 // loop_footer_branch
    %12 = sbr.rel target = $region3
  $region8: #{_lambda_.7} parent=0 // loop_exit
    _

// kernel: _lambda_.11
$region0: #{_lambda_.11}
  #allocation0 [shape = 'u32[]', space=smem, size = 0x4, offset = 0x4, fixed_abs, tag = 'smem constant byte address 0x4 - core index']
  #allocation1 [shape = 'u32[144,128]{1,0:T(1,128)}', space=vmem, size = 0x12000, scoped, tag = 'internal scratch']
  #allocation2 [shape = 'f32[2,8]{1,0:T(2,128)}', space=vmem, size = 0x400, scoped, tag = 'scratch operand']
  %s0 = inlined_call_operand.vmem [shape: f32[2,256], index: 0, kind: input, shape index: {}]
  %s1 = inlined_call_operand.vmem [shape: f32[256,8], index: 1, kind: input, shape index: {}]
  %s2 = inlined_call_operand.vmem [shape: f32[1,8], index: 2, kind: input, shape index: {}]
  %s3 = inlined_call_operand.hbm [shape: f32[2,8], index: 3, kind: output, shape index: {}]
  %s4 = sld [smem:[#allocation0]]
  $region30: #{_lambda_.11} parent=0
    _
  %s6 = ssub.s32 1, %s4
  %s7 = scalar_select 0, %s6, %s4
  $region1: #{_lambda_.11} parent=0
    #allocation3 [shape = 'u8[1024]{0}', space=vmem, size = 0x400, scoped, tag = 'output window, operand 0, single buffered']
    #allocation4 [shape = 's32[1]{0}', space=sflag, size = 0x4, scoped, tag = 'scoped memory for _lambda_.11']
    %8 = vsyncpa [#allocation4], 0
    // Predicated region
    $region2: #{_lambda_.11} parent=1 // pred_check
      _
    $region3: #{_lambda_.11} parent=1 // pred_check_branch
      %10 = sbr.rel (0) target = $region5
    $region4: #{_lambda_.11} parent=1 // pred_region
      _
    $region5: #{_lambda_.11} parent=1 // pred_fallthru
      _
    // Predicated region
    $region6: #{_lambda_.11} parent=1 // pred_check
      _
    $region7: #{_lambda_.11} parent=1 // pred_check_branch
      %12 = sbr.rel (0) target = $region9
    $region8: #{_lambda_.11} parent=1 // pred_region
      _
    $region9: #{_lambda_.11} parent=1 // pred_fallthru
      _
    // Predicated region
    $region10: #{_lambda_.11} parent=1 // pred_check
      _
    $region11: #{_lambda_.11} parent=1 // pred_check_branch
      %14 = sbr.rel (0) target = $region13
    $region12: #{_lambda_.11} parent=1 // pred_region
      _
    $region13: #{_lambda_.11} parent=1 // pred_fallthru
      _
    %p15 = scmp.eq.s32.totalorder 0, 0
    // Predicated region
    $region14: #{_lambda_.11} parent=1 // pred_check
      %p16 = pneg %p15
    $region15: #{_lambda_.11} parent=1 // pred_check_branch
      %18 = sbr.rel (%p16) target = $region17
    $region16: #{_lambda_.11} parent=1 // pred_region
      %vm19 = vcmask 58368
      %20 = vst.msk [vmem:[#allocation2] sm:$0x3] %vm19, 0.0
    $region17: #{_lambda_.11} parent=1 // pred_fallthru
      _
    %v21 = vld [vmem:[#allocation2] sm:$0x3]
    %v22 = vld [vmem:[%s0] sm:$0xf]
    %v23 = vld [vmem:[%s1] sm:$0xff]
    %v24 = vld [vmem:[%s1 + $0x8] sm:$0xff]
    %v25 = vld [vmem:[%s1 + $0x10] sm:$0xff]
    %v26 = vld [vmem:[%s1 + $0x18] sm:$0xff]
    %v27 = vld [vmem:[%s1 + $0x20] sm:$0xff]
    %v28 = vld [vmem:[%s1 + $0x28] sm:$0xff]
    %v29 = vld [vmem:[%s1 + $0x30] sm:$0xff]
    %v30 = vld [vmem:[%s1 + $0x38] sm:$0xff]
    %v31 = vld [vmem:[%s1 + $0x40] sm:$0xff]
    %v32 = vld [vmem:[%s1 + $0x48] sm:$0xff]
    %v33 = vld [vmem:[%s1 + $0x50] sm:$0xff]
    %v34 = vld [vmem:[%s1 + $0x58] sm:$0xff]
    %v35 = vld [vmem:[%s1 + $0x60] sm:$0xff]
    %v36 = vld [vmem:[%s1 + $0x68] sm:$0xff]
    %v37 = vld [vmem:[%s1 + $0x70] sm:$0xff]
    %v38 = vld [vmem:[%s1 + $0x78] sm:$0xff]
    %v39 = vld [vmem:[%s1 + $0x80] sm:$0xff]
    %v40 = vld [vmem:[%s1 + $0x88] sm:$0xff]
    %v41 = vld [vmem:[%s1 + $0x90] sm:$0xff]
    %v42 = vld [vmem:[%s1 + $0x98] sm:$0xff]
    %v43 = vld [vmem:[%s1 + $0xa0] sm:$0xff]
    %v44 = vld [vmem:[%s1 + $0xa8] sm:$0xff]
    %v45 = vld [vmem:[%s1 + $0xb0] sm:$0xff]
    %v46 = vld [vmem:[%s1 + $0xb8] sm:$0xff]
    %v47 = vld [vmem:[%s1 + $0xc0] sm:$0xff]
    %v48 = vld [vmem:[%s1 + $0xc8] sm:$0xff]
    %v49 = vld [vmem:[%s1 + $0xd0] sm:$0xff]
    %v50 = vld [vmem:[%s1 + $0xd8] sm:$0xff]
    %v51 = vld [vmem:[%s1 + $0xe0] sm:$0xff]
    %v52 = vld [vmem:[%s1 + $0xe8] sm:$0xff]
    %v53 = vld [vmem:[%s1 + $0xf0] sm:$0xff]
    %v54 = vld [vmem:[%s1 + $0xf8] sm:$0xff]
    %v57 = vunpack.c.l.s4 1983009808
    %v58 = vunpack.c.0.s8 %v57
    %v59 = vlaneseq
    %v60 = vshrl.u32 %v59, 7
    %v61 = vsub.s32 %v58, %v60
    %v62 = vrot.slane %v22, %v61
    %v63 = vcombine.high %v62, %v62
    %66 = vmatprep.subr.mxu0 0.0
    %67 = vmatpush1.msra.mxu0 %v23
    %68 = vmatprep.subr.mxu0 0.0
    %69 = vmatpush1.msra.mxu0 %v24
    %70 = vmatprep.subr.mxu0 0.0
    %71 = vmatpush1.msra.mxu0 %v25
    %72 = vmatprep.subr.mxu0 0.0
    %73 = vmatpush1.msra.mxu0 %v26
    %74 = vmatprep.subr.mxu0 0.0
    %75 = vmatpush1.msra.mxu0 %v27
    %76 = vmatprep.subr.mxu0 0.0
    %77 = vmatpush1.msra.mxu0 %v28
    %78 = vmatprep.subr.mxu0 0.0
    %79 = vmatpush1.msra.mxu0 %v29
    %80 = vmatprep.subr.mxu0 0.0
    %81 = vmatpush1.msra.mxu0 %v30
    %82 = vmatprep.subr.mxu0 0.0
    %83 = vmatpush1.msra.mxu0 %v31
    %84 = vmatprep.subr.mxu0 0.0
    %85 = vmatpush1.msra.mxu0 %v32
    %86 = vmatprep.subr.mxu0 0.0
    %87 = vmatpush1.msra.mxu0 %v33
    %88 = vmatprep.subr.mxu0 0.0
    %89 = vmatpush1.msra.mxu0 %v34
    %90 = vmatprep.subr.mxu0 0.0
    %91 = vmatpush1.msra.mxu0 %v35
    %92 = vmatprep.subr.mxu0 0.0
    %93 = vmatpush1.msra.mxu0 %v36
    %94 = vmatprep.subr.mxu0 0.0
    %95 = vmatpush1.msra.mxu0 %v37
    %96 = vmatprep.subr.mxu0 0.0
    %97 = vmatpush1.msra.mxu0 %v38
    %98 = vmatprep.subr.mxu0 0.0
    %99 = vmatpush1.msra.mxu0 %v39
    %100 = vmatprep.subr.mxu0 0.0
    %101 = vmatpush1.msra.mxu0 %v40
    %102 = vmatprep.subr.mxu0 0.0
    %103 = vmatpush1.msra.mxu0 %v41
    %104 = vmatprep.subr.mxu0 0.0
    %105 = vmatpush1.msra.mxu0 %v42
    %106 = vmatprep.subr.mxu0 0.0
    %107 = vmatpush1.msra.mxu0 %v43
    %108 = vmatprep.subr.mxu0 0.0
    %109 = vmatpush1.msra.mxu0 %v44
    %110 = vmatprep.subr.mxu0 0.0
    %111 = vmatpush1.msra.mxu0 %v45
    %112 = vmatprep.subr.mxu0 0.0
    %113 = vmatpush1.msra.mxu0 %v46
    %114 = vmatprep.subr.mxu0 0.0
    %115 = vmatpush1.msra.mxu0 %v47
    %116 = vmatprep.subr.mxu0 0.0
    %117 = vmatpush1.msra.mxu0 %v48
    %118 = vmatprep.subr.mxu0 0.0
    %119 = vmatpush1.msra.mxu0 %v49
    %120 = vmatprep.subr.mxu0 0.0
    %121 = vmatpush1.msra.mxu0 %v50
    %122 = vmatprep.subr.mxu0 0.0
    %123 = vmatpush1.msra.mxu0 %v51
    %124 = vmatprep.subr.mxu0 0.0
    %125 = vmatpush1.msra.mxu0 %v52
    %126 = vmatprep.subr.mxu0 0.0
    %127 = vmatpush1.msra.mxu0 %v53
    %128 = vmatprep.subr.mxu0 0.0
    %129 = vmatpush1.msra.mxu0 %v54
    %130 = vmatprep.mubr.f32.mxu0 %v63
    %131 = vmatmul.mubr.f32.gmra.mrb[0].mxu0 %v62
    %v132 = vpop.f32.mrb[0].mxu0
    %v133 = vadd.f32 0.0, %v132
    %v134 = vpop.f32.mrb[0].mxu0
    %135 = vdwg.mxu0
    %v136 = vadd.f32 %v21, %v133
    %vm137 = vcmask 58368
    %138 = vst.msk [vmem:[#allocation2] sm:$0x3] %vm137, %v136
    // Predicated region
    $region18: #{_lambda_.11} parent=1 // pred_check
      %p139 = pneg %p15
    $region19: #{_lambda_.11} parent=1 // pred_check_branch
      %141 = sbr.rel (%p139) target = $region21
    $region20: #{_lambda_.11} parent=1 // pred_region
      %v142 = vld [vmem:[#allocation2] sm:$0x3]
      %v143 = vld [vmem:[%s2] sm:$0x1]
      %v145 = vlaneseq
      %v146 = vshrl.u32 %v145, 7
      %v147 = vsub.s32 0, %v146
      %v148 = vrot.slane %v143, %v147
      %v150 = vadd.f32 %v142, %v148
      %151 = vst.msk [vmem:[#allocation3] sm:$0x3] %vm137, %v150
    $region21: #{_lambda_.11} parent=1 // pred_fallthru
      _
    // Predicated region
    $region22: #{_lambda_.11} parent=1 // pred_check
      _
    $region23: #{_lambda_.11} parent=1 // pred_check_branch
      %153 = sbr.rel (0) target = $region25
    $region24: #{_lambda_.11} parent=1 // pred_region
      %s155 = ssub.s32 32, 32
      %156 = vsyncadd [#allocation4], %s155
      %s158 = sshll.u32 [#allocation3], 4
      %s159 = int_to_ptr.vmem [resolvable:$true] %s158
      %161 = dma.vmem_to_hbm [thread:$0]  %s159, 32, %s3, [#allocation4]
    $region25: #{_lambda_.11} parent=1 // pred_fallthru
      _
    // Predicated region
    $region26: #{_lambda_.11} parent=1 // pred_check
      _
    $region27: #{_lambda_.11} parent=1 // pred_check_branch
      %163 = sbr.rel (0) target = $region29
    $region28: #{_lambda_.11} parent=1 // pred_region
      %164 = dma.done [#allocation4], 32
    $region29: #{_lambda_.11} parent=1 // pred_fallthru
      _
    %165 = vsyncpa [#allocation4], 1

</llo_original>
